<compile_context>
chip_gen: v6e
topology: v6e:2x2x1
jax: 0.10.0
libtpu: 0.0.40
codegen_flags: <defaults>
</compile_context>

<pallas_src>
import functools

import jax
import jax.numpy as jnp
from jax import lax
from jax.experimental import pallas as pl
from jax.experimental.pallas import tpu as pltpu


# ----------------------------------------------------------------------------
# Pallas kernel: fused bf16 matmul (f32 accumulate) + bias + activation
# ----------------------------------------------------------------------------
def _mm_kernel(a_ref, b_ref, bias_ref, o_ref, *, act, slope):
    y = jnp.dot(a_ref[...], b_ref[...], preferred_element_type=jnp.float32)
    y = y + bias_ref[...]
    if act == "lrelu":                                  # LeakyReLU(0.1)
        y = jnp.where(y > 0, y, slope * y)
    elif act == "sigmoid_row0":                         # row 0 = sign head
        row = lax.broadcasted_iota(jnp.int32, y.shape, 0)
        y = jnp.where(row == 0, jax.nn.sigmoid(y), y)
    elif act == "none":
        pass
    o_ref[...] = y.astype(o_ref.dtype)


def _lane_tile(n_lanes):
    # Big layers get >=2 lane tiles (both v7x TCs busy, amortized step cost);
    # tiny layers stay a single full block (per-step overhead dominates).
    if n_lanes >= 4096 and n_lanes % 2048 == 0:
        return 2048
    if n_lanes >= 512 and n_lanes % 256 == 0:
        return n_lanes // 2
    return n_lanes


def matmul_bias_act(a, b, bias, act, out_dtype=jnp.float32, slope=0.1):
    """a:(Cout,K) @ b:(K,M) + bias:(Cout,1); lane axis M tiled; act fused."""
    m_rows, K = a.shape
    k2, n_lanes = b.shape
    assert K == k2
    tn = _lane_tile(n_lanes)
    assert n_lanes % tn == 0
    # VMEM sanity (double-buffered blocks): always tiny here (<4 MB).
    blk_bytes = 2 * (m_rows * K * 2 + K * tn * 2 + m_rows * tn * 4)
    assert blk_bytes < 16 * 1024 * 1024

    kernel = functools.partial(_mm_kernel, act=act, slope=slope)
    return pl.pallas_call(
        kernel,
        out_shape=jax.ShapeDtypeStruct((m_rows, n_lanes), out_dtype),
        grid=(n_lanes // tn,),
        in_specs=[
            pl.BlockSpec((m_rows, K), lambda j: (0, 0)),
            pl.BlockSpec((K, tn), lambda j: (0, j)),
            pl.BlockSpec((m_rows, 1), lambda j: (0, 0)),
        ],
        out_specs=pl.BlockSpec((m_rows, tn), lambda j: (0, j)),
        compiler_params=pltpu.CompilerParams(dimension_semantics=("parallel",)),
    )(a, b, bias)


# ----------------------------------------------------------------------------
# Pallas kernel: encoder conv4 + round(z) + NonParamDensityModel, fused
# ----------------------------------------------------------------------------
def _softplus(x):
    return jnp.maximum(x, 0.0) + jnp.log1p(jnp.exp(-jnp.abs(x)))


def _enc4_density_kernel(a_ref, b_ref, bias_ref, dp_ref, zhat_ref, prob_ref):
    z = jnp.dot(a_ref[...], b_ref[...], preferred_element_type=jnp.float32)
    z = z + bias_ref[...]
    # eval path: zhat = round(z)   (round-half-to-even, same as torch.round)
    # TODO(synk): training-mode additive uniform(-0.5, 0.5) noise not implemented.
    zhat = jnp.round(z)
    zhat_ref[...] = zhat

    def col(i):                       # (C, 1) per-channel parameter column
        return dp_ref[:, i:i + 1]

    h1, h2 = _softplus(col(0)), _softplus(col(1))
    h3, h4 = _softplus(col(2)), _softplus(col(3))
    b1, b2, b3, b4 = col(4), col(5), col(6), col(7)
    a1, a2, a3 = jnp.tanh(col(8)), jnp.tanh(col(9)), jnp.tanh(col(10))

    def flow(v):
        y = v * h1 + b1
        y = y + jnp.tanh(y) * a1
        y = y * h2 + b2
        y = y + jnp.tanh(y) * a2
        y = y * h3 + b3
        y = y + jnp.tanh(y) * a3
        return jax.nn.sigmoid(y * h4 + b4)

    prob_ref[...] = flow(zhat + 0.5) - flow(zhat - 0.5)


def enc4_with_density(wmat, patches, bias, dparams):
    C, K = wmat.shape
    _, M = patches.shape
    return pl.pallas_call(
        _enc4_density_kernel,
        out_shape=(jax.ShapeDtypeStruct((C, M), jnp.float32),
                   jax.ShapeDtypeStruct((C, M), jnp.float32)),
        grid=(1,),
        in_specs=[
            pl.BlockSpec((C, K), lambda i: (0, 0)),
            pl.BlockSpec((K, M), lambda i: (0, 0)),
            pl.BlockSpec((C, 1), lambda i: (0, 0)),
            pl.BlockSpec((C, 11), lambda i: (0, 0)),
        ],
        out_specs=(pl.BlockSpec((C, M), lambda i: (0, 0)),
                   pl.BlockSpec((C, M), lambda i: (0, 0))),
    )(wmat, patches, bias, dparams)


# ----------------------------------------------------------------------------
# JAX glue: channel-first im2col + conv wrappers (no per-layer NCDHW flips)
# ----------------------------------------------------------------------------
def _extract_patches_cf(x_cf, ksize, stride, pad):
    """x_cf: (C, N, D, H, W) -> (C*k^3, N*Do*Ho*Wo), K ordered (c, kd, kh, kw)."""
    C, N, D, H, W = x_cf.shape
    xp = jnp.pad(x_cf, ((0, 0), (0, 0), (pad, pad), (pad, pad), (pad, pad)))
    Do = (D + 2 * pad - ksize) // stride + 1
    Ho = (H + 2 * pad - ksize) // stride + 1
    Wo = (W + 2 * pad - ksize) // stride + 1
    taps = []
    for kd in range(ksize):
        for kh in range(ksize):
            for kw in range(ksize):
                taps.append(xp[:, :, kd:kd + stride * Do:stride,
                                     kh:kh + stride * Ho:stride,
                                     kw:kw + stride * Wo:stride])
    pt = jnp.stack(taps, axis=1)                       # (C, k^3, N, Do, Ho, Wo)
    return pt.reshape(C * ksize ** 3, N * Do * Ho * Wo), (N, Do, Ho, Wo)


def conv3d_cf(x_cf, w, b, stride, pad, act, out_dtype=jnp.bfloat16):
    """PyTorch Conv3d; w:(Cout,Cin,k,k,k), b:(Cout,); channel-first I/O."""
    Cout, Cin, k = w.shape[0], w.shape[1], w.shape[2]
    patches, (N, Do, Ho, Wo) = _extract_patches_cf(x_cf, k, stride, pad)
    wmat = w.reshape(Cout, Cin * k ** 3).astype(jnp.bfloat16)
    out = matmul_bias_act(wmat, patches.astype(jnp.bfloat16),
                          b.reshape(Cout, 1).astype(jnp.float32),
                          act=act, out_dtype=out_dtype)
    return out.reshape(Cout, N, Do, Ho, Wo)


def conv_transpose3d_k2s2_cf(a_cf, w, b):
    """PyTorch ConvTranspose3d(k=2, s=2) + LeakyReLU(0.1); w:(Cin,Cout,2,2,2)."""
    Cin, N, D, H, W = a_cf.shape
    Cout = w.shape[1]
    wmat = w.transpose(1, 2, 3, 4, 0).reshape(Cout * 8, Cin).astype(jnp.bfloat16)
    bias = jnp.repeat(b, 8).reshape(Cout * 8, 1).astype(jnp.float32)
    a2d = a_cf.reshape(Cin, N * D * H * W).astype(jnp.bfloat16)
    y = matmul_bias_act(wmat, a2d, bias, act="lrelu", out_dtype=jnp.bfloat16)
    # depth-to-space: rows (cout, kd, kh, kw) -> spatial (2d+kd, 2h+kh, 2w+kw)
    y = y.reshape(Cout, 2, 2, 2, N, D, H, W).transpose(0, 4, 5, 1, 6, 2, 7, 3)
    return y.reshape(Cout, N, 2 * D, 2 * H, 2 * W)


# ----------------------------------------------------------------------------
# Full TSDFCoder forward (eval mode)
# ----------------------------------------------------------------------------
def tsdf_coder_forward(x, p):
    C = p["e1_w"].shape[0]
    # single layout conversion at the input: NCDHW -> (C, N, D, H, W), bf16
    xcf = x.transpose(1, 0, 2, 3, 4).astype(jnp.bfloat16)

    # ---- encoder ----
    y = conv3d_cf(xcf, p["e1_w"], p["e1_b"], stride=2, pad=1, act="lrelu")
    y = conv3d_cf(y, p["e2_w"], p["e2_b"], stride=2, pad=1, act="lrelu")
    y = conv3d_cf(y, p["e3_w"], p["e3_b"], stride=2, pad=1, act="lrelu")

    # ---- conv4 + round + density model (single fused pallas_call) ----
    patches4, (N, Do, Ho, Wo) = _extract_patches_cf(y, 3, 2, 1)
    w4 = p["e4_w"].reshape(C, C * 27).astype(jnp.bfloat16)
    zhat_cf, prob_cf = enc4_with_density(
        w4, patches4.astype(jnp.bfloat16),
        p["e4_b"].reshape(C, 1).astype(jnp.float32),
        p["density"].T.astype(jnp.float32))              # (C, 11)
    zhat5 = zhat_cf.reshape(C, N, Do, Ho, Wo)
    zhat = zhat5.transpose(1, 0, 2, 3, 4)                # NCDHW output
    prob = prob_cf.reshape(C, N, Do, Ho, Wo).transpose(1, 0, 2, 3, 4)

    # ---- decoder ----
    d = zhat5.astype(jnp.bfloat16)
    d = conv_transpose3d_k2s2_cf(d, p["d1_w"], p["d1_b"])
    d = conv_transpose3d_k2s2_cf(d, p["d2_w"], p["d2_b"])
    d = conv_transpose3d_k2s2_cf(d, p["d3_w"], p["d3_b"])
    d = conv_transpose3d_k2s2_cf(d, p["d4_w"], p["d4_b"])

    # ---- sign + magnitude heads: one matmul, lane-dense (2, M) output ----
    head_w = jnp.concatenate([p["hs_w"], p["hm_w"]], axis=0)   # (2, C, 3,3,3)
    head_b = jnp.concatenate([p["hs_b"], p["hm_b"]], axis=0)   # (2,)
    heads_cf = conv3d_cf(d, head_w, head_b, stride=1, pad=1,
                         act="sigmoid_row0", out_dtype=jnp.float32)
    shat = heads_cf[0:1].transpose(1, 0, 2, 3, 4)              # (N,1,D,H,W)
    xhat_mag = heads_cf[1:2].transpose(1, 0, 2, 3, 4)
    return prob, zhat, shat, xhat_mag


# ----------------------------------------------------------------------------
# Deterministic parameter init + example run
# ----------------------------------------------------------------------------
def make_params(code_length, key):
    ks = iter(jax.random.split(key, 32))

    def nrm(shape, std):
        return (std * jax.random.normal(next(ks), shape)).astype(jnp.float32)

    C = code_length
    return {
        "e1_w": nrm((C, 1, 3, 3, 3), 0.2), "e1_b": nrm((C,), 0.05),
        "e2_w": nrm((C, C, 3, 3, 3), 0.1), "e2_b": nrm((C,), 0.05),
        "e3_w": nrm((C, C, 3, 3, 3), 0.1), "e3_b": nrm((C,), 0.05),
        "e4_w": nrm((C, C, 3, 3, 3), 0.1), "e4_b": nrm((C,), 0.05),
        "d1_w": nrm((C, C, 2, 2, 2), 0.1), "d1_b": nrm((C,), 0.05),
        "d2_w": nrm((C, C, 2, 2, 2), 0.1), "d2_b": nrm((C,), 0.05),
        "d3_w": nrm((C, C, 2, 2, 2), 0.1), "d3_b": nrm((C,), 0.05),
        "d4_w": nrm((C, C, 2, 2, 2), 0.1), "d4_b": nrm((C,), 0.05),
        "hs_w": nrm((1, C, 3, 3, 3), 0.1), "hs_b": nrm((1,), 0.05),
        "hm_w": nrm((1, C, 3, 3, 3), 0.1), "hm_b": nrm((1,), 0.05),
        # rows: h1..h4, b1..b4, a1..a3  (normal(0, 0.01) as in the module)
        "density": nrm((11, C), 0.01),
    }


if __name__ == "__main__":
    code_length = 8
    batch, spatial = 2, 16          # input (N, 1, 16, 16, 16) -> z: (N, C, 1, 1, 1)

    key = jax.random.PRNGKey(0)
    k_x, k_p = jax.random.split(key)
    x = jax.random.normal(k_x, (batch, 1, spatial, spatial, spatial), jnp.float32)
    params = make_params(code_length, k_p)

    fwd = jax.jit(tsdf_coder_forward)
    prob, zhat, shat, xhat_mag = fwd(x, params)
    jax.block_until_ready((prob, zhat, shat, xhat_mag))

    assert prob.shape == (batch, code_length, 1, 1, 1)
    assert zhat.shape == (batch, code_length, 1, 1, 1)
    assert shat.shape == (batch, 1, spatial, spatial, spatial)
    assert xhat_mag.shape == (batch, 1, spatial, spatial, spatial)
    print("KERNEL_OK")
</pallas_src>

<mosaic_0001>
module attributes {stable_mosaic.version = 11 : i64} {
  func.func @_mm_kernel(%arg0: i32, %arg1: memref<8x27xbf16, #tpu.memory_space<vmem>>, %arg2: memref<27x512xbf16, #tpu.memory_space<vmem>>, %arg3: memref<8x1xf32, #tpu.memory_space<vmem>>, %arg4: memref<8x512xbf16, #tpu.memory_space<vmem>>) attributes {dimension_semantics = [#tpu.dimension_semantics<parallel>], iteration_bounds = array<i64: 2>, scalar_prefetch = 0 : i64, scratch_operands = 0 : i64, tpu.core_type = #tpu.core_type<tc>, window_params = [{pipeline_mode = #tpu.pipeline_mode<synchronous>, transform_indices = @transform_0, window_bounds = array<i64: 8, 27>}, {transform_indices = @transform_1, window_bounds = array<i64: 27, 512>}, {pipeline_mode = #tpu.pipeline_mode<synchronous>, transform_indices = @transform_2, window_bounds = array<i64: 8, 1>}, {transform_indices = @transform_3, window_bounds = array<i64: 8, 512>}]} {
    %c0 = arith.constant 0 : index
    %c0_0 = arith.constant 0 : index
    %0 = vector.load %arg1[%c0, %c0_0] : memref<8x27xbf16, #tpu.memory_space<vmem>>, vector<8x27xbf16>
    %c0_1 = arith.constant 0 : index
    %c0_2 = arith.constant 0 : index
    %1 = vector.load %arg2[%c0_1, %c0_2] : memref<27x512xbf16, #tpu.memory_space<vmem>>, vector<27x512xbf16>
    %cst = arith.constant dense<0.000000e+00> : vector<8x512xf32>
    %2 = tpu.matmul %0, %1, %cst {dimension_numbers = #tpu.dot_dimension_numbers<[1], [0], [0], [1], [0, 0, 1, 1], [], []>} : vector<8x27xbf16>, vector<27x512xbf16>, vector<8x512xf32> -> vector<8x512xf32>
    %c0_3 = arith.constant 0 : index
    %c0_4 = arith.constant 0 : index
    %3 = vector.load %arg3[%c0_3, %c0_4] : memref<8x1xf32, #tpu.memory_space<vmem>>, vector<8x1xf32>
    %4 = vector.broadcast %3 : vector<8x1xf32> to vector<8x512xf32>
    %5 = arith.addf %2, %4 : vector<8x512xf32>
    %cst_5 = arith.constant 0.000000e+00 : f32
    %6 = vector.broadcast %cst_5 : f32 to vector<8x512xf32>
    %7 = arith.cmpf ogt, %5, %6 : vector<8x512xf32>
    %cst_6 = arith.constant 1.000000e-01 : f32
    %8 = vector.broadcast %cst_6 : f32 to vector<8x512xf32>
    %9 = arith.mulf %8, %5 : vector<8x512xf32>
    %10 = arith.select %7, %5, %9 : vector<8x512xi1>, vector<8x512xf32>
    %11 = arith.truncf %10 : vector<8x512xf32> to vector<8x512xbf16>
    %c0_7 = arith.constant 0 : index
    %c0_8 = arith.constant 0 : index
    %12 = vector.load %arg4[%c0_7, %c0_8] : memref<8x512xbf16, #tpu.memory_space<vmem>>, vector<8x512xbf16>
    tpu.vector_store %arg4[%c0_7, %c0_8], %11 {strides = array<i32>} : memref<8x512xbf16, #tpu.memory_space<vmem>>, vector<8x512xbf16>,
    return
  }
  func.func @transform_0(%arg0: i32) -> (i32, i32) {
    %c0_i32 = arith.constant 0 : i32
    %c0_i32_0 = arith.constant 0 : i32
    %c0_i32_1 = arith.constant 0 : i32
    return %c0_i32, %c0_i32_0 : i32, i32
  }
  func.func @transform_1(%arg0: i32) -> (i32, i32) {
    %c0_i32 = arith.constant 0 : i32
    %c0_i32_0 = arith.constant 0 : i32
    return %c0_i32, %arg0 : i32, i32
  }
  func.func @transform_2(%arg0: i32) -> (i32, i32) {
    %c0_i32 = arith.constant 0 : i32
    %c0_i32_0 = arith.constant 0 : i32
    %c0_i32_1 = arith.constant 0 : i32
    return %c0_i32, %c0_i32_0 : i32, i32
  }
  func.func @transform_3(%arg0: i32) -> (i32, i32) {
    %c0_i32 = arith.constant 0 : i32
    %c0_i32_0 = arith.constant 0 : i32
    return %c0_i32, %arg0 : i32, i32
  }
}

module attributes {stable_mosaic.version = 11 : i64} {
  func.func @_mm_kernel(%arg0: i32, %arg1: memref<8x216xbf16, #tpu.memory_space<vmem>>, %arg2: memref<216x128xbf16, #tpu.memory_space<vmem>>, %arg3: memref<8x1xf32, #tpu.memory_space<vmem>>, %arg4: memref<8x128xbf16, #tpu.memory_space<vmem>>) attributes {dimension_semantics = [#tpu.dimension_semantics<parallel>], iteration_bounds = array<i64: 1>, scalar_prefetch = 0 : i64, scratch_operands = 0 : i64, tpu.core_type = #tpu.core_type<tc>, window_params = [{pipeline_mode = #tpu.pipeline_mode<synchronous>, transform_indices = @transform_0, window_bounds = array<i64: 8, 216>}, {transform_indices = @transform_1, window_bounds = array<i64: 216, 128>}, {pipeline_mode = #tpu.pipeline_mode<synchronous>, transform_indices = @transform_2, window_bounds = array<i64: 8, 1>}, {transform_indices = @transform_3, window_bounds = array<i64: 8, 128>}]} {
    %c0 = arith.constant 0 : index
    %c0_0 = arith.constant 0 : index
    %0 = vector.load %arg1[%c0, %c0_0] : memref<8x216xbf16, #tpu.memory_space<vmem>>, vector<8x216xbf16>
    %c0_1 = arith.constant 0 : index
    %c0_2 = arith.constant 0 : index
    %1 = vector.load %arg2[%c0_1, %c0_2] : memref<216x128xbf16, #tpu.memory_space<vmem>>, vector<216x128xbf16>
    %cst = arith.constant dense<0.000000e+00> : vector<8x128xf32>
    %2 = tpu.matmul %0, %1, %cst {dimension_numbers = #tpu.dot_dimension_numbers<[1], [0], [0], [1], [0, 0, 1, 1], [], []>} : vector<8x216xbf16>, vector<216x128xbf16>, vector<8x128xf32> -> vector<8x128xf32>
    %c0_3 = arith.constant 0 : index
    %c0_4 = arith.constant 0 : index
    %3 = vector.load %arg3[%c0_3, %c0_4] : memref<8x1xf32, #tpu.memory_space<vmem>>, vector<8x1xf32>
    %4 = vector.broadcast %3 : vector<8x1xf32> to vector<8x128xf32>
    %5 = arith.addf %2, %4 : vector<8x128xf32>
    %cst_5 = arith.constant 0.000000e+00 : f32
    %6 = vector.broadcast %cst_5 : f32 to vector<8x128xf32>
    %7 = arith.cmpf ogt, %5, %6 : vector<8x128xf32>
    %cst_6 = arith.constant 1.000000e-01 : f32
    %8 = vector.broadcast %cst_6 : f32 to vector<8x128xf32>
    %9 = arith.mulf %8, %5 : vector<8x128xf32>
    %10 = arith.select %7, %5, %9 : vector<8x128xi1>, vector<8x128xf32>
    %11 = arith.truncf %10 : vector<8x128xf32> to vector<8x128xbf16>
    %c0_7 = arith.constant 0 : index
    %c0_8 = arith.constant 0 : index
    %12 = vector.load %arg4[%c0_7, %c0_8] : memref<8x128xbf16, #tpu.memory_space<vmem>>, vector<8x128xbf16>
    tpu.vector_store %arg4[%c0_7, %c0_8], %11 {strides = array<i32>} : memref<8x128xbf16, #tpu.memory_space<vmem>>, vector<8x128xbf16>,
    return
  }
  func.func @transform_0(%arg0: i32) -> (i32, i32) {
    %c0_i32 = arith.constant 0 : i32
    %c0_i32_0 = arith.constant 0 : i32
    %c0_i32_1 = arith.constant 0 : i32
    return %c0_i32, %c0_i32_0 : i32, i32
  }
  func.func @transform_1(%arg0: i32) -> (i32, i32) {
    %c0_i32 = arith.constant 0 : i32
    %c0_i32_0 = arith.constant 0 : i32
    return %c0_i32, %arg0 : i32, i32
  }
  func.func @transform_2(%arg0: i32) -> (i32, i32) {
    %c0_i32 = arith.constant 0 : i32
    %c0_i32_0 = arith.constant 0 : i32
    %c0_i32_1 = arith.constant 0 : i32
    return %c0_i32, %c0_i32_0 : i32, i32
  }
  func.func @transform_3(%arg0: i32) -> (i32, i32) {
    %c0_i32 = arith.constant 0 : i32
    %c0_i32_0 = arith.constant 0 : i32
    return %c0_i32, %arg0 : i32, i32
  }
}

module attributes {stable_mosaic.version = 11 : i64} {
  func.func @_mm_kernel(%arg0: i32, %arg1: memref<8x216xbf16, #tpu.memory_space<vmem>>, %arg2: memref<216x16xbf16, #tpu.memory_space<vmem>>, %arg3: memref<8x1xf32, #tpu.memory_space<vmem>>, %arg4: memref<8x16xbf16, #tpu.memory_space<vmem>>) attributes {dimension_semantics = [#tpu.dimension_semantics<parallel>], iteration_bounds = array<i64: 1>, scalar_prefetch = 0 : i64, scratch_operands = 0 : i64, tpu.core_type = #tpu.core_type<tc>, window_params = [{pipeline_mode = #tpu.pipeline_mode<synchronous>, transform_indices = @transform_0, window_bounds = array<i64: 8, 216>}, {transform_indices = @transform_1, window_bounds = array<i64: 216, 16>}, {pipeline_mode = #tpu.pipeline_mode<synchronous>, transform_indices = @transform_2, window_bounds = array<i64: 8, 1>}, {transform_indices = @transform_3, window_bounds = array<i64: 8, 16>}]} {
    %c0 = arith.constant 0 : index
    %c0_0 = arith.constant 0 : index
    %0 = vector.load %arg1[%c0, %c0_0] : memref<8x216xbf16, #tpu.memory_space<vmem>>, vector<8x216xbf16>
    %c0_1 = arith.constant 0 : index
    %c0_2 = arith.constant 0 : index
    %1 = vector.load %arg2[%c0_1, %c0_2] : memref<216x16xbf16, #tpu.memory_space<vmem>>, vector<216x16xbf16>
    %cst = arith.constant dense<0.000000e+00> : vector<8x16xf32>
    %2 = tpu.matmul %0, %1, %cst {dimension_numbers = #tpu.dot_dimension_numbers<[1], [0], [0], [1], [0, 0, 1, 1], [], []>} : vector<8x216xbf16>, vector<216x16xbf16>, vector<8x16xf32> -> vector<8x16xf32>
    %c0_3 = arith.constant 0 : index
    %c0_4 = arith.constant 0 : index
    %3 = vector.load %arg3[%c0_3, %c0_4] : memref<8x1xf32, #tpu.memory_space<vmem>>, vector<8x1xf32>
    %4 = vector.broadcast %3 : vector<8x1xf32> to vector<8x16xf32>
    %5 = arith.addf %2, %4 : vector<8x16xf32>
    %cst_5 = arith.constant 0.000000e+00 : f32
    %6 = vector.broadcast %cst_5 : f32 to vector<8x16xf32>
    %7 = arith.cmpf ogt, %5, %6 : vector<8x16xf32>
    %cst_6 = arith.constant 1.000000e-01 : f32
    %8 = vector.broadcast %cst_6 : f32 to vector<8x16xf32>
    %9 = arith.mulf %8, %5 : vector<8x16xf32>
    %10 = arith.select %7, %5, %9 : vector<8x16xi1>, vector<8x16xf32>
    %11 = arith.truncf %10 : vector<8x16xf32> to vector<8x16xbf16>
    %c0_7 = arith.constant 0 : index
    %c0_8 = arith.constant 0 : index
    %12 = vector.load %arg4[%c0_7, %c0_8] : memref<8x16xbf16, #tpu.memory_space<vmem>>, vector<8x16xbf16>
    tpu.vector_store %arg4[%c0_7, %c0_8], %11 {strides = array<i32>} : memref<8x16xbf16, #tpu.memory_space<vmem>>, vector<8x16xbf16>,
    return
  }
  func.func @transform_0(%arg0: i32) -> (i32, i32) {
    %c0_i32 = arith.constant 0 : i32
    %c0_i32_0 = arith.constant 0 : i32
    %c0_i32_1 = arith.constant 0 : i32
    return %c0_i32, %c0_i32_0 : i32, i32
  }
  func.func @transform_1(%arg0: i32) -> (i32, i32) {
    %c0_i32 = arith.constant 0 : i32
    %c0_i32_0 = arith.constant 0 : i32
    return %c0_i32, %arg0 : i32, i32
  }
  func.func @transform_2(%arg0: i32) -> (i32, i32) {
    %c0_i32 = arith.constant 0 : i32
    %c0_i32_0 = arith.constant 0 : i32
    %c0_i32_1 = arith.constant 0 : i32
    return %c0_i32, %c0_i32_0 : i32, i32
  }
  func.func @transform_3(%arg0: i32) -> (i32, i32) {
    %c0_i32 = arith.constant 0 : i32
    %c0_i32_0 = arith.constant 0 : i32
    return %c0_i32, %arg0 : i32, i32
  }
}

module attributes {stable_mosaic.version = 11 : i64} {
  func.func @_enc4_density_kernel(%arg0: i32, %arg1: memref<8x216xbf16, #tpu.memory_space<vmem>>, %arg2: memref<216x2xbf16, #tpu.memory_space<vmem>>, %arg3: memref<8x1xf32, #tpu.memory_space<vmem>>, %arg4: memref<8x11xf32, #tpu.memory_space<vmem>>, %arg5: memref<8x2xf32, #tpu.memory_space<vmem>>, %arg6: memref<8x2xf32, #tpu.memory_space<vmem>>) attributes {dimension_semantics = [#tpu.dimension_semantics<arbitrary>], iteration_bounds = array<i64: 1>, scalar_prefetch = 0 : i64, scratch_operands = 0 : i64, tpu.core_type = #tpu.core_type<tc>, window_params = [{pipeline_mode = #tpu.pipeline_mode<synchronous>, transform_indices = @transform_0, window_bounds = array<i64: 8, 216>}, {pipeline_mode = #tpu.pipeline_mode<synchronous>, transform_indices = @transform_1, window_bounds = array<i64: 216, 2>}, {pipeline_mode = #tpu.pipeline_mode<synchronous>, transform_indices = @transform_2, window_bounds = array<i64: 8, 1>}, {pipeline_mode = #tpu.pipeline_mode<synchronous>, transform_indices = @transform_3, window_bounds = array<i64: 8, 11>}, {pipeline_mode = #tpu.pipeline_mode<synchronous>, transform_indices = @transform_4, window_bounds = array<i64: 8, 2>}, {pipeline_mode = #tpu.pipeline_mode<synchronous>, transform_indices = @transform_5, window_bounds = array<i64: 8, 2>}]} {
    %c0 = arith.constant 0 : index
    %c0_0 = arith.constant 0 : index
    %0 = vector.load %arg1[%c0, %c0_0] : memref<8x216xbf16, #tpu.memory_space<vmem>>, vector<8x216xbf16>
    %c0_1 = arith.constant 0 : index
    %c0_2 = arith.constant 0 : index
    %1 = vector.load %arg2[%c0_1, %c0_2] : memref<216x2xbf16, #tpu.memory_space<vmem>>, vector<216x2xbf16>
    %cst = arith.constant dense<0.000000e+00> : vector<8x2xf32>
    %2 = tpu.matmul %0, %1, %cst {dimension_numbers = #tpu.dot_dimension_numbers<[1], [0], [0], [1], [0, 0, 1, 1], [], []>} : vector<8x216xbf16>, vector<216x2xbf16>, vector<8x2xf32> -> vector<8x2xf32>
    %c0_3 = arith.constant 0 : index
    %c0_4 = arith.constant 0 : index
    %3 = vector.load %arg3[%c0_3, %c0_4] : memref<8x1xf32, #tpu.memory_space<vmem>>, vector<8x1xf32>
    %4 = vector.broadcast %3 : vector<8x1xf32> to vector<8x2xf32>
    %5 = arith.addf %2, %4 : vector<8x2xf32>
    %6 = math.roundeven %5 : vector<8x2xf32>
    %c0_5 = arith.constant 0 : index
    %c0_6 = arith.constant 0 : index
    %7 = vector.load %arg5[%c0_5, %c0_6] : memref<8x2xf32, #tpu.memory_space<vmem>>, vector<8x2xf32>
    tpu.vector_store %arg5[%c0_5, %c0_6], %6 {strides = array<i32>} : memref<8x2xf32, #tpu.memory_space<vmem>>, vector<8x2xf32>,
    %c0_7 = arith.constant 0 : index
    %c0_8 = arith.constant 0 : index
    %8 = vector.load %arg4[%c0_7, %c0_8] : memref<8x11xf32, #tpu.memory_space<vmem>>, vector<8x1xf32>
    %cst_9 = arith.constant 0.000000e+00 : f32
    %9 = vector.broadcast %cst_9 : f32 to vector<8x1xf32>
    %10 = arith.maximumf %8, %9 : vector<8x1xf32>
    %11 = math.absf %8 : vector<8x1xf32>
    %cst_10 = arith.constant 0.000000e+00 : f32
    %12 = vector.broadcast %cst_10 : f32 to vector<8x1xf32>
    %13 = arith.subf %12, %11 : vector<8x1xf32>
    %14 = math.exp %13 : vector<8x1xf32>
    %15 = math.log1p %14 : vector<8x1xf32>
    %16 = arith.addf %10, %15 : vector<8x1xf32>
    %c0_11 = arith.constant 0 : index
    %c1 = arith.constant 1 : index
    %17 = vector.load %arg4[%c0_11, %c1] : memref<8x11xf32, #tpu.memory_space<vmem>>, vector<8x1xf32>
    %cst_12 = arith.constant 0.000000e+00 : f32
    %18 = vector.broadcast %cst_12 : f32 to vector<8x1xf32>
    %19 = arith.maximumf %17, %18 : vector<8x1xf32>
    %20 = math.absf %17 : vector<8x1xf32>
    %cst_13 = arith.constant 0.000000e+00 : f32
    %21 = vector.broadcast %cst_13 : f32 to vector<8x1xf32>
    %22 = arith.subf %21, %20 : vector<8x1xf32>
    %23 = math.exp %22 : vector<8x1xf32>
    %24 = math.log1p %23 : vector<8x1xf32>
    %25 = arith.addf %19, %24 : vector<8x1xf32>
    %c0_14 = arith.constant 0 : index
    %c2 = arith.constant 2 : index
    %26 = vector.load %arg4[%c0_14, %c2] : memref<8x11xf32, #tpu.memory_space<vmem>>, vector<8x1xf32>
    %cst_15 = arith.constant 0.000000e+00 : f32
    %27 = vector.broadcast %cst_15 : f32 to vector<8x1xf32>
    %28 = arith.maximumf %26, %27 : vector<8x1xf32>
    %29 = math.absf %26 : vector<8x1xf32>
    %cst_16 = arith.constant 0.000000e+00 : f32
    %30 = vector.broadcast %cst_16 : f32 to vector<8x1xf32>
    %31 = arith.subf %30, %29 : vector<8x1xf32>
    %32 = math.exp %31 : vector<8x1xf32>
    %33 = math.log1p %32 : vector<8x1xf32>
    %34 = arith.addf %28, %33 : vector<8x1xf32>
    %c0_17 = arith.constant 0 : index
    %c3 = arith.constant 3 : index
    %35 = vector.load %arg4[%c0_17, %c3] : memref<8x11xf32, #tpu.memory_space<vmem>>, vector<8x1xf32>
    %cst_18 = arith.constant 0.000000e+00 : f32
    %36 = vector.broadcast %cst_18 : f32 to vector<8x1xf32>
    %37 = arith.maximumf %35, %36 : vector<8x1xf32>
    %38 = math.absf %35 : vector<8x1xf32>
    %cst_19 = arith.constant 0.000000e+00 : f32
    %39 = vector.broadcast %cst_19 : f32 to vector<8x1xf32>
    %40 = arith.subf %39, %38 : vector<8x1xf32>
    %41 = math.exp %40 : vector<8x1xf32>
    %42 = math.log1p %41 : vector<8x1xf32>
    %43 = arith.addf %37, %42 : vector<8x1xf32>
    %c0_20 = arith.constant 0 : index
    %c4 = arith.constant 4 : index
    %44 = vector.load %arg4[%c0_20, %c4] : memref<8x11xf32, #tpu.memory_space<vmem>>, vector<8x1xf32>
    %c0_21 = arith.constant 0 : index
    %c5 = arith.constant 5 : index
    %45 = vector.load %arg4[%c0_21, %c5] : memref<8x11xf32, #tpu.memory_space<vmem>>, vector<8x1xf32>
    %c0_22 = arith.constant 0 : index
    %c6 = arith.constant 6 : index
    %46 = vector.load %arg4[%c0_22, %c6] : memref<8x11xf32, #tpu.memory_space<vmem>>, vector<8x1xf32>
    %c0_23 = arith.constant 0 : index
    %c7 = arith.constant 7 : index
    %47 = vector.load %arg4[%c0_23, %c7] : memref<8x11xf32, #tpu.memory_space<vmem>>, vector<8x1xf32>
    %c0_24 = arith.constant 0 : index
    %c8 = arith.constant 8 : index
    %48 = vector.load %arg4[%c0_24, %c8] : memref<8x11xf32, #tpu.memory_space<vmem>>, vector<8x1xf32>
    %49 = math.tanh %48 : vector<8x1xf32>
    %c0_25 = arith.constant 0 : index
    %c9 = arith.constant 9 : index
    %50 = vector.load %arg4[%c0_25, %c9] : memref<8x11xf32, #tpu.memory_space<vmem>>, vector<8x1xf32>
    %51 = math.tanh %50 : vector<8x1xf32>
    %c0_26 = arith.constant 0 : index
    %c10 = arith.constant 10 : index
    %52 = vector.load %arg4[%c0_26, %c10] : memref<8x11xf32, #tpu.memory_space<vmem>>, vector<8x1xf32>
    %53 = math.tanh %52 : vector<8x1xf32>
    %cst_27 = arith.constant 5.000000e-01 : f32
    %54 = vector.broadcast %cst_27 : f32 to vector<8x2xf32>
    %55 = arith.addf %6, %54 : vector<8x2xf32>
    %56 = vector.broadcast %16 : vector<8x1xf32> to vector<8x2xf32>
    %57 = arith.mulf %55, %56 : vector<8x2xf32>
    %58 = vector.broadcast %44 : vector<8x1xf32> to vector<8x2xf32>
    %59 = arith.addf %57, %58 : vector<8x2xf32>
    %60 = math.tanh %59 : vector<8x2xf32>
    %61 = vector.broadcast %49 : vector<8x1xf32> to vector<8x2xf32>
    %62 = arith.mulf %60, %61 : vector<8x2xf32>
    %63 = arith.addf %59, %62 : vector<8x2xf32>
    %64 = vector.broadcast %25 : vector<8x1xf32> to vector<8x2xf32>
    %65 = arith.mulf %63, %64 : vector<8x2xf32>
    %66 = vector.broadcast %45 : vector<8x1xf32> to vector<8x2xf32>
    %67 = arith.addf %65, %66 : vector<8x2xf32>
    %68 = math.tanh %67 : vector<8x2xf32>
    %69 = vector.broadcast %51 : vector<8x1xf32> to vector<8x2xf32>
    %70 = arith.mulf %68, %69 : vector<8x2xf32>
    %71 = arith.addf %67, %70 : vector<8x2xf32>
    %72 = vector.broadcast %34 : vector<8x1xf32> to vector<8x2xf32>
    %73 = arith.mulf %71, %72 : vector<8x2xf32>
    %74 = vector.broadcast %46 : vector<8x1xf32> to vector<8x2xf32>
    %75 = arith.addf %73, %74 : vector<8x2xf32>
    %76 = math.tanh %75 : vector<8x2xf32>
    %77 = vector.broadcast %53 : vector<8x1xf32> to vector<8x2xf32>
    %78 = arith.mulf %76, %77 : vector<8x2xf32>
    %79 = arith.addf %75, %78 : vector<8x2xf32>
    %80 = vector.broadcast %43 : vector<8x1xf32> to vector<8x2xf32>
    %81 = arith.mulf %79, %80 : vector<8x2xf32>
    %82 = vector.broadcast %47 : vector<8x1xf32> to vector<8x2xf32>
    %83 = arith.addf %81, %82 : vector<8x2xf32>
    %84 = arith.negf %83 : vector<8x2xf32>
    %85 = math.exp %84 : vector<8x2xf32>
    %cst_28 = arith.constant 1.000000e+00 : f32
    %86 = vector.broadcast %cst_28 : f32 to vector<8x2xf32>
    %87 = arith.addf %86, %85 : vector<8x2xf32>
    %88 = arith.divf %86, %87 : vector<8x2xf32>
    %cst_29 = arith.constant 5.000000e-01 : f32
    %89 = vector.broadcast %cst_29 : f32 to vector<8x2xf32>
    %90 = arith.subf %6, %89 : vector<8x2xf32>
    %91 = vector.broadcast %16 : vector<8x1xf32> to vector<8x2xf32>
    %92 = arith.mulf %90, %91 : vector<8x2xf32>
    %93 = vector.broadcast %44 : vector<8x1xf32> to vector<8x2xf32>
    %94 = arith.addf %92, %93 : vector<8x2xf32>
    %95 = math.tanh %94 : vector<8x2xf32>
    %96 = vector.broadcast %49 : vector<8x1xf32> to vector<8x2xf32>
    %97 = arith.mulf %95, %96 : vector<8x2xf32>
    %98 = arith.addf %94, %97 : vector<8x2xf32>
    %99 = vector.broadcast %25 : vector<8x1xf32> to vector<8x2xf32>
    %100 = arith.mulf %98, %99 : vector<8x2xf32>
    %101 = vector.broadcast %45 : vector<8x1xf32> to vector<8x2xf32>
    %102 = arith.addf %100, %101 : vector<8x2xf32>
    %103 = math.tanh %102 : vector<8x2xf32>
    %104 = vector.broadcast %51 : vector<8x1xf32> to vector<8x2xf32>
    %105 = arith.mulf %103, %104 : vector<8x2xf32>
    %106 = arith.addf %102, %105 : vector<8x2xf32>
    %107 = vector.broadcast %34 : vector<8x1xf32> to vector<8x2xf32>
    %108 = arith.mulf %106, %107 : vector<8x2xf32>
    %109 = vector.broadcast %46 : vector<8x1xf32> to vector<8x2xf32>
    %110 = arith.addf %108, %109 : vector<8x2xf32>
    %111 = math.tanh %110 : vector<8x2xf32>
    %112 = vector.broadcast %53 : vector<8x1xf32> to vector<8x2xf32>
    %113 = arith.mulf %111, %112 : vector<8x2xf32>
    %114 = arith.addf %110, %113 : vector<8x2xf32>
    %115 = vector.broadcast %43 : vector<8x1xf32> to vector<8x2xf32>
    %116 = arith.mulf %114, %115 : vector<8x2xf32>
    %117 = vector.broadcast %47 : vector<8x1xf32> to vector<8x2xf32>
    %118 = arith.addf %116, %117 : vector<8x2xf32>
    %119 = arith.negf %118 : vector<8x2xf32>
    %120 = math.exp %119 : vector<8x2xf32>
    %cst_30 = arith.constant 1.000000e+00 : f32
    %121 = vector.broadcast %cst_30 : f32 to vector<8x2xf32>
    %122 = arith.addf %121, %120 : vector<8x2xf32>
    %123 = arith.divf %121, %122 : vector<8x2xf32>
    %124 = arith.subf %88, %123 : vector<8x2xf32>
    %c0_31 = arith.constant 0 : index
    %c0_32 = arith.constant 0 : index
    %125 = vector.load %arg6[%c0_31, %c0_32] : memref<8x2xf32, #tpu.memory_space<vmem>>, vector<8x2xf32>
    tpu.vector_store %arg6[%c0_31, %c0_32], %124 {strides = array<i32>} : memref<8x2xf32, #tpu.memory_space<vmem>>, vector<8x2xf32>,
    return
  }
  func.func @transform_0(%arg0: i32) -> (i32, i32) {
    %c0_i32 = arith.constant 0 : i32
    %c0_i32_0 = arith.constant 0 : i32
    %c0_i32_1 = arith.constant 0 : i32
    return %c0_i32, %c0_i32_0 : i32, i32
  }
  func.func @transform_1(%arg0: i32) -> (i32, i32) {
    %c0_i32 = arith.constant 0 : i32
    %c0_i32_0 = arith.constant 0 : i32
    %c0_i32_1 = arith.constant 0 : i32
    return %c0_i32, %c0_i32_0 : i32, i32
  }
  func.func @transform_2(%arg0: i32) -> (i32, i32) {
    %c0_i32 = arith.constant 0 : i32
    %c0_i32_0 = arith.constant 0 : i32
    %c0_i32_1 = arith.constant 0 : i32
    return %c0_i32, %c0_i32_0 : i32, i32
  }
  func.func @transform_3(%arg0: i32) -> (i32, i32) {
    %c0_i32 = arith.constant 0 : i32
    %c0_i32_0 = arith.constant 0 : i32
    %c0_i32_1 = arith.constant 0 : i32
    return %c0_i32, %c0_i32_0 : i32, i32
  }
  func.func @transform_4(%arg0: i32) -> (i32, i32) {
    %c0_i32 = arith.constant 0 : i32
    %c0_i32_0 = arith.constant 0 : i32
    %c0_i32_1 = arith.constant 0 : i32
    return %c0_i32, %c0_i32_0 : i32, i32
  }
  func.func @transform_5(%arg0: i32) -> (i32, i32) {
    %c0_i32 = arith.constant 0 : i32
    %c0_i32_0 = arith.constant 0 : i32
    %c0_i32_1 = arith.constant 0 : i32
    return %c0_i32, %c0_i32_0 : i32, i32
  }
}

module attributes {stable_mosaic.version = 11 : i64} {
  func.func @_mm_kernel(%arg0: i32, %arg1: memref<64x8xbf16, #tpu.memory_space<vmem>>, %arg2: memref<8x2xbf16, #tpu.memory_space<vmem>>, %arg3: memref<64x1xf32, #tpu.memory_space<vmem>>, %arg4: memref<64x2xbf16, #tpu.memory_space<vmem>>) attributes {dimension_semantics = [#tpu.dimension_semantics<parallel>], iteration_bounds = array<i64: 1>, scalar_prefetch = 0 : i64, scratch_operands = 0 : i64, tpu.core_type = #tpu.core_type<tc>, window_params = [{pipeline_mode = #tpu.pipeline_mode<synchronous>, transform_indices = @transform_0, window_bounds = array<i64: 64, 8>}, {transform_indices = @transform_1, window_bounds = array<i64: 8, 2>}, {pipeline_mode = #tpu.pipeline_mode<synchronous>, transform_indices = @transform_2, window_bounds = array<i64: 64, 1>}, {transform_indices = @transform_3, window_bounds = array<i64: 64, 2>}]} {
    %c0 = arith.constant 0 : index
    %c0_0 = arith.constant 0 : index
    %0 = vector.load %arg1[%c0, %c0_0] : memref<64x8xbf16, #tpu.memory_space<vmem>>, vector<64x8xbf16>
    %c0_1 = arith.constant 0 : index
    %c0_2 = arith.constant 0 : index
    %1 = vector.load %arg2[%c0_1, %c0_2] : memref<8x2xbf16, #tpu.memory_space<vmem>>, vector<8x2xbf16>
    %cst = arith.constant dense<0.000000e+00> : vector<64x2xf32>
    %2 = tpu.matmul %0, %1, %cst {dimension_numbers = #tpu.dot_dimension_numbers<[1], [0], [0], [1], [0, 0, 1, 1], [], []>} : vector<64x8xbf16>, vector<8x2xbf16>, vector<64x2xf32> -> vector<64x2xf32>
    %c0_3 = arith.constant 0 : index
    %c0_4 = arith.constant 0 : index
    %3 = vector.load %arg3[%c0_3, %c0_4] : memref<64x1xf32, #tpu.memory_space<vmem>>, vector<64x1xf32>
    %4 = vector.broadcast %3 : vector<64x1xf32> to vector<64x2xf32>
    %5 = arith.addf %2, %4 : vector<64x2xf32>
    %cst_5 = arith.constant 0.000000e+00 : f32
    %6 = vector.broadcast %cst_5 : f32 to vector<64x2xf32>
    %7 = arith.cmpf ogt, %5, %6 : vector<64x2xf32>
    %cst_6 = arith.constant 1.000000e-01 : f32
    %8 = vector.broadcast %cst_6 : f32 to vector<64x2xf32>
    %9 = arith.mulf %8, %5 : vector<64x2xf32>
    %10 = arith.select %7, %5, %9 : vector<64x2xi1>, vector<64x2xf32>
    %11 = arith.truncf %10 : vector<64x2xf32> to vector<64x2xbf16>
    %c0_7 = arith.constant 0 : index
    %c0_8 = arith.constant 0 : index
    %12 = vector.load %arg4[%c0_7, %c0_8] : memref<64x2xbf16, #tpu.memory_space<vmem>>, vector<64x2xbf16>
    tpu.vector_store %arg4[%c0_7, %c0_8], %11 {strides = array<i32>} : memref<64x2xbf16, #tpu.memory_space<vmem>>, vector<64x2xbf16>,
    return
  }
  func.func @transform_0(%arg0: i32) -> (i32, i32) {
    %c0_i32 = arith.constant 0 : i32
    %c0_i32_0 = arith.constant 0 : i32
    %c0_i32_1 = arith.constant 0 : i32
    return %c0_i32, %c0_i32_0 : i32, i32
  }
  func.func @transform_1(%arg0: i32) -> (i32, i32) {
    %c0_i32 = arith.constant 0 : i32
    %c0_i32_0 = arith.constant 0 : i32
    return %c0_i32, %arg0 : i32, i32
  }
  func.func @transform_2(%arg0: i32) -> (i32, i32) {
    %c0_i32 = arith.constant 0 : i32
    %c0_i32_0 = arith.constant 0 : i32
    %c0_i32_1 = arith.constant 0 : i32
    return %c0_i32, %c0_i32_0 : i32, i32
  }
  func.func @transform_3(%arg0: i32) -> (i32, i32) {
    %c0_i32 = arith.constant 0 : i32
    %c0_i32_0 = arith.constant 0 : i32
    return %c0_i32, %arg0 : i32, i32
  }
}

module attributes {stable_mosaic.version = 11 : i64} {
  func.func @_mm_kernel(%arg0: i32, %arg1: memref<64x8xbf16, #tpu.memory_space<vmem>>, %arg2: memref<8x16xbf16, #tpu.memory_space<vmem>>, %arg3: memref<64x1xf32, #tpu.memory_space<vmem>>, %arg4: memref<64x16xbf16, #tpu.memory_space<vmem>>) attributes {dimension_semantics = [#tpu.dimension_semantics<parallel>], iteration_bounds = array<i64: 1>, scalar_prefetch = 0 : i64, scratch_operands = 0 : i64, tpu.core_type = #tpu.core_type<tc>, window_params = [{pipeline_mode = #tpu.pipeline_mode<synchronous>, transform_indices = @transform_0, window_bounds = array<i64: 64, 8>}, {transform_indices = @transform_1, window_bounds = array<i64: 8, 16>}, {pipeline_mode = #tpu.pipeline_mode<synchronous>, transform_indices = @transform_2, window_bounds = array<i64: 64, 1>}, {transform_indices = @transform_3, window_bounds = array<i64: 64, 16>}]} {
    %c0 = arith.constant 0 : index
    %c0_0 = arith.constant 0 : index
    %0 = vector.load %arg1[%c0, %c0_0] : memref<64x8xbf16, #tpu.memory_space<vmem>>, vector<64x8xbf16>
    %c0_1 = arith.constant 0 : index
    %c0_2 = arith.constant 0 : index
    %1 = vector.load %arg2[%c0_1, %c0_2] : memref<8x16xbf16, #tpu.memory_space<vmem>>, vector<8x16xbf16>
    %cst = arith.constant dense<0.000000e+00> : vector<64x16xf32>
    %2 = tpu.matmul %0, %1, %cst {dimension_numbers = #tpu.dot_dimension_numbers<[1], [0], [0], [1], [0, 0, 1, 1], [], []>} : vector<64x8xbf16>, vector<8x16xbf16>, vector<64x16xf32> -> vector<64x16xf32>
    %c0_3 = arith.constant 0 : index
    %c0_4 = arith.constant 0 : index
    %3 = vector.load %arg3[%c0_3, %c0_4] : memref<64x1xf32, #tpu.memory_space<vmem>>, vector<64x1xf32>
    %4 = vector.broadcast %3 : vector<64x1xf32> to vector<64x16xf32>
    %5 = arith.addf %2, %4 : vector<64x16xf32>
    %cst_5 = arith.constant 0.000000e+00 : f32
    %6 = vector.broadcast %cst_5 : f32 to vector<64x16xf32>
    %7 = arith.cmpf ogt, %5, %6 : vector<64x16xf32>
    %cst_6 = arith.constant 1.000000e-01 : f32
    %8 = vector.broadcast %cst_6 : f32 to vector<64x16xf32>
    %9 = arith.mulf %8, %5 : vector<64x16xf32>
    %10 = arith.select %7, %5, %9 : vector<64x16xi1>, vector<64x16xf32>
    %11 = arith.truncf %10 : vector<64x16xf32> to vector<64x16xbf16>
    %c0_7 = arith.constant 0 : index
    %c0_8 = arith.constant 0 : index
    %12 = vector.load %arg4[%c0_7, %c0_8] : memref<64x16xbf16, #tpu.memory_space<vmem>>, vector<64x16xbf16>
    tpu.vector_store %arg4[%c0_7, %c0_8], %11 {strides = array<i32>} : memref<64x16xbf16, #tpu.memory_space<vmem>>, vector<64x16xbf16>,
    return
  }
  func.func @transform_0(%arg0: i32) -> (i32, i32) {
    %c0_i32 = arith.constant 0 : i32
    %c0_i32_0 = arith.constant 0 : i32
    %c0_i32_1 = arith.constant 0 : i32
    return %c0_i32, %c0_i32_0 : i32, i32
  }
  func.func @transform_1(%arg0: i32) -> (i32, i32) {
    %c0_i32 = arith.constant 0 : i32
    %c0_i32_0 = arith.constant 0 : i32
    return %c0_i32, %arg0 : i32, i32
  }
  func.func @transform_2(%arg0: i32) -> (i32, i32) {
    %c0_i32 = arith.constant 0 : i32
    %c0_i32_0 = arith.constant 0 : i32
    %c0_i32_1 = arith.constant 0 : i32
    return %c0_i32, %c0_i32_0 : i32, i32
  }
  func.func @transform_3(%arg0: i32) -> (i32, i32) {
    %c0_i32 = arith.constant 0 : i32
    %c0_i32_0 = arith.constant 0 : i32
    return %c0_i32, %arg0 : i32, i32
  }
}

module attributes {stable_mosaic.version = 11 : i64} {
  func.func @_mm_kernel(%arg0: i32, %arg1: memref<64x8xbf16, #tpu.memory_space<vmem>>, %arg2: memref<8x128xbf16, #tpu.memory_space<vmem>>, %arg3: memref<64x1xf32, #tpu.memory_space<vmem>>, %arg4: memref<64x128xbf16, #tpu.memory_space<vmem>>) attributes {dimension_semantics = [#tpu.dimension_semantics<parallel>], iteration_bounds = array<i64: 1>, scalar_prefetch = 0 : i64, scratch_operands = 0 : i64, tpu.core_type = #tpu.core_type<tc>, window_params = [{pipeline_mode = #tpu.pipeline_mode<synchronous>, transform_indices = @transform_0, window_bounds = array<i64: 64, 8>}, {transform_indices = @transform_1, window_bounds = array<i64: 8, 128>}, {pipeline_mode = #tpu.pipeline_mode<synchronous>, transform_indices = @transform_2, window_bounds = array<i64: 64, 1>}, {transform_indices = @transform_3, window_bounds = array<i64: 64, 128>}]} {
    %c0 = arith.constant 0 : index
    %c0_0 = arith.constant 0 : index
    %0 = vector.load %arg1[%c0, %c0_0] : memref<64x8xbf16, #tpu.memory_space<vmem>>, vector<64x8xbf16>
    %c0_1 = arith.constant 0 : index
    %c0_2 = arith.constant 0 : index
    %1 = vector.load %arg2[%c0_1, %c0_2] : memref<8x128xbf16, #tpu.memory_space<vmem>>, vector<8x128xbf16>
    %cst = arith.constant dense<0.000000e+00> : vector<64x128xf32>
    %2 = tpu.matmul %0, %1, %cst {dimension_numbers = #tpu.dot_dimension_numbers<[1], [0], [0], [1], [0, 0, 1, 1], [], []>} : vector<64x8xbf16>, vector<8x128xbf16>, vector<64x128xf32> -> vector<64x128xf32>
    %c0_3 = arith.constant 0 : index
    %c0_4 = arith.constant 0 : index
    %3 = vector.load %arg3[%c0_3, %c0_4] : memref<64x1xf32, #tpu.memory_space<vmem>>, vector<64x1xf32>
    %4 = vector.broadcast %3 : vector<64x1xf32> to vector<64x128xf32>
    %5 = arith.addf %2, %4 : vector<64x128xf32>
    %cst_5 = arith.constant 0.000000e+00 : f32
    %6 = vector.broadcast %cst_5 : f32 to vector<64x128xf32>
    %7 = arith.cmpf ogt, %5, %6 : vector<64x128xf32>
    %cst_6 = arith.constant 1.000000e-01 : f32
    %8 = vector.broadcast %cst_6 : f32 to vector<64x128xf32>
    %9 = arith.mulf %8, %5 : vector<64x128xf32>
    %10 = arith.select %7, %5, %9 : vector<64x128xi1>, vector<64x128xf32>
    %11 = arith.truncf %10 : vector<64x128xf32> to vector<64x128xbf16>
    %c0_7 = arith.constant 0 : index
    %c0_8 = arith.constant 0 : index
    %12 = vector.load %arg4[%c0_7, %c0_8] : memref<64x128xbf16, #tpu.memory_space<vmem>>, vector<64x128xbf16>
    tpu.vector_store %arg4[%c0_7, %c0_8], %11 {strides = array<i32>} : memref<64x128xbf16, #tpu.memory_space<vmem>>, vector<64x128xbf16>,
    return
  }
  func.func @transform_0(%arg0: i32) -> (i32, i32) {
    %c0_i32 = arith.constant 0 : i32
    %c0_i32_0 = arith.constant 0 : i32
    %c0_i32_1 = arith.constant 0 : i32
    return %c0_i32, %c0_i32_0 : i32, i32
  }
  func.func @transform_1(%arg0: i32) -> (i32, i32) {
    %c0_i32 = arith.constant 0 : i32
    %c0_i32_0 = arith.constant 0 : i32
    return %c0_i32, %arg0 : i32, i32
  }
  func.func @transform_2(%arg0: i32) -> (i32, i32) {
    %c0_i32 = arith.constant 0 : i32
    %c0_i32_0 = arith.constant 0 : i32
    %c0_i32_1 = arith.constant 0 : i32
    return %c0_i32, %c0_i32_0 : i32, i32
  }
  func.func @transform_3(%arg0: i32) -> (i32, i32) {
    %c0_i32 = arith.constant 0 : i32
    %c0_i32_0 = arith.constant 0 : i32
    return %c0_i32, %arg0 : i32, i32
  }
}

module attributes {stable_mosaic.version = 11 : i64} {
  func.func @_mm_kernel(%arg0: i32, %arg1: memref<64x8xbf16, #tpu.memory_space<vmem>>, %arg2: memref<8x512xbf16, #tpu.memory_space<vmem>>, %arg3: memref<64x1xf32, #tpu.memory_space<vmem>>, %arg4: memref<64x512xbf16, #tpu.memory_space<vmem>>) attributes {dimension_semantics = [#tpu.dimension_semantics<parallel>], iteration_bounds = array<i64: 2>, scalar_prefetch = 0 : i64, scratch_operands = 0 : i64, tpu.core_type = #tpu.core_type<tc>, window_params = [{pipeline_mode = #tpu.pipeline_mode<synchronous>, transform_indices = @transform_0, window_bounds = array<i64: 64, 8>}, {transform_indices = @transform_1, window_bounds = array<i64: 8, 512>}, {pipeline_mode = #tpu.pipeline_mode<synchronous>, transform_indices = @transform_2, window_bounds = array<i64: 64, 1>}, {transform_indices = @transform_3, window_bounds = array<i64: 64, 512>}]} {
    %c0 = arith.constant 0 : index
    %c0_0 = arith.constant 0 : index
    %0 = vector.load %arg1[%c0, %c0_0] : memref<64x8xbf16, #tpu.memory_space<vmem>>, vector<64x8xbf16>
    %c0_1 = arith.constant 0 : index
    %c0_2 = arith.constant 0 : index
    %1 = vector.load %arg2[%c0_1, %c0_2] : memref<8x512xbf16, #tpu.memory_space<vmem>>, vector<8x512xbf16>
    %cst = arith.constant dense<0.000000e+00> : vector<64x512xf32>
    %2 = tpu.matmul %0, %1, %cst {dimension_numbers = #tpu.dot_dimension_numbers<[1], [0], [0], [1], [0, 0, 1, 1], [], []>} : vector<64x8xbf16>, vector<8x512xbf16>, vector<64x512xf32> -> vector<64x512xf32>
    %c0_3 = arith.constant 0 : index
    %c0_4 = arith.constant 0 : index
    %3 = vector.load %arg3[%c0_3, %c0_4] : memref<64x1xf32, #tpu.memory_space<vmem>>, vector<64x1xf32>
    %4 = vector.broadcast %3 : vector<64x1xf32> to vector<64x512xf32>
    %5 = arith.addf %2, %4 : vector<64x512xf32>
    %cst_5 = arith.constant 0.000000e+00 : f32
    %6 = vector.broadcast %cst_5 : f32 to vector<64x512xf32>
    %7 = arith.cmpf ogt, %5, %6 : vector<64x512xf32>
    %cst_6 = arith.constant 1.000000e-01 : f32
    %8 = vector.broadcast %cst_6 : f32 to vector<64x512xf32>
    %9 = arith.mulf %8, %5 : vector<64x512xf32>
    %10 = arith.select %7, %5, %9 : vector<64x512xi1>, vector<64x512xf32>
    %11 = arith.truncf %10 : vector<64x512xf32> to vector<64x512xbf16>
    %c0_7 = arith.constant 0 : index
    %c0_8 = arith.constant 0 : index
    %12 = vector.load %arg4[%c0_7, %c0_8] : memref<64x512xbf16, #tpu.memory_space<vmem>>, vector<64x512xbf16>
    tpu.vector_store %arg4[%c0_7, %c0_8], %11 {strides = array<i32>} : memref<64x512xbf16, #tpu.memory_space<vmem>>, vector<64x512xbf16>,
    return
  }
  func.func @transform_0(%arg0: i32) -> (i32, i32) {
    %c0_i32 = arith.constant 0 : i32
    %c0_i32_0 = arith.constant 0 : i32
    %c0_i32_1 = arith.constant 0 : i32
    return %c0_i32, %c0_i32_0 : i32, i32
  }
  func.func @transform_1(%arg0: i32) -> (i32, i32) {
    %c0_i32 = arith.constant 0 : i32
    %c0_i32_0 = arith.constant 0 : i32
    return %c0_i32, %arg0 : i32, i32
  }
  func.func @transform_2(%arg0: i32) -> (i32, i32) {
    %c0_i32 = arith.constant 0 : i32
    %c0_i32_0 = arith.constant 0 : i32
    %c0_i32_1 = arith.constant 0 : i32
    return %c0_i32, %c0_i32_0 : i32, i32
  }
  func.func @transform_3(%arg0: i32) -> (i32, i32) {
    %c0_i32 = arith.constant 0 : i32
    %c0_i32_0 = arith.constant 0 : i32
    return %c0_i32, %arg0 : i32, i32
  }
}

module attributes {stable_mosaic.version = 11 : i64} {
  func.func @_mm_kernel(%arg0: i32, %arg1: memref<2x216xbf16, #tpu.memory_space<vmem>>, %arg2: memref<216x2048xbf16, #tpu.memory_space<vmem>>, %arg3: memref<2x1xf32, #tpu.memory_space<vmem>>, %arg4: memref<2x2048xf32, #tpu.memory_space<vmem>>) attributes {dimension_semantics = [#tpu.dimension_semantics<parallel>], iteration_bounds = array<i64: 4>, scalar_prefetch = 0 : i64, scratch_operands = 0 : i64, tpu.core_type = #tpu.core_type<tc>, window_params = [{pipeline_mode = #tpu.pipeline_mode<synchronous>, transform_indices = @transform_0, window_bounds = array<i64: 2, 216>}, {transform_indices = @transform_1, window_bounds = array<i64: 216, 2048>}, {pipeline_mode = #tpu.pipeline_mode<synchronous>, transform_indices = @transform_2, window_bounds = array<i64: 2, 1>}, {transform_indices = @transform_3, window_bounds = array<i64: 2, 2048>}]} {
    %c0 = arith.constant 0 : index
    %c0_0 = arith.constant 0 : index
    %0 = vector.load %arg1[%c0, %c0_0] : memref<2x216xbf16, #tpu.memory_space<vmem>>, vector<2x216xbf16>
    %c0_1 = arith.constant 0 : index
    %c0_2 = arith.constant 0 : index
    %1 = vector.load %arg2[%c0_1, %c0_2] : memref<216x2048xbf16, #tpu.memory_space<vmem>>, vector<216x2048xbf16>
    %cst = arith.constant dense<0.000000e+00> : vector<2x2048xf32>
    %2 = tpu.matmul %0, %1, %cst {dimension_numbers = #tpu.dot_dimension_numbers<[1], [0], [0], [1], [0, 0, 1, 1], [], []>} : vector<2x216xbf16>, vector<216x2048xbf16>, vector<2x2048xf32> -> vector<2x2048xf32>
    %c0_3 = arith.constant 0 : index
    %c0_4 = arith.constant 0 : index
    %3 = vector.load %arg3[%c0_3, %c0_4] : memref<2x1xf32, #tpu.memory_space<vmem>>, vector<2x1xf32>
    %4 = vector.broadcast %3 : vector<2x1xf32> to vector<2x2048xf32>
    %5 = arith.addf %2, %4 : vector<2x2048xf32>
    %6 = tpu.iota {dimensions = array<i32: 0>} : vector<2x2048xi32>
    %c0_i32 = arith.constant 0 : i32
    %7 = vector.broadcast %c0_i32 : i32 to vector<2x2048xi32>
    %8 = arith.cmpi eq, %6, %7 : vector<2x2048xi32>
    %9 = arith.negf %5 : vector<2x2048xf32>
    %10 = math.exp %9 : vector<2x2048xf32>
    %cst_5 = arith.constant 1.000000e+00 : f32
    %11 = vector.broadcast %cst_5 : f32 to vector<2x2048xf32>
    %12 = arith.addf %11, %10 : vector<2x2048xf32>
    %13 = arith.divf %11, %12 : vector<2x2048xf32>
    %14 = arith.select %8, %13, %5 : vector<2x2048xi1>, vector<2x2048xf32>
    %c0_6 = arith.constant 0 : index
    %c0_7 = arith.constant 0 : index
    %15 = vector.load %arg4[%c0_6, %c0_7] : memref<2x2048xf32, #tpu.memory_space<vmem>>, vector<2x2048xf32>
    tpu.vector_store %arg4[%c0_6, %c0_7], %14 {strides = array<i32>} : memref<2x2048xf32, #tpu.memory_space<vmem>>, vector<2x2048xf32>,
    return
  }
  func.func @transform_0(%arg0: i32) -> (i32, i32) {
    %c0_i32 = arith.constant 0 : i32
    %c0_i32_0 = arith.constant 0 : i32
    %c0_i32_1 = arith.constant 0 : i32
    return %c0_i32, %c0_i32_0 : i32, i32
  }
  func.func @transform_1(%arg0: i32) -> (i32, i32) {
    %c0_i32 = arith.constant 0 : i32
    %c0_i32_0 = arith.constant 0 : i32
    return %c0_i32, %arg0 : i32, i32
  }
  func.func @transform_2(%arg0: i32) -> (i32, i32) {
    %c0_i32 = arith.constant 0 : i32
    %c0_i32_0 = arith.constant 0 : i32
    %c0_i32_1 = arith.constant 0 : i32
    return %c0_i32, %c0_i32_0 : i32, i32
  }
  func.func @transform_3(%arg0: i32) -> (i32, i32) {
    %c0_i32 = arith.constant 0 : i32
    %c0_i32_0 = arith.constant 0 : i32
    return %c0_i32, %arg0 : i32, i32
  }
}

</mosaic_0001>

<llo_original>
// kernel: tsdf_coder_forward.9
$region0: #{tsdf_coder_forward.9}
  #allocation0 [shape = 'u32[]', space=smem, size = 0x4, offset = 0x4, fixed_abs, tag = 'smem constant byte address 0x4 - core index']
  #allocation1 [shape = 'u32[144,128]{1,0:T(1,128)}', space=vmem, size = 0x12000, scoped, tag = 'internal scratch']
  %s0 = inlined_call_operand.vmem [shape: bf16[8,27], index: 0, kind: input, shape index: {}]
  %s1 = inlined_call_operand.vmem [shape: bf16[27,1024], index: 1, kind: input, shape index: {}]
  %s2 = inlined_call_operand.vmem [shape: f32[8,1], index: 2, kind: input, shape index: {}]
  %s3 = inlined_call_operand.vmem [shape: bf16[8,1024], index: 3, kind: output, shape index: {}]
  %s4 = sld [smem:[#allocation0]]
  $region68: #{tsdf_coder_forward.9} parent=0
    _
  %s6 = ssub.s32 1, %s4
  %s7 = scalar_select 0, %s6, %s4
  $region1: #{tsdf_coder_forward.9} parent=0
    #allocation2 [shape = 'u8[65536]{0}', space=vmem, size = 0x10000, scoped, tag = 'input window, operand 1']
    loop: start=0, step=1, limit=4
    $region2: #{tsdf_coder_forward.9} parent=1 // loop_pre_header
      _
    $region3: #{tsdf_coder_forward.9} parent=1 // loop_header
      %s9 = sphi 0, %s13
      %p10 = scmp.ge.s32.totalorder %s9, 4
      %s17 = sphi 0, %s17
      %s19 = sphi 0, %s17
      %s20 = sphi 0, %s19
      %s34 = sphi 0, %s20
      %s40 = sphi 0, %s42
      %s43 = sphi 0, %s40
      %s44 = sphi 0, %s43
      %s60 = sphi 0, %s44
      %s64 = sphi 0, %s64
      %s66 = sphi 0, %s64
      %s67 = sphi 0, %s66
      %s81 = sphi 0, %s67
      %s87 = sphi 0, %s89
      %s90 = sphi 0, %s87
      %s91 = sphi 0, %s90
      %s107 = sphi 0, %s91
    $region4: #{tsdf_coder_forward.9} parent=1 // loop_header_branch
      %12 = sbr.rel (%p10) target = $region8
    $region5: #{tsdf_coder_forward.9} parent=1 // loop_body
      %s14 = ssub.s32 %s9, 1
      %s15 = ssub.s32 %s9, 2
      %s16 = sadd.s32 %s9, 1
      %s18 = sadd.s32 %s17, 1
      %p21 = scmp.eq.s32.totalorder %s9, 1
      %p22 = scmp.ne.s32.totalorder %s17, %s19
      %p23 = scmp.eq.s32.totalorder %s9, 0
      %p24 = por %p22, %p23
      %p25 = scmp.ne.s32.totalorder %s17, %s19
      %p26 = scmp.eq.s32.totalorder %s14, 1
      %p27 = por %p25, %p26
      %p28 = scmp.ne.s32.totalorder %s19, %s20
      %p29 = scmp.eq.s32.totalorder %s14, 0
      %p30 = por %p28, %p29
      %p31 = scmp.ne.s32.totalorder %s19, %s20
      %p32 = scmp.eq.s32.totalorder %s15, 1
      %p33 = por %p31, %p32
      %p35 = scmp.ne.s32.totalorder %s20, %s34
      %p36 = scmp.eq.s32.totalorder %s15, 0
      %p37 = por %p35, %p36
      %s38 = ssub.s32 %s9, %s16
      %p39 = scmp.eq.s32.totalorder %s38, 0
      %s41 = sadd.s32 %s40, 1
      %s42 = scalar_select %p39, %s40, %s41
      %p45 = pneg %p39
      %p46 = scmp.eq.s32.totalorder %s9, 1
      %p47 = por %p45, %p46
      %p48 = scmp.ne.s32.totalorder %s40, %s43
      %p49 = scmp.eq.s32.totalorder %s9, 0
      %p50 = por %p48, %p49
      %p51 = scmp.ne.s32.totalorder %s40, %s43
      %p52 = scmp.eq.s32.totalorder %s14, 1
      %p53 = por %p51, %p52
      %p54 = scmp.ne.s32.totalorder %s43, %s44
      %p55 = scmp.eq.s32.totalorder %s14, 0
      %p56 = por %p54, %p55
      %p57 = scmp.ne.s32.totalorder %s43, %s44
      %p58 = scmp.eq.s32.totalorder %s15, 1
      %p59 = por %p57, %p58
      %p61 = scmp.ne.s32.totalorder %s44, %s60
      %p62 = scmp.eq.s32.totalorder %s15, 0
      %p63 = por %p61, %p62
      %s65 = sadd.s32 %s64, 1
      %p68 = scmp.eq.s32.totalorder %s9, 1
      %p69 = scmp.ne.s32.totalorder %s64, %s66
      %p70 = scmp.eq.s32.totalorder %s9, 0
      %p71 = por %p69, %p70
      %p72 = scmp.ne.s32.totalorder %s64, %s66
      %p73 = scmp.eq.s32.totalorder %s14, 1
      %p74 = por %p72, %p73
      %p75 = scmp.ne.s32.totalorder %s66, %s67
      %p76 = scmp.eq.s32.totalorder %s14, 0
      %p77 = por %p75, %p76
      %p78 = scmp.ne.s32.totalorder %s66, %s67
      %p79 = scmp.eq.s32.totalorder %s15, 1
      %p80 = por %p78, %p79
      %p82 = scmp.ne.s32.totalorder %s67, %s81
      %p83 = scmp.eq.s32.totalorder %s15, 0
      %p84 = por %p82, %p83
      %s85 = ssub.s32 %s9, %s16
      %p86 = scmp.eq.s32.totalorder %s85, 0
      %s88 = sadd.s32 %s87, 1
      %s89 = scalar_select %p86, %s87, %s88
      %p92 = pneg %p86
      %p93 = scmp.eq.s32.totalorder %s9, 1
      %p94 = por %p92, %p93
      %p95 = scmp.ne.s32.totalorder %s87, %s90
      %p96 = scmp.eq.s32.totalorder %s9, 0
      %p97 = por %p95, %p96
      %p98 = scmp.ne.s32.totalorder %s87, %s90
      %p99 = scmp.eq.s32.totalorder %s14, 1
      %p100 = por %p98, %p99
      %p101 = scmp.ne.s32.totalorder %s90, %s91
      %p102 = scmp.eq.s32.totalorder %s14, 0
      %p103 = por %p101, %p102
      %p104 = scmp.ne.s32.totalorder %s90, %s91
      %p105 = scmp.eq.s32.totalorder %s15, 1
      %p106 = por %p104, %p105
      %p108 = scmp.ne.s32.totalorder %s91, %s107
      %p109 = scmp.eq.s32.totalorder %s15, 0
      %p110 = por %p108, %p109
      %p111 = scmp.le.s32.totalorder 1, %s9
      %p112 = scmp.lt.s32.totalorder %s9, 3
      %p113 = pnand %p111, %p112
      %p114 = pneg %p113
      // Predicated region
      $region9: #{tsdf_coder_forward.9} parent=5 // pred_check
        _
      $region10: #{tsdf_coder_forward.9} parent=5 // pred_check_branch
        %116 = sbr.rel (%p113) target = $region12
      $region11: #{tsdf_coder_forward.9} parent=5 // pred_region
        %s117 = ssub.s32 %s9, 1
        // Predicated region
        $region13: #{tsdf_coder_forward.9} parent=11 // pred_check
          %p118 = pneg %p30
        $region14: #{tsdf_coder_forward.9} parent=11 // pred_check_branch
          %120 = sbr.rel (%p118) target = $region16
        $region15: #{tsdf_coder_forward.9} parent=11 // pred_region
          _
        $region16: #{tsdf_coder_forward.9} parent=11 // pred_fallthru
          _
        // Predicated region
        $region17: #{tsdf_coder_forward.9} parent=11 // pred_check
          %p121 = pneg %p77
        $region18: #{tsdf_coder_forward.9} parent=11 // pred_check_branch
          %123 = sbr.rel (%p121) target = $region20
        $region19: #{tsdf_coder_forward.9} parent=11 // pred_region
          _
        $region20: #{tsdf_coder_forward.9} parent=11 // pred_fallthru
          _
      $region12: #{tsdf_coder_forward.9} parent=5 // pred_fallthru
        _
      %p124 = scmp.lt.s32.totalorder %s9, 2
      // Predicated region
      $region21: #{tsdf_coder_forward.9} parent=5 // pred_check
        %p125 = pneg %p124
      $region22: #{tsdf_coder_forward.9} parent=5 // pred_check_branch
        %127 = sbr.rel (%p125) target = $region24
      $region23: #{tsdf_coder_forward.9} parent=5 // pred_region
        // Predicated region
        $region25: #{tsdf_coder_forward.9} parent=23 // pred_check
          %p128 = pneg %p50
        $region26: #{tsdf_coder_forward.9} parent=23 // pred_check_branch
          %130 = sbr.rel (%p128) target = $region28
        $region27: #{tsdf_coder_forward.9} parent=23 // pred_region
          %s131 = sand.u32 %s40, 1
          %s132 = sand.u32 %s40, 1
          %s133 = smul.addr %s132, 64
          %s134 = scalar_lea.vmem [#allocation2], %s133
          %s135 = smul.u32 4, %s9
          %s136 = smul.addr %s135, 4
          %s137 = scalar_lea.vmem %s1, %s136
          // Predicated region
          $region29: #{tsdf_coder_forward.9} parent=27 // pred_check
            _
          $region30: #{tsdf_coder_forward.9} parent=27 // pred_check_branch
            %139 = sbr.rel (0) target = $region32
          $region31: #{tsdf_coder_forward.9} parent=27 // pred_region
            // Predicated region
            $region33: #{tsdf_coder_forward.9} parent=31 // pred_check
              _
            $region34: #{tsdf_coder_forward.9} parent=31 // pred_check_branch
              %141 = sbr.rel (0) target = $region36
            $region35: #{tsdf_coder_forward.9} parent=31 // pred_region
              loop: start=0, step=1, limit=1
              $region37: #{tsdf_coder_forward.9} parent=35 // loop_pre_header
                _
              $region38: #{tsdf_coder_forward.9} parent=35 // loop_header
                %s143 = sphi 0, %s147
                %p144 = scmp.ge.s32.totalorder %s143, 1
                %s148 = sphi %s137, %s137
                %s149 = sphi %s134, %s134
              $region39: #{tsdf_coder_forward.9} parent=35 // loop_header_branch
                %146 = sbr.rel (%p144) target = $region43
              $region40: #{tsdf_coder_forward.9} parent=35 // loop_body
                %v150 = vld [vmem:[%s148] sm:$0xff]
                %151 = vst [vmem:[%s149] sm:$0xff] %v150
                %v152 = vld [vmem:[%s148 + $0x8] sm:$0xff]
                %153 = vst [vmem:[%s149 + $0x8] sm:$0xff] %v152
                %v154 = vld [vmem:[%s148 + $0x20] sm:$0xff]
                %155 = vst [vmem:[%s149 + $0x10] sm:$0xff] %v154
                %v156 = vld [vmem:[%s148 + $0x28] sm:$0xff]
                %157 = vst [vmem:[%s149 + $0x18] sm:$0xff] %v156
                %v158 = vld [vmem:[%s148 + $0x40] sm:$0xff]
                %159 = vst [vmem:[%s149 + $0x20] sm:$0xff] %v158
                %v160 = vld [vmem:[%s148 + $0x48] sm:$0xff]
                %161 = vst [vmem:[%s149 + $0x28] sm:$0xff] %v160
                %v162 = vld [vmem:[%s148 + $0x60] sm:$0xff]
                %163 = vst [vmem:[%s149 + $0x30] sm:$0xff] %v162
                %v164 = vld [vmem:[%s148 + $0x68] sm:$0xff]
                %165 = vst [vmem:[%s149 + $0x38] sm:$0xff] %v164
              $region41: #{tsdf_coder_forward.9} parent=35 // loop_footer
                %s147 = sadd.s32 1, %s143
              $region42: #{tsdf_coder_forward.9} parent=35 // loop_footer_branch
                %142 = sbr.rel target = $region38
              $region43: #{tsdf_coder_forward.9} parent=35 // loop_exit
                _
            $region36: #{tsdf_coder_forward.9} parent=31 // pred_fallthru
              _
            // Predicated region
            $region44: #{tsdf_coder_forward.9} parent=31 // pred_check
              _
            $region45: #{tsdf_coder_forward.9} parent=31 // pred_check_branch
              %167 = sbr.rel target = $region47
            $region46: #{tsdf_coder_forward.9} parent=31 // pred_region
              _
            $region47: #{tsdf_coder_forward.9} parent=31 // pred_fallthru
              _
          $region32: #{tsdf_coder_forward.9} parent=27 // pred_fallthru
            _
          %168 = vnop
        $region28: #{tsdf_coder_forward.9} parent=23 // pred_fallthru
          _
      $region24: #{tsdf_coder_forward.9} parent=5 // pred_fallthru
        _
      %p169 = scmp.le.s32.totalorder 1, %s9
      %p170 = scmp.lt.s32.totalorder %s9, 3
      %p171 = pnand %p169, %p170
      %p172 = pneg %p171
      // Predicated region
      $region48: #{tsdf_coder_forward.9} parent=5 // pred_check
        _
      $region49: #{tsdf_coder_forward.9} parent=5 // pred_check_branch
        %174 = sbr.rel (%p171) target = $region51
      $region50: #{tsdf_coder_forward.9} parent=5 // pred_region
        %s175 = ssub.s32 %s9, 1
        %s176 = sand.u32 %s43, 1
        %s177 = sand.u32 %s43, 1
        %s178 = smul.addr %s177, 64
        %s179 = scalar_lea.vmem [#allocation2], %s178
        // Predicated region
        $region52: #{tsdf_coder_forward.9} parent=50 // pred_check
          %p180 = pneg %p56
        $region53: #{tsdf_coder_forward.9} parent=50 // pred_check_branch
          %182 = sbr.rel (%p180) target = $region55
        $region54: #{tsdf_coder_forward.9} parent=50 // pred_region
          _
        $region55: #{tsdf_coder_forward.9} parent=50 // pred_fallthru
          _
        %p183 = pneg %p30
        %p184 = pneg %p27
        %s185 = sand.u32 %s43, 1
        %s186 = sand.u32 %s43, 1
        %s187 = smul.addr %s186, 64
        %s188 = scalar_lea.vmem [#allocation2], %s187
        %p189 = pneg %p56
        %p190 = pneg %p53
        %p191 = pneg %p77
        %p192 = pneg %p74
        %p193 = pneg %p103
        %p194 = pneg %p100
        %s195 = smul.u32 4, %s14
        %p196 = scmp.lt.s32.totalorder %s195, 7
        %s197 = scalar_select %p196, %s195, 7
        %s198 = smul.addr %s197, 4
        %s199 = scalar_lea.vmem %s3, %s198
        %s200 = smul.u32 4, %s14
        %s201 = smul.u32 4, %s14
        %p202 = scmp.lt.s32.totalorder %s201, 7
        %s203 = scalar_select %p202, %s201, 7
        %s204 = smul.addr %s203, 4
        %s205 = scalar_lea.vmem %s3, %s204
        %s206 = smul.u32 4, %s14
        %v208 = vld [vmem:[%s0] sm:$0xf]
        %v209 = vld [vmem:[%s179] sm:$0xff]
        %v210 = vld [vmem:[%s179 + $0x8] sm:$0xff]
        %v211 = vld [vmem:[%s179 + $0x10] sm:$0xff]
        %v212 = vld [vmem:[%s179 + $0x18] sm:$0xff]
        %v213 = vld [vmem:[%s179 + $0x20] sm:$0xff]
        %v214 = vld [vmem:[%s179 + $0x28] sm:$0xff]
        %v215 = vld [vmem:[%s179 + $0x30] sm:$0x33]
        %v216 = vld [vmem:[%s179 + $0x38] sm:$0x33]
        %v217 = vld [vmem:[%s2] sm:$0xff]
        %219 = vset.pattern.permute.xlu0 0
        %220 = vperm.xlu0 %219, %v217
        %v221 = vpop.permute.xlu0 %220
        %v231 = vunpack.c.l.b16 %v209
        %v232 = vunpack.c.h.b16 %v209
        %v233 = vunpack.c.l.b16 %v210
        %v234 = vunpack.c.h.b16 %v210
        %v235 = vunpack.c.l.b16 %v211
        %v236 = vunpack.c.h.b16 %v211
        %v237 = vunpack.c.l.b16 %v212
        %v238 = vunpack.c.h.b16 %v212
        %v239 = vunpack.c.l.b16 %v213
        %v240 = vunpack.c.h.b16 %v213
        %v241 = vunpack.c.l.b16 %v214
        %v242 = vunpack.c.h.b16 %v214
        %v243 = vunpack.c.l.b16 %v215
        %v244 = vunpack.c.h.b16 %v215
        %v245 = vunpack.c.l.b16 %v216
        %v246 = vunpack.c.h.b16 %v216
        %v247 = vpack.c.b16 %v235, %v231
        %v248 = vpack.c.b16 %v236, %v232
        %v249 = vpack.c.b16 %v237, %v233
        %v250 = vpack.c.b16 %v238, %v234
        %v251 = vpack.c.b16 %v243, %v239
        %v252 = vpack.c.b16 %v244, %v240
        %v253 = vpack.c.b16 %v245, %v241
        %v254 = vpack.c.b16 %v246, %v242
        %vm259 = vcmask 220160
        %v261 = vsel %vm259, %v208, 0
        %vm263 = vcmask 1044480
        %vm264 = vcmask 1045504
        %v265 = vsel %vm263, 4294967295, 65535
        %v266 = vsel %vm264, %v265, 0
        %v268 = vand.u32 %v251, %v266
        %v271 = vand.u32 %v252, %v266
        %v274 = vand.u32 %v253, %v266
        %v277 = vand.u32 %v254, %v266
        %279 = vmatprep.subr.bf16.mxu0 0
        %280 = vmatpush1.bf16.msra.mxu0 0
        %281 = vmatprep.subr.bf16.mxu0 0
        %282 = vmatpush1.bf16.msra.mxu0 0
        %283 = vmatprep.subr.bf16.mxu0 0
        %284 = vmatpush1.bf16.msra.mxu0 0
        %285 = vmatprep.subr.bf16.mxu0 0
        %286 = vmatpush1.bf16.msra.mxu0 0
        %287 = vmatprep.subr.bf16.mxu0 0
        %288 = vmatpush1.bf16.msra.mxu0 0
        %289 = vmatprep.subr.bf16.mxu0 0
        %290 = vmatpush1.bf16.msra.mxu0 0
        %291 = vmatprep.subr.bf16.mxu0 %v271
        %292 = vmatpush1.bf16.msra.mxu0 %v268
        %293 = vmatprep.subr.bf16.mxu0 %v248
        %294 = vmatpush1.bf16.msra.mxu0 %v247
        %295 = vmatprep.subr.bf16.mxu0 0
        %296 = vmatpush2.bf16.msra.mxu0 0
        %297 = vmatprep.subr.bf16.mxu0 0
        %298 = vmatpush2.bf16.msra.mxu0 0
        %299 = vmatprep.subr.bf16.mxu0 0
        %300 = vmatpush2.bf16.msra.mxu0 0
        %301 = vmatprep.subr.bf16.mxu0 0
        %302 = vmatpush2.bf16.msra.mxu0 0
        %303 = vmatprep.subr.bf16.mxu0 0
        %304 = vmatpush2.bf16.msra.mxu0 0
        %305 = vmatprep.subr.bf16.mxu0 0
        %306 = vmatpush2.bf16.msra.mxu0 0
        %307 = vmatprep.subr.bf16.mxu0 0
        %308 = vmatpush2.bf16.msra.mxu0 0
        %309 = vmatprep.subr.bf16.mxu0 0
        %310 = vmatpush2.bf16.msra.mxu0 0
        %311 = vmatprep.mubr.bf16.mxu0 0
        %312 = vmatmul.mubr.bf16.gmra.mxu0 %v261
        %v313 = vpop.f32.mrf.mxu0
        %v314 = vadd.f32 %v221, %v313
        %v315 = vpop.f32.mrf.mxu0
        %v316 = vadd.f32 %v221, %v315
        %v317 = vpop.f32.mrf.mxu0
        %v318 = vpop.f32.mrf.mxu0
        %319 = vdwg.mxu0
        %320 = vmatprep.subr.bf16.mxu0 0
        %321 = vmatpush1.bf16.msra.mxu0 0
        %322 = vmatprep.subr.bf16.mxu0 0
        %323 = vmatpush1.bf16.msra.mxu0 0
        %324 = vmatprep.subr.bf16.mxu0 0
        %325 = vmatpush1.bf16.msra.mxu0 0
        %326 = vmatprep.subr.bf16.mxu0 0
        %327 = vmatpush1.bf16.msra.mxu0 0
        %328 = vmatprep.subr.bf16.mxu0 0
        %329 = vmatpush1.bf16.msra.mxu0 0
        %330 = vmatprep.subr.bf16.mxu0 0
        %331 = vmatpush1.bf16.msra.mxu0 0
        %332 = vmatprep.subr.bf16.mxu0 %v277
        %333 = vmatpush1.bf16.msra.mxu0 %v274
        %334 = vmatprep.subr.bf16.mxu0 %v250
        %335 = vmatpush1.bf16.msra.mxu0 %v249
        %336 = vmatprep.subr.bf16.mxu0 0
        %337 = vmatpush2.bf16.msra.mxu0 0
        %338 = vmatprep.subr.bf16.mxu0 0
        %339 = vmatpush2.bf16.msra.mxu0 0
        %340 = vmatprep.subr.bf16.mxu0 0
        %341 = vmatpush2.bf16.msra.mxu0 0
        %342 = vmatprep.subr.bf16.mxu0 0
        %343 = vmatpush2.bf16.msra.mxu0 0
        %344 = vmatprep.subr.bf16.mxu0 0
        %345 = vmatpush2.bf16.msra.mxu0 0
        %346 = vmatprep.subr.bf16.mxu0 0
        %347 = vmatpush2.bf16.msra.mxu0 0
        %348 = vmatprep.subr.bf16.mxu0 0
        %349 = vmatpush2.bf16.msra.mxu0 0
        %350 = vmatprep.subr.bf16.mxu0 0
        %351 = vmatpush2.bf16.msra.mxu0 0
        %352 = vmatprep.mubr.bf16.mxu0 0
        %353 = vmatmul.mubr.bf16.gmra.mxu0 %v261
        %v354 = vpop.f32.mrf.mxu0
        %v355 = vadd.f32 %v221, %v354
        %v356 = vpop.f32.mrf.mxu0
        %v357 = vadd.f32 %v221, %v356
        %v358 = vpop.f32.mrf.mxu0
        %v359 = vpop.f32.mrf.mxu0
        %360 = vdwg.mxu0
        %vm361 = vcmp.gt.f32.partialorder %v314, 0.0
        %vm362 = vcmp.gt.f32.partialorder %v316, 0.0
        %vm363 = vcmp.gt.f32.partialorder %v355, 0.0
        %vm364 = vcmp.gt.f32.partialorder %v357, 0.0
        %v365 = vmul.f32 %v314, 0.1
        %v366 = vmul.f32 %v316, 0.1
        %v367 = vmul.f32 %v355, 0.1
        %v368 = vmul.f32 %v357, 0.1
        %v369 = vsel %vm361, %v314, %v365
        %v370 = vsel %vm362, %v316, %v366
        %v371 = vsel %vm363, %v355, %v367
        %v372 = vsel %vm364, %v357, %v368
        %v373 = vpack.c.bf16 %v369, %v369
        %v374 = vpack.c.bf16 %v370, %v370
        %v375 = vpack.c.bf16 %v371, %v371
        %v376 = vpack.c.bf16 %v372, %v372
        %v381 = vunpack.c.l.b16 %v373
        %v382 = vunpack.c.l.b16 %v374
        %v383 = vunpack.c.l.b16 %v375
        %v384 = vunpack.c.l.b16 %v376
        %v385 = vpack.c.b16 %v382, %v381
        %v386 = vpack.c.b16 %v384, %v383
        %389 = vst [vmem:[%s205] sm:$0xff] %v385
        %390 = vst [vmem:[%s205 + $0x8] sm:$0xff] %v386
        %s391 = smul.u32 4, %s14
        %p392 = scmp.lt.s32.totalorder %s391, 7
        %s393 = scalar_select %p392, %s391, 7
        %s394 = smul.addr %s393, 4
        %s395 = scalar_lea.vmem %s3, %s394
        // Predicated region
        $region56: #{tsdf_coder_forward.9} parent=50 // pred_check
          %p396 = pneg %p100
        $region57: #{tsdf_coder_forward.9} parent=50 // pred_check_branch
          %398 = sbr.rel (%p396) target = $region59
        $region58: #{tsdf_coder_forward.9} parent=50 // pred_region
          %s399 = smul.u32 4, %s14
        $region59: #{tsdf_coder_forward.9} parent=50 // pred_fallthru
          _
      $region51: #{tsdf_coder_forward.9} parent=5 // pred_fallthru
        _
      %p400 = scmp.le.s32.totalorder 2, %s9
      // Predicated region
      $region60: #{tsdf_coder_forward.9} parent=5 // pred_check
        %p401 = pneg %p400
      $region61: #{tsdf_coder_forward.9} parent=5 // pred_check_branch
        %403 = sbr.rel (%p401) target = $region63
      $region62: #{tsdf_coder_forward.9} parent=5 // pred_region
        %s404 = ssub.s32 %s9, 2
        // Predicated region
        $region64: #{tsdf_coder_forward.9} parent=62 // pred_check
          %p405 = pneg %p106
        $region65: #{tsdf_coder_forward.9} parent=62 // pred_check_branch
          %407 = sbr.rel (%p405) target = $region67
        $region66: #{tsdf_coder_forward.9} parent=62 // pred_region
          %s408 = smul.u32 4, %s15
          %p409 = scmp.lt.s32.totalorder %s408, 7
          %s410 = scalar_select %p409, %s408, 7
          %s411 = smul.addr %s410, 4
          %s412 = scalar_lea.vmem %s3, %s411
        $region67: #{tsdf_coder_forward.9} parent=62 // pred_fallthru
          _
      $region63: #{tsdf_coder_forward.9} parent=5 // pred_fallthru
        _
    $region6: #{tsdf_coder_forward.9} parent=1 // loop_footer
      %s13 = sadd.s32 1, %s9
    $region7: #{tsdf_coder_forward.9} parent=1 // loop_footer_branch
      %8 = sbr.rel target = $region3
    $region8: #{tsdf_coder_forward.9} parent=1 // loop_exit
      _

// kernel: tsdf_coder_forward.10
$region0: #{tsdf_coder_forward.10}
  #allocation0 [shape = 'u32[]', space=smem, size = 0x4, offset = 0x4, fixed_abs, tag = 'smem constant byte address 0x4 - core index']
  #allocation1 [shape = 'u32[144,128]{1,0:T(1,128)}', space=vmem, size = 0x12000, scoped, tag = 'internal scratch']
  %s0 = inlined_call_operand.vmem [shape: bf16[8,216], index: 0, kind: input, shape index: {}]
  %s1 = inlined_call_operand.vmem [shape: bf16[216,128], index: 1, kind: input, shape index: {}]
  %s2 = inlined_call_operand.vmem [shape: f32[8,1], index: 2, kind: input, shape index: {}]
  %s3 = inlined_call_operand.vmem [shape: bf16[8,128], index: 3, kind: output, shape index: {}]
  %s4 = sld [smem:[#allocation0]]
  $region22: #{tsdf_coder_forward.10} parent=0
    _
  %s6 = ssub.s32 1, %s4
  %s7 = scalar_select 0, %s6, %s4
  // Predicated region
  $region2: #{tsdf_coder_forward.10} parent=0 // pred_check
    _
  $region3: #{tsdf_coder_forward.10} parent=0 // pred_check_branch
    %9 = sbr.rel (0) target = $region5
  $region4: #{tsdf_coder_forward.10} parent=0 // pred_region
    _
  $region5: #{tsdf_coder_forward.10} parent=0 // pred_fallthru
    _
  // Predicated region
  $region6: #{tsdf_coder_forward.10} parent=0 // pred_check
    _
  $region7: #{tsdf_coder_forward.10} parent=0 // pred_check_branch
    %11 = sbr.rel (0) target = $region9
  $region8: #{tsdf_coder_forward.10} parent=0 // pred_region
    _
  $region9: #{tsdf_coder_forward.10} parent=0 // pred_fallthru
    _
  // Predicated region
  $region10: #{tsdf_coder_forward.10} parent=0 // pred_check
    _
  $region11: #{tsdf_coder_forward.10} parent=0 // pred_check_branch
    %13 = sbr.rel (0) target = $region13
  $region12: #{tsdf_coder_forward.10} parent=0 // pred_region
    _
  $region13: #{tsdf_coder_forward.10} parent=0 // pred_fallthru
    _
  %v15 = vld [vmem:[%s0] sm:$0xff]
  %v16 = vld [vmem:[%s1] sm:$0xf]
  %v17 = vld [vmem:[%s1 + $0x4] sm:$0xf]
  %v18 = vld [vmem:[%s1 + $0x8] sm:$0xf]
  %v19 = vld [vmem:[%s1 + $0xc] sm:$0xf]
  %v20 = vld [vmem:[%s1 + $0x10] sm:$0xf]
  %v21 = vld [vmem:[%s1 + $0x14] sm:$0xf]
  %v22 = vld [vmem:[%s1 + $0x18] sm:$0xf]
  %v23 = vld [vmem:[%s1 + $0x1c] sm:$0xf]
  %v24 = vld [vmem:[%s1 + $0x20] sm:$0xf]
  %v25 = vld [vmem:[%s1 + $0x24] sm:$0xf]
  %v26 = vld [vmem:[%s1 + $0x28] sm:$0xf]
  %v27 = vld [vmem:[%s1 + $0x2c] sm:$0xf]
  %v28 = vld [vmem:[%s1 + $0x30] sm:$0xf]
  %v29 = vld [vmem:[%s1 + $0x34] sm:$0xf]
  %v30 = vld [vmem:[%s1 + $0x38] sm:$0xf]
  %v31 = vld [vmem:[%s1 + $0x3c] sm:$0xf]
  %v32 = vld [vmem:[%s1 + $0x40] sm:$0xf]
  %v33 = vld [vmem:[%s1 + $0x44] sm:$0xf]
  %v34 = vld [vmem:[%s1 + $0x48] sm:$0xf]
  %v35 = vld [vmem:[%s1 + $0x4c] sm:$0xf]
  %v36 = vld [vmem:[%s1 + $0x50] sm:$0xf]
  %v37 = vld [vmem:[%s1 + $0x54] sm:$0xf]
  %v38 = vld [vmem:[%s1 + $0x58] sm:$0xf]
  %v39 = vld [vmem:[%s1 + $0x5c] sm:$0xf]
  %v40 = vld [vmem:[%s1 + $0x60] sm:$0xf]
  %v41 = vld [vmem:[%s1 + $0x64] sm:$0xf]
  %v42 = vld [vmem:[%s1 + $0x68] sm:$0xf]
  %v43 = vld [vmem:[%s2] sm:$0xff]
  %45 = vset.pattern.permute.xlu0 0
  %46 = vperm.xlu0 %45, %v43
  %v47 = vpop.permute.xlu0 %46
  %v50 = vunpack.c.l.b16 %v15
  %v51 = vunpack.c.h.b16 %v15
  %v52 = vpack.c.b16 %v50, %v50
  %v53 = vpack.c.b16 %v51, %v51
  %v82 = vunpack.c.l.b16 %v16
  %v83 = vunpack.c.l.b16 %v17
  %v84 = vunpack.c.l.b16 %v18
  %v85 = vunpack.c.l.b16 %v19
  %v86 = vunpack.c.l.b16 %v20
  %v87 = vunpack.c.l.b16 %v21
  %v88 = vunpack.c.l.b16 %v22
  %v89 = vunpack.c.l.b16 %v23
  %v90 = vunpack.c.l.b16 %v24
  %v91 = vunpack.c.l.b16 %v25
  %v92 = vunpack.c.l.b16 %v26
  %v93 = vunpack.c.l.b16 %v27
  %v94 = vunpack.c.l.b16 %v28
  %v95 = vunpack.c.l.b16 %v29
  %v96 = vunpack.c.l.b16 %v30
  %v97 = vunpack.c.l.b16 %v31
  %v98 = vunpack.c.l.b16 %v32
  %v99 = vunpack.c.l.b16 %v33
  %v100 = vunpack.c.l.b16 %v34
  %v101 = vunpack.c.l.b16 %v35
  %v102 = vunpack.c.l.b16 %v36
  %v103 = vunpack.c.l.b16 %v37
  %v104 = vunpack.c.l.b16 %v38
  %v105 = vunpack.c.l.b16 %v39
  %v106 = vunpack.c.l.b16 %v40
  %v107 = vunpack.c.l.b16 %v41
  %v108 = vunpack.c.l.b16 %v42
  %v109 = vpack.c.b16 %v83, %v82
  %v110 = vpack.c.b16 %v85, %v84
  %v111 = vpack.c.b16 %v87, %v86
  %v112 = vpack.c.b16 %v89, %v88
  %v113 = vpack.c.b16 %v91, %v90
  %v114 = vpack.c.b16 %v93, %v92
  %v115 = vpack.c.b16 %v95, %v94
  %v116 = vpack.c.b16 %v97, %v96
  %v117 = vpack.c.b16 %v99, %v98
  %v118 = vpack.c.b16 %v101, %v100
  %v119 = vpack.c.b16 %v103, %v102
  %v120 = vpack.c.b16 %v105, %v104
  %v121 = vpack.c.b16 %v107, %v106
  %v122 = vpack.c.b16 %v108, %v108
  %vm136 = vcmask 719872
  %v138 = vsel %vm136, %v53, 0
  %vm140 = vcmask 1043456
  %v142 = vsel %vm140, %v122, 0
  %144 = vmatprep.subr.bf16.mxu0 0
  %145 = vmatpush1.bf16.msra.mxu0 %v116
  %146 = vmatprep.subr.bf16.mxu0 0
  %147 = vmatpush1.bf16.msra.mxu0 %v115
  %148 = vmatprep.subr.bf16.mxu0 0
  %149 = vmatpush1.bf16.msra.mxu0 %v114
  %150 = vmatprep.subr.bf16.mxu0 0
  %151 = vmatpush1.bf16.msra.mxu0 %v113
  %152 = vmatprep.subr.bf16.mxu0 0
  %153 = vmatpush1.bf16.msra.mxu0 %v112
  %154 = vmatprep.subr.bf16.mxu0 0
  %155 = vmatpush1.bf16.msra.mxu0 %v111
  %156 = vmatprep.subr.bf16.mxu0 0
  %157 = vmatpush1.bf16.msra.mxu0 %v110
  %158 = vmatprep.subr.bf16.mxu0 0
  %159 = vmatpush1.bf16.msra.mxu0 %v109
  %160 = vmatprep.subr.bf16.mxu0 0
  %161 = vmatpush2.bf16.msra.mxu0 0
  %162 = vmatprep.subr.bf16.mxu0 0
  %163 = vmatpush2.bf16.msra.mxu0 0
  %164 = vmatprep.subr.bf16.mxu0 0
  %165 = vmatpush2.bf16.msra.mxu0 %v142
  %166 = vmatprep.subr.bf16.mxu0 0
  %167 = vmatpush2.bf16.msra.mxu0 %v121
  %168 = vmatprep.subr.bf16.mxu0 0
  %169 = vmatpush2.bf16.msra.mxu0 %v120
  %170 = vmatprep.subr.bf16.mxu0 0
  %171 = vmatpush2.bf16.msra.mxu0 %v119
  %172 = vmatprep.subr.bf16.mxu0 0
  %173 = vmatpush2.bf16.msra.mxu0 %v118
  %174 = vmatprep.subr.bf16.mxu0 0
  %175 = vmatpush2.bf16.msra.mxu0 %v117
  %176 = vmatprep.mubr.bf16.mxu0 %v138
  %177 = vmatmul.mubr.bf16.gmra.mxu0 %v52
  %v178 = vpop.f32.mrf.mxu0
  %v179 = vadd.f32 %v47, %v178
  %v180 = vpop.f32.mrf.mxu0
  %v181 = vpop.f32.mrf.mxu0
  %v182 = vpop.f32.mrf.mxu0
  %183 = vdwg.mxu0
  %vm184 = vcmp.gt.f32.partialorder %v179, 0.0
  %v185 = vmul.f32 %v179, 0.1
  %v186 = vsel %vm184, %v179, %v185
  %v187 = vpack.c.bf16 %v186, %v186
  %188 = vst [vmem:[%s3] sm:$0xf] %v187
  // Predicated region
  $region14: #{tsdf_coder_forward.10} parent=0 // pred_check
    _
  $region15: #{tsdf_coder_forward.10} parent=0 // pred_check_branch
    %190 = sbr.rel (0) target = $region17
  $region16: #{tsdf_coder_forward.10} parent=0 // pred_region
    _
  $region17: #{tsdf_coder_forward.10} parent=0 // pred_fallthru
    _
  // Predicated region
  $region18: #{tsdf_coder_forward.10} parent=0 // pred_check
    _
  $region19: #{tsdf_coder_forward.10} parent=0 // pred_check_branch
    %192 = sbr.rel (0) target = $region21
  $region20: #{tsdf_coder_forward.10} parent=0 // pred_region
    _
  $region21: #{tsdf_coder_forward.10} parent=0 // pred_fallthru
    _

// kernel: tsdf_coder_forward.11
$region0: #{tsdf_coder_forward.11}
  #allocation0 [shape = 'u32[]', space=smem, size = 0x4, offset = 0x4, fixed_abs, tag = 'smem constant byte address 0x4 - core index']
  #allocation1 [shape = 'u32[144,128]{1,0:T(1,128)}', space=vmem, size = 0x12000, scoped, tag = 'internal scratch']
  %s0 = inlined_call_operand.vmem [shape: bf16[8,216], index: 0, kind: input, shape index: {}]
  %s1 = inlined_call_operand.vmem [shape: bf16[216,16], index: 1, kind: input, shape index: {}]
  %s2 = inlined_call_operand.vmem [shape: f32[8,1], index: 2, kind: input, shape index: {}]
  %s3 = inlined_call_operand.vmem [shape: bf16[8,16], index: 3, kind: output, shape index: {}]
  %s4 = sld [smem:[#allocation0]]
  $region22: #{tsdf_coder_forward.11} parent=0
    _
  %s6 = ssub.s32 1, %s4
  %s7 = scalar_select 0, %s6, %s4
  // Predicated region
  $region2: #{tsdf_coder_forward.11} parent=0 // pred_check
    _
  $region3: #{tsdf_coder_forward.11} parent=0 // pred_check_branch
    %9 = sbr.rel (0) target = $region5
  $region4: #{tsdf_coder_forward.11} parent=0 // pred_region
    _
  $region5: #{tsdf_coder_forward.11} parent=0 // pred_fallthru
    _
  // Predicated region
  $region6: #{tsdf_coder_forward.11} parent=0 // pred_check
    _
  $region7: #{tsdf_coder_forward.11} parent=0 // pred_check_branch
    %11 = sbr.rel (0) target = $region9
  $region8: #{tsdf_coder_forward.11} parent=0 // pred_region
    _
  $region9: #{tsdf_coder_forward.11} parent=0 // pred_fallthru
    _
  // Predicated region
  $region10: #{tsdf_coder_forward.11} parent=0 // pred_check
    _
  $region11: #{tsdf_coder_forward.11} parent=0 // pred_check_branch
    %13 = sbr.rel (0) target = $region13
  $region12: #{tsdf_coder_forward.11} parent=0 // pred_region
    _
  $region13: #{tsdf_coder_forward.11} parent=0 // pred_fallthru
    _
  %v15 = vld [vmem:[%s0] sm:$0xff]
  %v16 = vld [vmem:[%s1] sm:$0xf]
  %v17 = vld [vmem:[%s1 + $0x4] sm:$0xf]
  %v18 = vld [vmem:[%s1 + $0x8] sm:$0xf]
  %v19 = vld [vmem:[%s1 + $0xc] sm:$0xf]
  %v20 = vld [vmem:[%s1 + $0x10] sm:$0xf]
  %v21 = vld [vmem:[%s1 + $0x14] sm:$0xf]
  %v22 = vld [vmem:[%s1 + $0x18] sm:$0xf]
  %v23 = vld [vmem:[%s1 + $0x1c] sm:$0xf]
  %v24 = vld [vmem:[%s1 + $0x20] sm:$0xf]
  %v25 = vld [vmem:[%s1 + $0x24] sm:$0xf]
  %v26 = vld [vmem:[%s1 + $0x28] sm:$0xf]
  %v27 = vld [vmem:[%s1 + $0x2c] sm:$0xf]
  %v28 = vld [vmem:[%s1 + $0x30] sm:$0xf]
  %v29 = vld [vmem:[%s1 + $0x34] sm:$0xf]
  %v30 = vld [vmem:[%s1 + $0x38] sm:$0xf]
  %v31 = vld [vmem:[%s1 + $0x3c] sm:$0xf]
  %v32 = vld [vmem:[%s1 + $0x40] sm:$0xf]
  %v33 = vld [vmem:[%s1 + $0x44] sm:$0xf]
  %v34 = vld [vmem:[%s1 + $0x48] sm:$0xf]
  %v35 = vld [vmem:[%s1 + $0x4c] sm:$0xf]
  %v36 = vld [vmem:[%s1 + $0x50] sm:$0xf]
  %v37 = vld [vmem:[%s1 + $0x54] sm:$0xf]
  %v38 = vld [vmem:[%s1 + $0x58] sm:$0xf]
  %v39 = vld [vmem:[%s1 + $0x5c] sm:$0xf]
  %v40 = vld [vmem:[%s1 + $0x60] sm:$0xf]
  %v41 = vld [vmem:[%s1 + $0x64] sm:$0xf]
  %v42 = vld [vmem:[%s1 + $0x68] sm:$0xf]
  %v43 = vld [vmem:[%s2] sm:$0xff]
  %45 = vset.pattern.permute.xlu0 0
  %46 = vperm.xlu0 %45, %v43
  %v47 = vpop.permute.xlu0 %46
  %v50 = vunpack.c.l.b16 %v15
  %v51 = vunpack.c.h.b16 %v15
  %v52 = vpack.c.b16 %v50, %v50
  %v53 = vpack.c.b16 %v51, %v51
  %v82 = vunpack.c.l.b16 %v16
  %v83 = vunpack.c.l.b16 %v17
  %v84 = vunpack.c.l.b16 %v18
  %v85 = vunpack.c.l.b16 %v19
  %v86 = vunpack.c.l.b16 %v20
  %v87 = vunpack.c.l.b16 %v21
  %v88 = vunpack.c.l.b16 %v22
  %v89 = vunpack.c.l.b16 %v23
  %v90 = vunpack.c.l.b16 %v24
  %v91 = vunpack.c.l.b16 %v25
  %v92 = vunpack.c.l.b16 %v26
  %v93 = vunpack.c.l.b16 %v27
  %v94 = vunpack.c.l.b16 %v28
  %v95 = vunpack.c.l.b16 %v29
  %v96 = vunpack.c.l.b16 %v30
  %v97 = vunpack.c.l.b16 %v31
  %v98 = vunpack.c.l.b16 %v32
  %v99 = vunpack.c.l.b16 %v33
  %v100 = vunpack.c.l.b16 %v34
  %v101 = vunpack.c.l.b16 %v35
  %v102 = vunpack.c.l.b16 %v36
  %v103 = vunpack.c.l.b16 %v37
  %v104 = vunpack.c.l.b16 %v38
  %v105 = vunpack.c.l.b16 %v39
  %v106 = vunpack.c.l.b16 %v40
  %v107 = vunpack.c.l.b16 %v41
  %v108 = vunpack.c.l.b16 %v42
  %v109 = vpack.c.b16 %v83, %v82
  %v110 = vpack.c.b16 %v85, %v84
  %v111 = vpack.c.b16 %v87, %v86
  %v112 = vpack.c.b16 %v89, %v88
  %v113 = vpack.c.b16 %v91, %v90
  %v114 = vpack.c.b16 %v93, %v92
  %v115 = vpack.c.b16 %v95, %v94
  %v116 = vpack.c.b16 %v97, %v96
  %v117 = vpack.c.b16 %v99, %v98
  %v118 = vpack.c.b16 %v101, %v100
  %v119 = vpack.c.b16 %v103, %v102
  %v120 = vpack.c.b16 %v105, %v104
  %v121 = vpack.c.b16 %v107, %v106
  %v122 = vpack.c.b16 %v108, %v108
  %vm136 = vcmask 719872
  %v138 = vsel %vm136, %v53, 0
  %vm140 = vcmask 1043456
  %v142 = vsel %vm140, %v122, 0
  %144 = vmatprep.subr.bf16.mxu0 0
  %145 = vmatpush1.bf16.msra.mxu0 %v116
  %146 = vmatprep.subr.bf16.mxu0 0
  %147 = vmatpush1.bf16.msra.mxu0 %v115
  %148 = vmatprep.subr.bf16.mxu0 0
  %149 = vmatpush1.bf16.msra.mxu0 %v114
  %150 = vmatprep.subr.bf16.mxu0 0
  %151 = vmatpush1.bf16.msra.mxu0 %v113
  %152 = vmatprep.subr.bf16.mxu0 0
  %153 = vmatpush1.bf16.msra.mxu0 %v112
  %154 = vmatprep.subr.bf16.mxu0 0
  %155 = vmatpush1.bf16.msra.mxu0 %v111
  %156 = vmatprep.subr.bf16.mxu0 0
  %157 = vmatpush1.bf16.msra.mxu0 %v110
  %158 = vmatprep.subr.bf16.mxu0 0
  %159 = vmatpush1.bf16.msra.mxu0 %v109
  %160 = vmatprep.subr.bf16.mxu0 0
  %161 = vmatpush2.bf16.msra.mxu0 0
  %162 = vmatprep.subr.bf16.mxu0 0
  %163 = vmatpush2.bf16.msra.mxu0 0
  %164 = vmatprep.subr.bf16.mxu0 0
  %165 = vmatpush2.bf16.msra.mxu0 %v142
  %166 = vmatprep.subr.bf16.mxu0 0
  %167 = vmatpush2.bf16.msra.mxu0 %v121
  %168 = vmatprep.subr.bf16.mxu0 0
  %169 = vmatpush2.bf16.msra.mxu0 %v120
  %170 = vmatprep.subr.bf16.mxu0 0
  %171 = vmatpush2.bf16.msra.mxu0 %v119
  %172 = vmatprep.subr.bf16.mxu0 0
  %173 = vmatpush2.bf16.msra.mxu0 %v118
  %174 = vmatprep.subr.bf16.mxu0 0
  %175 = vmatpush2.bf16.msra.mxu0 %v117
  %176 = vmatprep.mubr.bf16.mxu0 %v138
  %177 = vmatmul.mubr.bf16.gmra.mxu0 %v52
  %v178 = vpop.f32.mrf.mxu0
  %v179 = vadd.f32 %v47, %v178
  %v180 = vpop.f32.mrf.mxu0
  %v181 = vpop.f32.mrf.mxu0
  %v182 = vpop.f32.mrf.mxu0
  %183 = vdwg.mxu0
  %vm184 = vcmp.gt.f32.partialorder %v179, 0.0
  %v185 = vmul.f32 %v179, 0.1
  %v186 = vsel %vm184, %v179, %v185
  %v187 = vpack.c.bf16 %v186, %v186
  %vm188 = vcmask 125952
  %189 = vst.msk [vmem:[%s3] sm:$0xf] %vm188, %v187
  // Predicated region
  $region14: #{tsdf_coder_forward.11} parent=0 // pred_check
    _
  $region15: #{tsdf_coder_forward.11} parent=0 // pred_check_branch
    %191 = sbr.rel (0) target = $region17
  $region16: #{tsdf_coder_forward.11} parent=0 // pred_region
    _
  $region17: #{tsdf_coder_forward.11} parent=0 // pred_fallthru
    _
  // Predicated region
  $region18: #{tsdf_coder_forward.11} parent=0 // pred_check
    _
  $region19: #{tsdf_coder_forward.11} parent=0 // pred_check_branch
    %193 = sbr.rel (0) target = $region21
  $region20: #{tsdf_coder_forward.11} parent=0 // pred_region
    _
  $region21: #{tsdf_coder_forward.11} parent=0 // pred_fallthru
    _

// kernel: tsdf_coder_forward.12
$region0: #{tsdf_coder_forward.12}
  #allocation0 [shape = 'u32[]', space=smem, size = 0x4, offset = 0x4, fixed_abs, tag = 'smem constant byte address 0x4 - core index']
  #allocation1 [shape = 'u32[144,128]{1,0:T(1,128)}', space=vmem, size = 0x12000, scoped, tag = 'internal scratch']
  %s0 = inlined_call_operand.vmem [shape: bf16[8,216], index: 0, kind: input, shape index: {}]
  %s1 = inlined_call_operand.vmem [shape: bf16[216,2], index: 1, kind: input, shape index: {}]
  %s2 = inlined_call_operand.vmem [shape: f32[8,1], index: 2, kind: input, shape index: {}]
  %s3 = inlined_call_operand.vmem [shape: f32[8,11], index: 3, kind: input, shape index: {}]
  %s4 = inlined_call_operand.vmem [shape: f32[8,2], index: 4, kind: output, shape index: {0}]
  %s5 = inlined_call_operand.vmem [shape: f32[8,2], index: 5, kind: output, shape index: {1}]
  %6 = xla_tuple %s4, %s5
  %s7 = sld [smem:[#allocation0]]
  $region34: #{tsdf_coder_forward.12} parent=0
    _
  %s9 = ssub.s32 1, %s7
  %s10 = scalar_select 0, %s9, %s7
  // Predicated region
  $region2: #{tsdf_coder_forward.12} parent=0 // pred_check
    _
  $region3: #{tsdf_coder_forward.12} parent=0 // pred_check_branch
    %12 = sbr.rel (0) target = $region5
  $region4: #{tsdf_coder_forward.12} parent=0 // pred_region
    _
  $region5: #{tsdf_coder_forward.12} parent=0 // pred_fallthru
    _
  // Predicated region
  $region6: #{tsdf_coder_forward.12} parent=0 // pred_check
    _
  $region7: #{tsdf_coder_forward.12} parent=0 // pred_check_branch
    %14 = sbr.rel (0) target = $region9
  $region8: #{tsdf_coder_forward.12} parent=0 // pred_region
    _
  $region9: #{tsdf_coder_forward.12} parent=0 // pred_fallthru
    _
  // Predicated region
  $region10: #{tsdf_coder_forward.12} parent=0 // pred_check
    _
  $region11: #{tsdf_coder_forward.12} parent=0 // pred_check_branch
    %16 = sbr.rel (0) target = $region13
  $region12: #{tsdf_coder_forward.12} parent=0 // pred_region
    _
  $region13: #{tsdf_coder_forward.12} parent=0 // pred_fallthru
    _
  // Predicated region
  $region14: #{tsdf_coder_forward.12} parent=0 // pred_check
    _
  $region15: #{tsdf_coder_forward.12} parent=0 // pred_check_branch
    %18 = sbr.rel (0) target = $region17
  $region16: #{tsdf_coder_forward.12} parent=0 // pred_region
    _
  $region17: #{tsdf_coder_forward.12} parent=0 // pred_fallthru
    _
  %v20 = vld [vmem:[%s0] sm:$0xff]
  %v21 = vld [vmem:[%s1] sm:$0xf]
  %v22 = vld [vmem:[%s1 + $0x4] sm:$0xf]
  %v23 = vld [vmem:[%s1 + $0x8] sm:$0xf]
  %v24 = vld [vmem:[%s1 + $0xc] sm:$0xf]
  %v25 = vld [vmem:[%s1 + $0x10] sm:$0xf]
  %v26 = vld [vmem:[%s1 + $0x14] sm:$0xf]
  %v27 = vld [vmem:[%s1 + $0x18] sm:$0xf]
  %v28 = vld [vmem:[%s1 + $0x1c] sm:$0xf]
  %v29 = vld [vmem:[%s1 + $0x20] sm:$0xf]
  %v30 = vld [vmem:[%s1 + $0x24] sm:$0xf]
  %v31 = vld [vmem:[%s1 + $0x28] sm:$0xf]
  %v32 = vld [vmem:[%s1 + $0x2c] sm:$0xf]
  %v33 = vld [vmem:[%s1 + $0x30] sm:$0xf]
  %v34 = vld [vmem:[%s1 + $0x34] sm:$0xf]
  %v35 = vld [vmem:[%s1 + $0x38] sm:$0xf]
  %v36 = vld [vmem:[%s1 + $0x3c] sm:$0xf]
  %v37 = vld [vmem:[%s1 + $0x40] sm:$0xf]
  %v38 = vld [vmem:[%s1 + $0x44] sm:$0xf]
  %v39 = vld [vmem:[%s1 + $0x48] sm:$0xf]
  %v40 = vld [vmem:[%s1 + $0x4c] sm:$0xf]
  %v41 = vld [vmem:[%s1 + $0x50] sm:$0xf]
  %v42 = vld [vmem:[%s1 + $0x54] sm:$0xf]
  %v43 = vld [vmem:[%s1 + $0x58] sm:$0xf]
  %v44 = vld [vmem:[%s1 + $0x5c] sm:$0xf]
  %v45 = vld [vmem:[%s1 + $0x60] sm:$0xf]
  %v46 = vld [vmem:[%s1 + $0x64] sm:$0xf]
  %v47 = vld [vmem:[%s1 + $0x68] sm:$0xf]
  %v48 = vld [vmem:[%s2] sm:$0xff]
  %50 = vset.pattern.permute.xlu0 0
  %51 = vperm.xlu0 %50, %v48
  %v52 = vpop.permute.xlu0 %51
  %v55 = vunpack.c.l.b16 %v20
  %v56 = vunpack.c.h.b16 %v20
  %v57 = vpack.c.b16 %v55, %v55
  %v58 = vpack.c.b16 %v56, %v56
  %v87 = vunpack.c.l.b16 %v21
  %v88 = vunpack.c.l.b16 %v22
  %v89 = vunpack.c.l.b16 %v23
  %v90 = vunpack.c.l.b16 %v24
  %v91 = vunpack.c.l.b16 %v25
  %v92 = vunpack.c.l.b16 %v26
  %v93 = vunpack.c.l.b16 %v27
  %v94 = vunpack.c.l.b16 %v28
  %v95 = vunpack.c.l.b16 %v29
  %v96 = vunpack.c.l.b16 %v30
  %v97 = vunpack.c.l.b16 %v31
  %v98 = vunpack.c.l.b16 %v32
  %v99 = vunpack.c.l.b16 %v33
  %v100 = vunpack.c.l.b16 %v34
  %v101 = vunpack.c.l.b16 %v35
  %v102 = vunpack.c.l.b16 %v36
  %v103 = vunpack.c.l.b16 %v37
  %v104 = vunpack.c.l.b16 %v38
  %v105 = vunpack.c.l.b16 %v39
  %v106 = vunpack.c.l.b16 %v40
  %v107 = vunpack.c.l.b16 %v41
  %v108 = vunpack.c.l.b16 %v42
  %v109 = vunpack.c.l.b16 %v43
  %v110 = vunpack.c.l.b16 %v44
  %v111 = vunpack.c.l.b16 %v45
  %v112 = vunpack.c.l.b16 %v46
  %v113 = vunpack.c.l.b16 %v47
  %v114 = vpack.c.b16 %v88, %v87
  %v115 = vpack.c.b16 %v90, %v89
  %v116 = vpack.c.b16 %v92, %v91
  %v117 = vpack.c.b16 %v94, %v93
  %v118 = vpack.c.b16 %v96, %v95
  %v119 = vpack.c.b16 %v98, %v97
  %v120 = vpack.c.b16 %v100, %v99
  %v121 = vpack.c.b16 %v102, %v101
  %v122 = vpack.c.b16 %v104, %v103
  %v123 = vpack.c.b16 %v106, %v105
  %v124 = vpack.c.b16 %v108, %v107
  %v125 = vpack.c.b16 %v110, %v109
  %v126 = vpack.c.b16 %v112, %v111
  %v127 = vpack.c.b16 %v113, %v113
  %vm141 = vcmask 719872
  %v143 = vsel %vm141, %v58, 0
  %vm145 = vcmask 1043456
  %v147 = vsel %vm145, %v127, 0
  %149 = vmatprep.subr.bf16.mxu0 0
  %150 = vmatpush1.bf16.msra.mxu0 %v121
  %151 = vmatprep.subr.bf16.mxu0 0
  %152 = vmatpush1.bf16.msra.mxu0 %v120
  %153 = vmatprep.subr.bf16.mxu0 0
  %154 = vmatpush1.bf16.msra.mxu0 %v119
  %155 = vmatprep.subr.bf16.mxu0 0
  %156 = vmatpush1.bf16.msra.mxu0 %v118
  %157 = vmatprep.subr.bf16.mxu0 0
  %158 = vmatpush1.bf16.msra.mxu0 %v117
  %159 = vmatprep.subr.bf16.mxu0 0
  %160 = vmatpush1.bf16.msra.mxu0 %v116
  %161 = vmatprep.subr.bf16.mxu0 0
  %162 = vmatpush1.bf16.msra.mxu0 %v115
  %163 = vmatprep.subr.bf16.mxu0 0
  %164 = vmatpush1.bf16.msra.mxu0 %v114
  %165 = vmatprep.subr.bf16.mxu0 0
  %166 = vmatpush2.bf16.msra.mxu0 0
  %167 = vmatprep.subr.bf16.mxu0 0
  %168 = vmatpush2.bf16.msra.mxu0 0
  %169 = vmatprep.subr.bf16.mxu0 0
  %170 = vmatpush2.bf16.msra.mxu0 %v147
  %171 = vmatprep.subr.bf16.mxu0 0
  %172 = vmatpush2.bf16.msra.mxu0 %v126
  %173 = vmatprep.subr.bf16.mxu0 0
  %174 = vmatpush2.bf16.msra.mxu0 %v125
  %175 = vmatprep.subr.bf16.mxu0 0
  %176 = vmatpush2.bf16.msra.mxu0 %v124
  %177 = vmatprep.subr.bf16.mxu0 0
  %178 = vmatpush2.bf16.msra.mxu0 %v123
  %179 = vmatprep.subr.bf16.mxu0 0
  %180 = vmatpush2.bf16.msra.mxu0 %v122
  %181 = vmatprep.mubr.bf16.mxu0 %v143
  %182 = vmatmul.mubr.bf16.gmra.mxu0 %v57
  %v183 = vpop.f32.mrf.mxu0
  %v184 = vadd.f32 %v52, %v183
  %v185 = vpop.f32.mrf.mxu0
  %v186 = vpop.f32.mrf.mxu0
  %v187 = vpop.f32.mrf.mxu0
  %188 = vdwg.mxu0
  %v189 = vround.ne.pseudo %v184
  %vm190 = vcmask 15360
  %191 = vst.msk [vmem:[%s4] sm:$0xff] %vm190, %v189
  %v192 = vld [vmem:[%s3] sm:$0xff]
  %v193 = vmax.f32 %v192, 0.0
  %v194 = vand.u32 2147483647, %v192
  %v195 = vsub.f32 0.0, %v194
  %v196 = vmul.f32 %v195, 1.442695
  %v197 = vpow.pop %v196
  %v198 = vadd.f32 %v197, 1.0
  %v199 = vlog2.pop %v198
  %v200 = vmul.f32 %v199, 0.6931472
  %v201 = vmul.f32 -0.5, %v197
  %v202 = vadd.f32 %v201, 1.0
  %v203 = vmul.f32 %v202, %v197
  %v204 = vand.u32 2147483647, %v197
  %vm205 = vcmp.lt.f32.partialorder %v204, 0.0004427343
  %v206 = vsel %vm205, %v203, %v200
  %v207 = vadd.f32 %v193, %v206
  %v208 = vtanh.pop %v192
  %v209 = vadd.f32 %v189, 0.5
  %211 = vset.pattern.permute.xlu0 0
  %212 = vperm.xlu0 %211, %v207
  %v213 = vpop.permute.xlu0 %212
  %v215 = vmul.f32 %v209, %v213
  %217 = vset.pattern.permute.xlu0 4
  %218 = vperm.xlu0 %217, %v192
  %v219 = vpop.permute.xlu0 %218
  %v221 = vadd.f32 %v215, %v219
  %v222 = vtanh.pop %v221
  %224 = vset.pattern.permute.xlu0 8
  %225 = vperm.xlu0 %224, %v208
  %v226 = vpop.permute.xlu0 %225
  %v228 = vmul.f32 %v222, %v226
  %v229 = vadd.f32 %v221, %v228
  %230 = vset.pattern.permute.xlu0 1
  %231 = vperm.xlu0 %230, %v207
  %v232 = vpop.permute.xlu0 %231
  %v234 = vmul.f32 %v229, %v232
  %235 = vset.pattern.permute.xlu0 5
  %236 = vperm.xlu0 %235, %v192
  %v237 = vpop.permute.xlu0 %236
  %v239 = vadd.f32 %v234, %v237
  %v240 = vtanh.pop %v239
  %241 = vset.pattern.permute.xlu0 9
  %242 = vperm.xlu0 %241, %v208
  %v243 = vpop.permute.xlu0 %242
  %v245 = vmul.f32 %v240, %v243
  %v246 = vadd.f32 %v239, %v245
  %247 = vset.pattern.permute.xlu0 2
  %248 = vperm.xlu0 %247, %v207
  %v249 = vpop.permute.xlu0 %248
  %v251 = vmul.f32 %v246, %v249
  %252 = vset.pattern.permute.xlu0 6
  %253 = vperm.xlu0 %252, %v192
  %v254 = vpop.permute.xlu0 %253
  %v256 = vadd.f32 %v251, %v254
  %v257 = vtanh.pop %v256
  %258 = vset.pattern.permute.xlu0 10
  %259 = vperm.xlu0 %258, %v208
  %v260 = vpop.permute.xlu0 %259
  %v262 = vmul.f32 %v257, %v260
  %v263 = vadd.f32 %v256, %v262
  %264 = vset.pattern.permute.xlu0 3
  %265 = vperm.xlu0 %264, %v207
  %v266 = vpop.permute.xlu0 %265
  %v268 = vmul.f32 %v263, %v266
  %269 = vset.pattern.permute.xlu0 7
  %270 = vperm.xlu0 %269, %v192
  %v271 = vpop.permute.xlu0 %270
  %v273 = vadd.f32 %v268, %v271
  %v274 = vxor.u32 %v273, 2147483648
  %v275 = vmul.f32 %v274, 1.442695
  %v276 = vpow.pop %v275
  %v277 = vadd.f32 %v276, 1.0
  %v278 = vrcp.pop %v277
  %v279 = vmul.f32 1.0, %v278
  %v280 = vsub.f32 %v189, 0.5
  %v281 = vmul.f32 %v280, %v213
  %v282 = vadd.f32 %v281, %v219
  %v283 = vtanh.pop %v282
  %v284 = vmul.f32 %v283, %v226
  %v285 = vadd.f32 %v282, %v284
  %v286 = vmul.f32 %v285, %v232
  %v287 = vadd.f32 %v286, %v237
  %v288 = vtanh.pop %v287
  %v289 = vmul.f32 %v288, %v243
  %v290 = vadd.f32 %v287, %v289
  %v291 = vmul.f32 %v290, %v249
  %v292 = vadd.f32 %v291, %v254
  %v293 = vtanh.pop %v292
  %v294 = vmul.f32 %v293, %v260
  %v295 = vadd.f32 %v292, %v294
  %v296 = vmul.f32 %v295, %v266
  %v297 = vadd.f32 %v296, %v271
  %v298 = vxor.u32 %v297, 2147483648
  %v299 = vmul.f32 %v298, 1.442695
  %v300 = vpow.pop %v299
  %v301 = vadd.f32 %v300, 1.0
  %v302 = vrcp.pop %v301
  %v303 = vmul.f32 1.0, %v302
  %v304 = vsub.f32 %v279, %v303
  %305 = vst.msk [vmem:[%s5] sm:$0xff] %vm190, %v304
  // Predicated region
  $region18: #{tsdf_coder_forward.12} parent=0 // pred_check
    _
  $region19: #{tsdf_coder_forward.12} parent=0 // pred_check_branch
    %307 = sbr.rel (0) target = $region21
  $region20: #{tsdf_coder_forward.12} parent=0 // pred_region
    _
  $region21: #{tsdf_coder_forward.12} parent=0 // pred_fallthru
    _
  // Predicated region
  $region22: #{tsdf_coder_forward.12} parent=0 // pred_check
    _
  $region23: #{tsdf_coder_forward.12} parent=0 // pred_check_branch
    %309 = sbr.rel (0) target = $region25
  $region24: #{tsdf_coder_forward.12} parent=0 // pred_region
    _
  $region25: #{tsdf_coder_forward.12} parent=0 // pred_fallthru
    _
  // Predicated region
  $region26: #{tsdf_coder_forward.12} parent=0 // pred_check
    _
  $region27: #{tsdf_coder_forward.12} parent=0 // pred_check_branch
    %311 = sbr.rel (0) target = $region29
  $region28: #{tsdf_coder_forward.12} parent=0 // pred_region
    _
  $region29: #{tsdf_coder_forward.12} parent=0 // pred_fallthru
    _
  // Predicated region
  $region30: #{tsdf_coder_forward.12} parent=0 // pred_check
    _
  $region31: #{tsdf_coder_forward.12} parent=0 // pred_check_branch
    %313 = sbr.rel (0) target = $region33
  $region32: #{tsdf_coder_forward.12} parent=0 // pred_region
    _
  $region33: #{tsdf_coder_forward.12} parent=0 // pred_fallthru
    _

// kernel: tsdf_coder_forward.13
$region0: #{tsdf_coder_forward.13}
  #allocation0 [shape = 'u32[]', space=smem, size = 0x4, offset = 0x4, fixed_abs, tag = 'smem constant byte address 0x4 - core index']
  #allocation1 [shape = 'u32[144,128]{1,0:T(1,128)}', space=vmem, size = 0x12000, scoped, tag = 'internal scratch']
  %s0 = inlined_call_operand.vmem [shape: bf16[64,8], index: 0, kind: input, shape index: {}]
  %s1 = inlined_call_operand.vmem [shape: bf16[8,2], index: 1, kind: input, shape index: {}]
  %s2 = inlined_call_operand.vmem [shape: f32[64,1], index: 2, kind: input, shape index: {}]
  %s3 = inlined_call_operand.vmem [shape: bf16[64,2], index: 3, kind: output, shape index: {}]
  %s4 = sld [smem:[#allocation0]]
  $region22: #{tsdf_coder_forward.13} parent=0
    _
  %s6 = ssub.s32 1, %s4
  %s7 = scalar_select 0, %s6, %s4
  // Predicated region
  $region2: #{tsdf_coder_forward.13} parent=0 // pred_check
    _
  $region3: #{tsdf_coder_forward.13} parent=0 // pred_check_branch
    %9 = sbr.rel (0) target = $region5
  $region4: #{tsdf_coder_forward.13} parent=0 // pred_region
    _
  $region5: #{tsdf_coder_forward.13} parent=0 // pred_fallthru
    _
  // Predicated region
  $region6: #{tsdf_coder_forward.13} parent=0 // pred_check
    _
  $region7: #{tsdf_coder_forward.13} parent=0 // pred_check_branch
    %11 = sbr.rel (0) target = $region9
  $region8: #{tsdf_coder_forward.13} parent=0 // pred_region
    _
  $region9: #{tsdf_coder_forward.13} parent=0 // pred_fallthru
    _
  // Predicated region
  $region10: #{tsdf_coder_forward.13} parent=0 // pred_check
    _
  $region11: #{tsdf_coder_forward.13} parent=0 // pred_check_branch
    %13 = sbr.rel (0) target = $region13
  $region12: #{tsdf_coder_forward.13} parent=0 // pred_region
    _
  $region13: #{tsdf_coder_forward.13} parent=0 // pred_fallthru
    _
  %v15 = vld [vmem:[%s0] sm:$0xf]
  %v16 = vld [vmem:[%s0 + $0x4] sm:$0xf]
  %v17 = vld [vmem:[%s0 + $0x8] sm:$0xf]
  %v18 = vld [vmem:[%s0 + $0xc] sm:$0xf]
  %v19 = vld [vmem:[%s0 + $0x10] sm:$0xf]
  %v20 = vld [vmem:[%s0 + $0x14] sm:$0xf]
  %v21 = vld [vmem:[%s0 + $0x18] sm:$0xf]
  %v22 = vld [vmem:[%s0 + $0x1c] sm:$0xf]
  %v23 = vld [vmem:[%s1] sm:$0xf]
  %v24 = vld [vmem:[%s2] sm:$0xff]
  %v25 = vld [vmem:[%s2 + $0x8] sm:$0xff]
  %v26 = vld [vmem:[%s2 + $0x10] sm:$0xff]
  %v27 = vld [vmem:[%s2 + $0x18] sm:$0xff]
  %v28 = vld [vmem:[%s2 + $0x20] sm:$0xff]
  %v29 = vld [vmem:[%s2 + $0x28] sm:$0xff]
  %v30 = vld [vmem:[%s2 + $0x30] sm:$0xff]
  %v31 = vld [vmem:[%s2 + $0x38] sm:$0xff]
  %33 = vset.pattern.permute.xlu0 0
  %34 = vperm.xlu0 %33, %v24
  %v35 = vpop.permute.xlu0 %34
  %38 = vset.pattern.permute.xlu0 0
  %39 = vperm.xlu0 %38, %v25
  %v40 = vpop.permute.xlu0 %39
  %43 = vset.pattern.permute.xlu0 0
  %44 = vperm.xlu0 %43, %v26
  %v45 = vpop.permute.xlu0 %44
  %48 = vset.pattern.permute.xlu0 0
  %49 = vperm.xlu0 %48, %v27
  %v50 = vpop.permute.xlu0 %49
  %53 = vset.pattern.permute.xlu0 0
  %54 = vperm.xlu0 %53, %v28
  %v55 = vpop.permute.xlu0 %54
  %58 = vset.pattern.permute.xlu0 0
  %59 = vperm.xlu0 %58, %v29
  %v60 = vpop.permute.xlu0 %59
  %63 = vset.pattern.permute.xlu0 0
  %64 = vperm.xlu0 %63, %v30
  %v65 = vpop.permute.xlu0 %64
  %68 = vset.pattern.permute.xlu0 0
  %69 = vperm.xlu0 %68, %v31
  %v70 = vpop.permute.xlu0 %69
  %v80 = vunpack.c.l.b16 %v15
  %v81 = vunpack.c.l.b16 %v16
  %v82 = vunpack.c.l.b16 %v17
  %v83 = vunpack.c.l.b16 %v18
  %v84 = vunpack.c.l.b16 %v19
  %v85 = vunpack.c.l.b16 %v20
  %v86 = vunpack.c.l.b16 %v21
  %v87 = vunpack.c.l.b16 %v22
  %v88 = vpack.c.b16 %v81, %v80
  %v89 = vpack.c.b16 %v83, %v82
  %v90 = vpack.c.b16 %v85, %v84
  %v91 = vpack.c.b16 %v87, %v86
  %vm92 = vcmask 64512
  %v94 = vsel %vm92, %v88, 0
  %v97 = vsel %vm92, %v89, 0
  %v100 = vsel %vm92, %v90, 0
  %v103 = vsel %vm92, %v91, 0
  %vm105 = vcmask 1043456
  %v107 = vsel %vm105, %v23, 0
  %109 = vmatprep.subr.bf16.mxu0 0
  %110 = vmatpush1.bf16.msra.mxu0 0
  %111 = vmatprep.subr.bf16.mxu0 0
  %112 = vmatpush1.bf16.msra.mxu0 0
  %113 = vmatprep.subr.bf16.mxu0 0
  %114 = vmatpush1.bf16.msra.mxu0 0
  %115 = vmatprep.subr.bf16.mxu0 0
  %116 = vmatpush1.bf16.msra.mxu0 0
  %117 = vmatprep.subr.bf16.mxu0 0
  %118 = vmatpush1.bf16.msra.mxu0 0
  %119 = vmatprep.subr.bf16.mxu0 0
  %120 = vmatpush1.bf16.msra.mxu0 0
  %121 = vmatprep.subr.bf16.mxu0 0
  %122 = vmatpush1.bf16.msra.mxu0 0
  %123 = vmatprep.subr.bf16.mxu0 0
  %124 = vmatpush1.bf16.msra.mxu0 %v107
  %125 = vmatprep.subr.bf16.mxu0 0
  %126 = vmatpush2.bf16.msra.mxu0 0
  %127 = vmatprep.subr.bf16.mxu0 0
  %128 = vmatpush2.bf16.msra.mxu0 0
  %129 = vmatprep.subr.bf16.mxu0 0
  %130 = vmatpush2.bf16.msra.mxu0 0
  %131 = vmatprep.subr.bf16.mxu0 0
  %132 = vmatpush2.bf16.msra.mxu0 0
  %133 = vmatprep.subr.bf16.mxu0 0
  %134 = vmatpush2.bf16.msra.mxu0 0
  %135 = vmatprep.subr.bf16.mxu0 0
  %136 = vmatpush2.bf16.msra.mxu0 0
  %137 = vmatprep.subr.bf16.mxu0 0
  %138 = vmatpush2.bf16.msra.mxu0 0
  %139 = vmatprep.subr.bf16.mxu0 0
  %140 = vmatpush2.bf16.msra.mxu0 0
  %141 = vmatprep.mubr.bf16.mxu0 0
  %142 = vmatmul.mubr.bf16.gmra.mxu0 %v94
  %v143 = vpop.f32.mrf.mxu0
  %v144 = vadd.f32 %v35, %v143
  %v145 = vpop.f32.mrf.mxu0
  %v146 = vpop.f32.mrf.mxu0
  %v147 = vadd.f32 %v40, %v146
  %v148 = vpop.f32.mrf.mxu0
  %149 = vmatprep.mubr.bf16.mxu0 0
  %150 = vmatmul.mubr.bf16.gmra.mxu0 %v97
  %v151 = vpop.f32.mrf.mxu0
  %v152 = vadd.f32 %v45, %v151
  %v153 = vpop.f32.mrf.mxu0
  %v154 = vpop.f32.mrf.mxu0
  %v155 = vadd.f32 %v50, %v154
  %v156 = vpop.f32.mrf.mxu0
  %157 = vmatprep.mubr.bf16.mxu0 0
  %158 = vmatmul.mubr.bf16.gmra.mxu0 %v100
  %v159 = vpop.f32.mrf.mxu0
  %v160 = vadd.f32 %v55, %v159
  %v161 = vpop.f32.mrf.mxu0
  %v162 = vpop.f32.mrf.mxu0
  %v163 = vadd.f32 %v60, %v162
  %v164 = vpop.f32.mrf.mxu0
  %165 = vmatprep.mubr.bf16.mxu0 0
  %166 = vmatmul.mubr.bf16.gmra.mxu0 %v103
  %v167 = vpop.f32.mrf.mxu0
  %v168 = vadd.f32 %v65, %v167
  %v169 = vpop.f32.mrf.mxu0
  %v170 = vpop.f32.mrf.mxu0
  %v171 = vadd.f32 %v70, %v170
  %v172 = vpop.f32.mrf.mxu0
  %173 = vdwg.mxu0
  %vm174 = vcmp.gt.f32.partialorder %v144, 0.0
  %vm175 = vcmp.gt.f32.partialorder %v147, 0.0
  %vm176 = vcmp.gt.f32.partialorder %v152, 0.0
  %vm177 = vcmp.gt.f32.partialorder %v155, 0.0
  %vm178 = vcmp.gt.f32.partialorder %v160, 0.0
  %vm179 = vcmp.gt.f32.partialorder %v163, 0.0
  %vm180 = vcmp.gt.f32.partialorder %v168, 0.0
  %vm181 = vcmp.gt.f32.partialorder %v171, 0.0
  %v182 = vmul.f32 %v144, 0.1
  %v183 = vmul.f32 %v147, 0.1
  %v184 = vmul.f32 %v152, 0.1
  %v185 = vmul.f32 %v155, 0.1
  %v186 = vmul.f32 %v160, 0.1
  %v187 = vmul.f32 %v163, 0.1
  %v188 = vmul.f32 %v168, 0.1
  %v189 = vmul.f32 %v171, 0.1
  %v190 = vsel %vm174, %v144, %v182
  %v191 = vsel %vm175, %v147, %v183
  %v192 = vsel %vm176, %v152, %v184
  %v193 = vsel %vm177, %v155, %v185
  %v194 = vsel %vm178, %v160, %v186
  %v195 = vsel %vm179, %v163, %v187
  %v196 = vsel %vm180, %v168, %v188
  %v197 = vsel %vm181, %v171, %v189
  %v198 = vpack.c.bf16 %v191, %v190
  %v199 = vpack.c.bf16 %v193, %v192
  %v200 = vpack.c.bf16 %v195, %v194
  %v201 = vpack.c.bf16 %v197, %v196
  %v206 = vunpack.c.l.b16 %v198
  %v207 = vunpack.c.h.b16 %v198
  %v208 = vunpack.c.l.b16 %v199
  %v209 = vunpack.c.h.b16 %v199
  %v210 = vunpack.c.l.b16 %v200
  %v211 = vunpack.c.h.b16 %v200
  %v212 = vunpack.c.l.b16 %v201
  %v213 = vunpack.c.h.b16 %v201
  %v214 = vpack.c.b16 %v206, %v206
  %v215 = vpack.c.b16 %v207, %v207
  %v216 = vpack.c.b16 %v208, %v208
  %v217 = vpack.c.b16 %v209, %v209
  %v218 = vpack.c.b16 %v210, %v210
  %v219 = vpack.c.b16 %v211, %v211
  %v220 = vpack.c.b16 %v212, %v212
  %v221 = vpack.c.b16 %v213, %v213
  %vm230 = vcmask 11264
  %231 = vst.msk [vmem:[%s3] sm:$0xf] %vm230, %v214
  %232 = vst.msk [vmem:[%s3 + $0x4] sm:$0xf] %vm230, %v215
  %233 = vst.msk [vmem:[%s3 + $0x8] sm:$0xf] %vm230, %v216
  %234 = vst.msk [vmem:[%s3 + $0xc] sm:$0xf] %vm230, %v217
  %235 = vst.msk [vmem:[%s3 + $0x10] sm:$0xf] %vm230, %v218
  %236 = vst.msk [vmem:[%s3 + $0x14] sm:$0xf] %vm230, %v219
  %237 = vst.msk [vmem:[%s3 + $0x18] sm:$0xf] %vm230, %v220
  %238 = vst.msk [vmem:[%s3 + $0x1c] sm:$0xf] %vm230, %v221
  // Predicated region
  $region14: #{tsdf_coder_forward.13} parent=0 // pred_check
    _
  $region15: #{tsdf_coder_forward.13} parent=0 // pred_check_branch
    %240 = sbr.rel (0) target = $region17
  $region16: #{tsdf_coder_forward.13} parent=0 // pred_region
    _
  $region17: #{tsdf_coder_forward.13} parent=0 // pred_fallthru
    _
  // Predicated region
  $region18: #{tsdf_coder_forward.13} parent=0 // pred_check
    _
  $region19: #{tsdf_coder_forward.13} parent=0 // pred_check_branch
    %242 = sbr.rel (0) target = $region21
  $region20: #{tsdf_coder_forward.13} parent=0 // pred_region
    _
  $region21: #{tsdf_coder_forward.13} parent=0 // pred_fallthru
    _

// kernel: tsdf_coder_forward.14
$region0: #{tsdf_coder_forward.14}
  #allocation0 [shape = 'u32[]', space=smem, size = 0x4, offset = 0x4, fixed_abs, tag = 'smem constant byte address 0x4 - core index']
  #allocation1 [shape = 'u32[144,128]{1,0:T(1,128)}', space=vmem, size = 0x12000, scoped, tag = 'internal scratch']
  %s0 = inlined_call_operand.vmem [shape: bf16[64,8], index: 0, kind: input, shape index: {}]
  %s1 = inlined_call_operand.vmem [shape: bf16[8,16], index: 1, kind: input, shape index: {}]
  %s2 = inlined_call_operand.vmem [shape: f32[64,1], index: 2, kind: input, shape index: {}]
  %s3 = inlined_call_operand.vmem [shape: bf16[64,16], index: 3, kind: output, shape index: {}]
  %s4 = sld [smem:[#allocation0]]
  $region22: #{tsdf_coder_forward.14} parent=0
    _
  %s6 = ssub.s32 1, %s4
  %s7 = scalar_select 0, %s6, %s4
  // Predicated region
  $region2: #{tsdf_coder_forward.14} parent=0 // pred_check
    _
  $region3: #{tsdf_coder_forward.14} parent=0 // pred_check_branch
    %9 = sbr.rel (0) target = $region5
  $region4: #{tsdf_coder_forward.14} parent=0 // pred_region
    _
  $region5: #{tsdf_coder_forward.14} parent=0 // pred_fallthru
    _
  // Predicated region
  $region6: #{tsdf_coder_forward.14} parent=0 // pred_check
    _
  $region7: #{tsdf_coder_forward.14} parent=0 // pred_check_branch
    %11 = sbr.rel (0) target = $region9
  $region8: #{tsdf_coder_forward.14} parent=0 // pred_region
    _
  $region9: #{tsdf_coder_forward.14} parent=0 // pred_fallthru
    _
  // Predicated region
  $region10: #{tsdf_coder_forward.14} parent=0 // pred_check
    _
  $region11: #{tsdf_coder_forward.14} parent=0 // pred_check_branch
    %13 = sbr.rel (0) target = $region13
  $region12: #{tsdf_coder_forward.14} parent=0 // pred_region
    _
  $region13: #{tsdf_coder_forward.14} parent=0 // pred_fallthru
    _
  %v15 = vld [vmem:[%s0] sm:$0xf]
  %v16 = vld [vmem:[%s0 + $0x4] sm:$0xf]
  %v17 = vld [vmem:[%s0 + $0x8] sm:$0xf]
  %v18 = vld [vmem:[%s0 + $0xc] sm:$0xf]
  %v19 = vld [vmem:[%s0 + $0x10] sm:$0xf]
  %v20 = vld [vmem:[%s0 + $0x14] sm:$0xf]
  %v21 = vld [vmem:[%s0 + $0x18] sm:$0xf]
  %v22 = vld [vmem:[%s0 + $0x1c] sm:$0xf]
  %v23 = vld [vmem:[%s1] sm:$0xf]
  %v24 = vld [vmem:[%s2] sm:$0xff]
  %v25 = vld [vmem:[%s2 + $0x8] sm:$0xff]
  %v26 = vld [vmem:[%s2 + $0x10] sm:$0xff]
  %v27 = vld [vmem:[%s2 + $0x18] sm:$0xff]
  %v28 = vld [vmem:[%s2 + $0x20] sm:$0xff]
  %v29 = vld [vmem:[%s2 + $0x28] sm:$0xff]
  %v30 = vld [vmem:[%s2 + $0x30] sm:$0xff]
  %v31 = vld [vmem:[%s2 + $0x38] sm:$0xff]
  %33 = vset.pattern.permute.xlu0 0
  %34 = vperm.xlu0 %33, %v24
  %v35 = vpop.permute.xlu0 %34
  %38 = vset.pattern.permute.xlu0 0
  %39 = vperm.xlu0 %38, %v25
  %v40 = vpop.permute.xlu0 %39
  %43 = vset.pattern.permute.xlu0 0
  %44 = vperm.xlu0 %43, %v26
  %v45 = vpop.permute.xlu0 %44
  %48 = vset.pattern.permute.xlu0 0
  %49 = vperm.xlu0 %48, %v27
  %v50 = vpop.permute.xlu0 %49
  %53 = vset.pattern.permute.xlu0 0
  %54 = vperm.xlu0 %53, %v28
  %v55 = vpop.permute.xlu0 %54
  %58 = vset.pattern.permute.xlu0 0
  %59 = vperm.xlu0 %58, %v29
  %v60 = vpop.permute.xlu0 %59
  %63 = vset.pattern.permute.xlu0 0
  %64 = vperm.xlu0 %63, %v30
  %v65 = vpop.permute.xlu0 %64
  %68 = vset.pattern.permute.xlu0 0
  %69 = vperm.xlu0 %68, %v31
  %v70 = vpop.permute.xlu0 %69
  %v80 = vunpack.c.l.b16 %v15
  %v81 = vunpack.c.l.b16 %v16
  %v82 = vunpack.c.l.b16 %v17
  %v83 = vunpack.c.l.b16 %v18
  %v84 = vunpack.c.l.b16 %v19
  %v85 = vunpack.c.l.b16 %v20
  %v86 = vunpack.c.l.b16 %v21
  %v87 = vunpack.c.l.b16 %v22
  %v88 = vpack.c.b16 %v81, %v80
  %v89 = vpack.c.b16 %v83, %v82
  %v90 = vpack.c.b16 %v85, %v84
  %v91 = vpack.c.b16 %v87, %v86
  %vm92 = vcmask 64512
  %v94 = vsel %vm92, %v88, 0
  %v97 = vsel %vm92, %v89, 0
  %v100 = vsel %vm92, %v90, 0
  %v103 = vsel %vm92, %v91, 0
  %vm105 = vcmask 1043456
  %v107 = vsel %vm105, %v23, 0
  %109 = vmatprep.subr.bf16.mxu0 0
  %110 = vmatpush1.bf16.msra.mxu0 0
  %111 = vmatprep.subr.bf16.mxu0 0
  %112 = vmatpush1.bf16.msra.mxu0 0
  %113 = vmatprep.subr.bf16.mxu0 0
  %114 = vmatpush1.bf16.msra.mxu0 0
  %115 = vmatprep.subr.bf16.mxu0 0
  %116 = vmatpush1.bf16.msra.mxu0 0
  %117 = vmatprep.subr.bf16.mxu0 0
  %118 = vmatpush1.bf16.msra.mxu0 0
  %119 = vmatprep.subr.bf16.mxu0 0
  %120 = vmatpush1.bf16.msra.mxu0 0
  %121 = vmatprep.subr.bf16.mxu0 0
  %122 = vmatpush1.bf16.msra.mxu0 0
  %123 = vmatprep.subr.bf16.mxu0 0
  %124 = vmatpush1.bf16.msra.mxu0 %v107
  %125 = vmatprep.subr.bf16.mxu0 0
  %126 = vmatpush2.bf16.msra.mxu0 0
  %127 = vmatprep.subr.bf16.mxu0 0
  %128 = vmatpush2.bf16.msra.mxu0 0
  %129 = vmatprep.subr.bf16.mxu0 0
  %130 = vmatpush2.bf16.msra.mxu0 0
  %131 = vmatprep.subr.bf16.mxu0 0
  %132 = vmatpush2.bf16.msra.mxu0 0
  %133 = vmatprep.subr.bf16.mxu0 0
  %134 = vmatpush2.bf16.msra.mxu0 0
  %135 = vmatprep.subr.bf16.mxu0 0
  %136 = vmatpush2.bf16.msra.mxu0 0
  %137 = vmatprep.subr.bf16.mxu0 0
  %138 = vmatpush2.bf16.msra.mxu0 0
  %139 = vmatprep.subr.bf16.mxu0 0
  %140 = vmatpush2.bf16.msra.mxu0 0
  %141 = vmatprep.mubr.bf16.mxu0 0
  %142 = vmatmul.mubr.bf16.gmra.mxu0 %v94
  %v143 = vpop.f32.mrf.mxu0
  %v144 = vadd.f32 %v35, %v143
  %v145 = vpop.f32.mrf.mxu0
  %v146 = vpop.f32.mrf.mxu0
  %v147 = vadd.f32 %v40, %v146
  %v148 = vpop.f32.mrf.mxu0
  %149 = vmatprep.mubr.bf16.mxu0 0
  %150 = vmatmul.mubr.bf16.gmra.mxu0 %v97
  %v151 = vpop.f32.mrf.mxu0
  %v152 = vadd.f32 %v45, %v151
  %v153 = vpop.f32.mrf.mxu0
  %v154 = vpop.f32.mrf.mxu0
  %v155 = vadd.f32 %v50, %v154
  %v156 = vpop.f32.mrf.mxu0
  %157 = vmatprep.mubr.bf16.mxu0 0
  %158 = vmatmul.mubr.bf16.gmra.mxu0 %v100
  %v159 = vpop.f32.mrf.mxu0
  %v160 = vadd.f32 %v55, %v159
  %v161 = vpop.f32.mrf.mxu0
  %v162 = vpop.f32.mrf.mxu0
  %v163 = vadd.f32 %v60, %v162
  %v164 = vpop.f32.mrf.mxu0
  %165 = vmatprep.mubr.bf16.mxu0 0
  %166 = vmatmul.mubr.bf16.gmra.mxu0 %v103
  %v167 = vpop.f32.mrf.mxu0
  %v168 = vadd.f32 %v65, %v167
  %v169 = vpop.f32.mrf.mxu0
  %v170 = vpop.f32.mrf.mxu0
  %v171 = vadd.f32 %v70, %v170
  %v172 = vpop.f32.mrf.mxu0
  %173 = vdwg.mxu0
  %vm174 = vcmp.gt.f32.partialorder %v144, 0.0
  %vm175 = vcmp.gt.f32.partialorder %v147, 0.0
  %vm176 = vcmp.gt.f32.partialorder %v152, 0.0
  %vm177 = vcmp.gt.f32.partialorder %v155, 0.0
  %vm178 = vcmp.gt.f32.partialorder %v160, 0.0
  %vm179 = vcmp.gt.f32.partialorder %v163, 0.0
  %vm180 = vcmp.gt.f32.partialorder %v168, 0.0
  %vm181 = vcmp.gt.f32.partialorder %v171, 0.0
  %v182 = vmul.f32 %v144, 0.1
  %v183 = vmul.f32 %v147, 0.1
  %v184 = vmul.f32 %v152, 0.1
  %v185 = vmul.f32 %v155, 0.1
  %v186 = vmul.f32 %v160, 0.1
  %v187 = vmul.f32 %v163, 0.1
  %v188 = vmul.f32 %v168, 0.1
  %v189 = vmul.f32 %v171, 0.1
  %v190 = vsel %vm174, %v144, %v182
  %v191 = vsel %vm175, %v147, %v183
  %v192 = vsel %vm176, %v152, %v184
  %v193 = vsel %vm177, %v155, %v185
  %v194 = vsel %vm178, %v160, %v186
  %v195 = vsel %vm179, %v163, %v187
  %v196 = vsel %vm180, %v168, %v188
  %v197 = vsel %vm181, %v171, %v189
  %v198 = vpack.c.bf16 %v191, %v190
  %v199 = vpack.c.bf16 %v193, %v192
  %v200 = vpack.c.bf16 %v195, %v194
  %v201 = vpack.c.bf16 %v197, %v196
  %v206 = vunpack.c.l.b16 %v198
  %v207 = vunpack.c.h.b16 %v198
  %v208 = vunpack.c.l.b16 %v199
  %v209 = vunpack.c.h.b16 %v199
  %v210 = vunpack.c.l.b16 %v200
  %v211 = vunpack.c.h.b16 %v200
  %v212 = vunpack.c.l.b16 %v201
  %v213 = vunpack.c.h.b16 %v201
  %v214 = vpack.c.b16 %v206, %v206
  %v215 = vpack.c.b16 %v207, %v207
  %v216 = vpack.c.b16 %v208, %v208
  %v217 = vpack.c.b16 %v209, %v209
  %v218 = vpack.c.b16 %v210, %v210
  %v219 = vpack.c.b16 %v211, %v211
  %v220 = vpack.c.b16 %v212, %v212
  %v221 = vpack.c.b16 %v213, %v213
  %vm230 = vcmask 125952
  %231 = vst.msk [vmem:[%s3] sm:$0xf] %vm230, %v214
  %232 = vst.msk [vmem:[%s3 + $0x4] sm:$0xf] %vm230, %v215
  %233 = vst.msk [vmem:[%s3 + $0x8] sm:$0xf] %vm230, %v216
  %234 = vst.msk [vmem:[%s3 + $0xc] sm:$0xf] %vm230, %v217
  %235 = vst.msk [vmem:[%s3 + $0x10] sm:$0xf] %vm230, %v218
  %236 = vst.msk [vmem:[%s3 + $0x14] sm:$0xf] %vm230, %v219
  %237 = vst.msk [vmem:[%s3 + $0x18] sm:$0xf] %vm230, %v220
  %238 = vst.msk [vmem:[%s3 + $0x1c] sm:$0xf] %vm230, %v221
  // Predicated region
  $region14: #{tsdf_coder_forward.14} parent=0 // pred_check
    _
  $region15: #{tsdf_coder_forward.14} parent=0 // pred_check_branch
    %240 = sbr.rel (0) target = $region17
  $region16: #{tsdf_coder_forward.14} parent=0 // pred_region
    _
  $region17: #{tsdf_coder_forward.14} parent=0 // pred_fallthru
    _
  // Predicated region
  $region18: #{tsdf_coder_forward.14} parent=0 // pred_check
    _
  $region19: #{tsdf_coder_forward.14} parent=0 // pred_check_branch
    %242 = sbr.rel (0) target = $region21
  $region20: #{tsdf_coder_forward.14} parent=0 // pred_region
    _
  $region21: #{tsdf_coder_forward.14} parent=0 // pred_fallthru
    _

// kernel: tsdf_coder_forward.15
$region0: #{tsdf_coder_forward.15}
  #allocation0 [shape = 'u32[]', space=smem, size = 0x4, offset = 0x4, fixed_abs, tag = 'smem constant byte address 0x4 - core index']
  #allocation1 [shape = 'u32[144,128]{1,0:T(1,128)}', space=vmem, size = 0x12000, scoped, tag = 'internal scratch']
  %s0 = inlined_call_operand.vmem [shape: bf16[64,8], index: 0, kind: input, shape index: {}]
  %s1 = inlined_call_operand.vmem [shape: bf16[8,128], index: 1, kind: input, shape index: {}]
  %s2 = inlined_call_operand.vmem [shape: f32[64,1], index: 2, kind: input, shape index: {}]
  %s3 = inlined_call_operand.vmem [shape: bf16[64,128], index: 3, kind: output, shape index: {}]
  %s4 = sld [smem:[#allocation0]]
  $region22: #{tsdf_coder_forward.15} parent=0
    _
  %s6 = ssub.s32 1, %s4
  %s7 = scalar_select 0, %s6, %s4
  // Predicated region
  $region2: #{tsdf_coder_forward.15} parent=0 // pred_check
    _
  $region3: #{tsdf_coder_forward.15} parent=0 // pred_check_branch
    %9 = sbr.rel (0) target = $region5
  $region4: #{tsdf_coder_forward.15} parent=0 // pred_region
    _
  $region5: #{tsdf_coder_forward.15} parent=0 // pred_fallthru
    _
  // Predicated region
  $region6: #{tsdf_coder_forward.15} parent=0 // pred_check
    _
  $region7: #{tsdf_coder_forward.15} parent=0 // pred_check_branch
    %11 = sbr.rel (0) target = $region9
  $region8: #{tsdf_coder_forward.15} parent=0 // pred_region
    _
  $region9: #{tsdf_coder_forward.15} parent=0 // pred_fallthru
    _
  // Predicated region
  $region10: #{tsdf_coder_forward.15} parent=0 // pred_check
    _
  $region11: #{tsdf_coder_forward.15} parent=0 // pred_check_branch
    %13 = sbr.rel (0) target = $region13
  $region12: #{tsdf_coder_forward.15} parent=0 // pred_region
    _
  $region13: #{tsdf_coder_forward.15} parent=0 // pred_fallthru
    _
  %v15 = vld [vmem:[%s0] sm:$0xf]
  %v16 = vld [vmem:[%s0 + $0x4] sm:$0xf]
  %v17 = vld [vmem:[%s0 + $0x8] sm:$0xf]
  %v18 = vld [vmem:[%s0 + $0xc] sm:$0xf]
  %v19 = vld [vmem:[%s0 + $0x10] sm:$0xf]
  %v20 = vld [vmem:[%s0 + $0x14] sm:$0xf]
  %v21 = vld [vmem:[%s0 + $0x18] sm:$0xf]
  %v22 = vld [vmem:[%s0 + $0x1c] sm:$0xf]
  %v23 = vld [vmem:[%s1] sm:$0xf]
  %v24 = vld [vmem:[%s2] sm:$0xff]
  %v25 = vld [vmem:[%s2 + $0x8] sm:$0xff]
  %v26 = vld [vmem:[%s2 + $0x10] sm:$0xff]
  %v27 = vld [vmem:[%s2 + $0x18] sm:$0xff]
  %v28 = vld [vmem:[%s2 + $0x20] sm:$0xff]
  %v29 = vld [vmem:[%s2 + $0x28] sm:$0xff]
  %v30 = vld [vmem:[%s2 + $0x30] sm:$0xff]
  %v31 = vld [vmem:[%s2 + $0x38] sm:$0xff]
  %33 = vset.pattern.permute.xlu0 0
  %34 = vperm.xlu0 %33, %v24
  %v35 = vpop.permute.xlu0 %34
  %38 = vset.pattern.permute.xlu0 0
  %39 = vperm.xlu0 %38, %v25
  %v40 = vpop.permute.xlu0 %39
  %43 = vset.pattern.permute.xlu0 0
  %44 = vperm.xlu0 %43, %v26
  %v45 = vpop.permute.xlu0 %44
  %48 = vset.pattern.permute.xlu0 0
  %49 = vperm.xlu0 %48, %v27
  %v50 = vpop.permute.xlu0 %49
  %53 = vset.pattern.permute.xlu0 0
  %54 = vperm.xlu0 %53, %v28
  %v55 = vpop.permute.xlu0 %54
  %58 = vset.pattern.permute.xlu0 0
  %59 = vperm.xlu0 %58, %v29
  %v60 = vpop.permute.xlu0 %59
  %63 = vset.pattern.permute.xlu0 0
  %64 = vperm.xlu0 %63, %v30
  %v65 = vpop.permute.xlu0 %64
  %68 = vset.pattern.permute.xlu0 0
  %69 = vperm.xlu0 %68, %v31
  %v70 = vpop.permute.xlu0 %69
  %v80 = vunpack.c.l.b16 %v15
  %v81 = vunpack.c.l.b16 %v16
  %v82 = vunpack.c.l.b16 %v17
  %v83 = vunpack.c.l.b16 %v18
  %v84 = vunpack.c.l.b16 %v19
  %v85 = vunpack.c.l.b16 %v20
  %v86 = vunpack.c.l.b16 %v21
  %v87 = vunpack.c.l.b16 %v22
  %v88 = vpack.c.b16 %v81, %v80
  %v89 = vpack.c.b16 %v83, %v82
  %v90 = vpack.c.b16 %v85, %v84
  %v91 = vpack.c.b16 %v87, %v86
  %vm92 = vcmask 64512
  %v94 = vsel %vm92, %v88, 0
  %v97 = vsel %vm92, %v89, 0
  %v100 = vsel %vm92, %v90, 0
  %v103 = vsel %vm92, %v91, 0
  %vm105 = vcmask 1043456
  %v107 = vsel %vm105, %v23, 0
  %109 = vmatprep.subr.bf16.mxu0 0
  %110 = vmatpush1.bf16.msra.mxu0 0
  %111 = vmatprep.subr.bf16.mxu0 0
  %112 = vmatpush1.bf16.msra.mxu0 0
  %113 = vmatprep.subr.bf16.mxu0 0
  %114 = vmatpush1.bf16.msra.mxu0 0
  %115 = vmatprep.subr.bf16.mxu0 0
  %116 = vmatpush1.bf16.msra.mxu0 0
  %117 = vmatprep.subr.bf16.mxu0 0
  %118 = vmatpush1.bf16.msra.mxu0 0
  %119 = vmatprep.subr.bf16.mxu0 0
  %120 = vmatpush1.bf16.msra.mxu0 0
  %121 = vmatprep.subr.bf16.mxu0 0
  %122 = vmatpush1.bf16.msra.mxu0 0
  %123 = vmatprep.subr.bf16.mxu0 0
  %124 = vmatpush1.bf16.msra.mxu0 %v107
  %125 = vmatprep.subr.bf16.mxu0 0
  %126 = vmatpush2.bf16.msra.mxu0 0
  %127 = vmatprep.subr.bf16.mxu0 0
  %128 = vmatpush2.bf16.msra.mxu0 0
  %129 = vmatprep.subr.bf16.mxu0 0
  %130 = vmatpush2.bf16.msra.mxu0 0
  %131 = vmatprep.subr.bf16.mxu0 0
  %132 = vmatpush2.bf16.msra.mxu0 0
  %133 = vmatprep.subr.bf16.mxu0 0
  %134 = vmatpush2.bf16.msra.mxu0 0
  %135 = vmatprep.subr.bf16.mxu0 0
  %136 = vmatpush2.bf16.msra.mxu0 0
  %137 = vmatprep.subr.bf16.mxu0 0
  %138 = vmatpush2.bf16.msra.mxu0 0
  %139 = vmatprep.subr.bf16.mxu0 0
  %140 = vmatpush2.bf16.msra.mxu0 0
  %141 = vmatprep.mubr.bf16.mxu0 0
  %142 = vmatmul.mubr.bf16.gmra.mxu0 %v94
  %v143 = vpop.f32.mrf.mxu0
  %v144 = vadd.f32 %v35, %v143
  %v145 = vpop.f32.mrf.mxu0
  %v146 = vpop.f32.mrf.mxu0
  %v147 = vadd.f32 %v40, %v146
  %v148 = vpop.f32.mrf.mxu0
  %149 = vmatprep.mubr.bf16.mxu0 0
  %150 = vmatmul.mubr.bf16.gmra.mxu0 %v97
  %v151 = vpop.f32.mrf.mxu0
  %v152 = vadd.f32 %v45, %v151
  %v153 = vpop.f32.mrf.mxu0
  %v154 = vpop.f32.mrf.mxu0
  %v155 = vadd.f32 %v50, %v154
  %v156 = vpop.f32.mrf.mxu0
  %157 = vmatprep.mubr.bf16.mxu0 0
  %158 = vmatmul.mubr.bf16.gmra.mxu0 %v100
  %v159 = vpop.f32.mrf.mxu0
  %v160 = vadd.f32 %v55, %v159
  %v161 = vpop.f32.mrf.mxu0
  %v162 = vpop.f32.mrf.mxu0
  %v163 = vadd.f32 %v60, %v162
  %v164 = vpop.f32.mrf.mxu0
  %165 = vmatprep.mubr.bf16.mxu0 0
  %166 = vmatmul.mubr.bf16.gmra.mxu0 %v103
  %v167 = vpop.f32.mrf.mxu0
  %v168 = vadd.f32 %v65, %v167
  %v169 = vpop.f32.mrf.mxu0
  %v170 = vpop.f32.mrf.mxu0
  %v171 = vadd.f32 %v70, %v170
  %v172 = vpop.f32.mrf.mxu0
  %173 = vdwg.mxu0
  %vm174 = vcmp.gt.f32.partialorder %v144, 0.0
  %vm175 = vcmp.gt.f32.partialorder %v147, 0.0
  %vm176 = vcmp.gt.f32.partialorder %v152, 0.0
  %vm177 = vcmp.gt.f32.partialorder %v155, 0.0
  %vm178 = vcmp.gt.f32.partialorder %v160, 0.0
  %vm179 = vcmp.gt.f32.partialorder %v163, 0.0
  %vm180 = vcmp.gt.f32.partialorder %v168, 0.0
  %vm181 = vcmp.gt.f32.partialorder %v171, 0.0
  %v182 = vmul.f32 %v144, 0.1
  %v183 = vmul.f32 %v147, 0.1
  %v184 = vmul.f32 %v152, 0.1
  %v185 = vmul.f32 %v155, 0.1
  %v186 = vmul.f32 %v160, 0.1
  %v187 = vmul.f32 %v163, 0.1
  %v188 = vmul.f32 %v168, 0.1
  %v189 = vmul.f32 %v171, 0.1
  %v190 = vsel %vm174, %v144, %v182
  %v191 = vsel %vm175, %v147, %v183
  %v192 = vsel %vm176, %v152, %v184
  %v193 = vsel %vm177, %v155, %v185
  %v194 = vsel %vm178, %v160, %v186
  %v195 = vsel %vm179, %v163, %v187
  %v196 = vsel %vm180, %v168, %v188
  %v197 = vsel %vm181, %v171, %v189
  %v198 = vpack.c.bf16 %v191, %v190
  %v199 = vpack.c.bf16 %v193, %v192
  %v200 = vpack.c.bf16 %v195, %v194
  %v201 = vpack.c.bf16 %v197, %v196
  %v206 = vunpack.c.l.b16 %v198
  %v207 = vunpack.c.h.b16 %v198
  %v208 = vunpack.c.l.b16 %v199
  %v209 = vunpack.c.h.b16 %v199
  %v210 = vunpack.c.l.b16 %v200
  %v211 = vunpack.c.h.b16 %v200
  %v212 = vunpack.c.l.b16 %v201
  %v213 = vunpack.c.h.b16 %v201
  %v214 = vpack.c.b16 %v206, %v206
  %v215 = vpack.c.b16 %v207, %v207
  %v216 = vpack.c.b16 %v208, %v208
  %v217 = vpack.c.b16 %v209, %v209
  %v218 = vpack.c.b16 %v210, %v210
  %v219 = vpack.c.b16 %v211, %v211
  %v220 = vpack.c.b16 %v212, %v212
  %v221 = vpack.c.b16 %v213, %v213
  %230 = vst [vmem:[%s3] sm:$0xf] %v214
  %231 = vst [vmem:[%s3 + $0x4] sm:$0xf] %v215
  %232 = vst [vmem:[%s3 + $0x8] sm:$0xf] %v216
  %233 = vst [vmem:[%s3 + $0xc] sm:$0xf] %v217
  %234 = vst [vmem:[%s3 + $0x10] sm:$0xf] %v218
  %235 = vst [vmem:[%s3 + $0x14] sm:$0xf] %v219
  %236 = vst [vmem:[%s3 + $0x18] sm:$0xf] %v220
  %237 = vst [vmem:[%s3 + $0x1c] sm:$0xf] %v221
  // Predicated region
  $region14: #{tsdf_coder_forward.15} parent=0 // pred_check
    _
  $region15: #{tsdf_coder_forward.15} parent=0 // pred_check_branch
    %239 = sbr.rel (0) target = $region17
  $region16: #{tsdf_coder_forward.15} parent=0 // pred_region
    _
  $region17: #{tsdf_coder_forward.15} parent=0 // pred_fallthru
    _
  // Predicated region
  $region18: #{tsdf_coder_forward.15} parent=0 // pred_check
    _
  $region19: #{tsdf_coder_forward.15} parent=0 // pred_check_branch
    %241 = sbr.rel (0) target = $region21
  $region20: #{tsdf_coder_forward.15} parent=0 // pred_region
    _
  $region21: #{tsdf_coder_forward.15} parent=0 // pred_fallthru
    _

// kernel: tsdf_coder_forward.16
$region0: #{tsdf_coder_forward.16}
  #allocation0 [shape = 'u32[]', space=smem, size = 0x4, offset = 0x4, fixed_abs, tag = 'smem constant byte address 0x4 - core index']
  #allocation1 [shape = 'u32[144,128]{1,0:T(1,128)}', space=vmem, size = 0x12000, scoped, tag = 'internal scratch']
  %s0 = inlined_call_operand.vmem [shape: bf16[64,8], index: 0, kind: input, shape index: {}]
  %s1 = inlined_call_operand.vmem [shape: bf16[8,1024], index: 1, kind: input, shape index: {}]
  %s2 = inlined_call_operand.vmem [shape: f32[64,1], index: 2, kind: input, shape index: {}]
  %s3 = inlined_call_operand.vmem [shape: bf16[64,1024], index: 3, kind: output, shape index: {}]
  %s4 = sld [smem:[#allocation0]]
  $region64: #{tsdf_coder_forward.16} parent=0
    _
  %s6 = ssub.s32 1, %s4
  %s7 = scalar_select 0, %s6, %s4
  $region1: #{tsdf_coder_forward.16} parent=0
    #allocation2 [shape = 'u8[131072]{0}', space=vmem, size = 0x20000, scoped, tag = 'output window, operand 0']
    loop: start=0, step=1, limit=4
    $region2: #{tsdf_coder_forward.16} parent=1 // loop_pre_header
      _
    $region3: #{tsdf_coder_forward.16} parent=1 // loop_header
      %s9 = sphi 0, %s13
      %p10 = scmp.ge.s32.totalorder %s9, 4
      %s17 = sphi 0, %s17
      %s19 = sphi 0, %s17
      %s20 = sphi 0, %s19
      %s34 = sphi 0, %s20
      %s40 = sphi 0, %s42
      %s43 = sphi 0, %s40
      %s44 = sphi 0, %s43
      %s60 = sphi 0, %s44
      %s64 = sphi 0, %s64
      %s66 = sphi 0, %s64
      %s67 = sphi 0, %s66
      %s81 = sphi 0, %s67
      %s87 = sphi 0, %s89
      %s90 = sphi 0, %s87
      %s91 = sphi 0, %s90
      %s107 = sphi 0, %s91
    $region4: #{tsdf_coder_forward.16} parent=1 // loop_header_branch
      %12 = sbr.rel (%p10) target = $region8
    $region5: #{tsdf_coder_forward.16} parent=1 // loop_body
      %s14 = ssub.s32 %s9, 1
      %s15 = ssub.s32 %s9, 2
      %s16 = sadd.s32 %s9, 1
      %s18 = sadd.s32 %s17, 1
      %p21 = scmp.eq.s32.totalorder %s9, 1
      %p22 = scmp.ne.s32.totalorder %s17, %s19
      %p23 = scmp.eq.s32.totalorder %s9, 0
      %p24 = por %p22, %p23
      %p25 = scmp.ne.s32.totalorder %s17, %s19
      %p26 = scmp.eq.s32.totalorder %s14, 1
      %p27 = por %p25, %p26
      %p28 = scmp.ne.s32.totalorder %s19, %s20
      %p29 = scmp.eq.s32.totalorder %s14, 0
      %p30 = por %p28, %p29
      %p31 = scmp.ne.s32.totalorder %s19, %s20
      %p32 = scmp.eq.s32.totalorder %s15, 1
      %p33 = por %p31, %p32
      %p35 = scmp.ne.s32.totalorder %s20, %s34
      %p36 = scmp.eq.s32.totalorder %s15, 0
      %p37 = por %p35, %p36
      %s38 = ssub.s32 %s9, %s16
      %p39 = scmp.eq.s32.totalorder %s38, 0
      %s41 = sadd.s32 %s40, 1
      %s42 = scalar_select %p39, %s40, %s41
      %p45 = pneg %p39
      %p46 = scmp.eq.s32.totalorder %s9, 1
      %p47 = por %p45, %p46
      %p48 = scmp.ne.s32.totalorder %s40, %s43
      %p49 = scmp.eq.s32.totalorder %s9, 0
      %p50 = por %p48, %p49
      %p51 = scmp.ne.s32.totalorder %s40, %s43
      %p52 = scmp.eq.s32.totalorder %s14, 1
      %p53 = por %p51, %p52
      %p54 = scmp.ne.s32.totalorder %s43, %s44
      %p55 = scmp.eq.s32.totalorder %s14, 0
      %p56 = por %p54, %p55
      %p57 = scmp.ne.s32.totalorder %s43, %s44
      %p58 = scmp.eq.s32.totalorder %s15, 1
      %p59 = por %p57, %p58
      %p61 = scmp.ne.s32.totalorder %s44, %s60
      %p62 = scmp.eq.s32.totalorder %s15, 0
      %p63 = por %p61, %p62
      %s65 = sadd.s32 %s64, 1
      %p68 = scmp.eq.s32.totalorder %s9, 1
      %p69 = scmp.ne.s32.totalorder %s64, %s66
      %p70 = scmp.eq.s32.totalorder %s9, 0
      %p71 = por %p69, %p70
      %p72 = scmp.ne.s32.totalorder %s64, %s66
      %p73 = scmp.eq.s32.totalorder %s14, 1
      %p74 = por %p72, %p73
      %p75 = scmp.ne.s32.totalorder %s66, %s67
      %p76 = scmp.eq.s32.totalorder %s14, 0
      %p77 = por %p75, %p76
      %p78 = scmp.ne.s32.totalorder %s66, %s67
      %p79 = scmp.eq.s32.totalorder %s15, 1
      %p80 = por %p78, %p79
      %p82 = scmp.ne.s32.totalorder %s67, %s81
      %p83 = scmp.eq.s32.totalorder %s15, 0
      %p84 = por %p82, %p83
      %s85 = ssub.s32 %s9, %s16
      %p86 = scmp.eq.s32.totalorder %s85, 0
      %s88 = sadd.s32 %s87, 1
      %s89 = scalar_select %p86, %s87, %s88
      %p92 = pneg %p86
      %p93 = scmp.eq.s32.totalorder %s9, 1
      %p94 = por %p92, %p93
      %p95 = scmp.ne.s32.totalorder %s87, %s90
      %p96 = scmp.eq.s32.totalorder %s9, 0
      %p97 = por %p95, %p96
      %p98 = scmp.ne.s32.totalorder %s87, %s90
      %p99 = scmp.eq.s32.totalorder %s14, 1
      %p100 = por %p98, %p99
      %p101 = scmp.ne.s32.totalorder %s90, %s91
      %p102 = scmp.eq.s32.totalorder %s14, 0
      %p103 = por %p101, %p102
      %p104 = scmp.ne.s32.totalorder %s90, %s91
      %p105 = scmp.eq.s32.totalorder %s15, 1
      %p106 = por %p104, %p105
      %p108 = scmp.ne.s32.totalorder %s91, %s107
      %p109 = scmp.eq.s32.totalorder %s15, 0
      %p110 = por %p108, %p109
      %p111 = scmp.le.s32.totalorder 1, %s9
      %p112 = scmp.lt.s32.totalorder %s9, 3
      %p113 = pnand %p111, %p112
      %p114 = pneg %p113
      // Predicated region
      $region9: #{tsdf_coder_forward.16} parent=5 // pred_check
        _
      $region10: #{tsdf_coder_forward.16} parent=5 // pred_check_branch
        %116 = sbr.rel (%p113) target = $region12
      $region11: #{tsdf_coder_forward.16} parent=5 // pred_region
        %s117 = ssub.s32 %s9, 1
        // Predicated region
        $region13: #{tsdf_coder_forward.16} parent=11 // pred_check
          %p118 = pneg %p30
        $region14: #{tsdf_coder_forward.16} parent=11 // pred_check_branch
          %120 = sbr.rel (%p118) target = $region16
        $region15: #{tsdf_coder_forward.16} parent=11 // pred_region
          _
        $region16: #{tsdf_coder_forward.16} parent=11 // pred_fallthru
          _
        // Predicated region
        $region17: #{tsdf_coder_forward.16} parent=11 // pred_check
          %p121 = pneg %p77
        $region18: #{tsdf_coder_forward.16} parent=11 // pred_check_branch
          %123 = sbr.rel (%p121) target = $region20
        $region19: #{tsdf_coder_forward.16} parent=11 // pred_region
          _
        $region20: #{tsdf_coder_forward.16} parent=11 // pred_fallthru
          _
      $region12: #{tsdf_coder_forward.16} parent=5 // pred_fallthru
        _
      %p124 = scmp.lt.s32.totalorder %s9, 2
      // Predicated region
      $region21: #{tsdf_coder_forward.16} parent=5 // pred_check
        %p125 = pneg %p124
      $region22: #{tsdf_coder_forward.16} parent=5 // pred_check_branch
        %127 = sbr.rel (%p125) target = $region24
      $region23: #{tsdf_coder_forward.16} parent=5 // pred_region
        // Predicated region
        $region25: #{tsdf_coder_forward.16} parent=23 // pred_check
          %p128 = pneg %p50
        $region26: #{tsdf_coder_forward.16} parent=23 // pred_check_branch
          %130 = sbr.rel (%p128) target = $region28
        $region27: #{tsdf_coder_forward.16} parent=23 // pred_region
          %s131 = smul.u32 4, %s9
          %p132 = scmp.lt.s32.totalorder %s131, 7
          %s133 = scalar_select %p132, %s131, 7
          %s134 = smul.addr %s133, 4
          %s135 = scalar_lea.vmem %s1, %s134
          %s136 = smul.u32 4, %s9
        $region28: #{tsdf_coder_forward.16} parent=23 // pred_fallthru
          _
      $region24: #{tsdf_coder_forward.16} parent=5 // pred_fallthru
        _
      %p137 = scmp.le.s32.totalorder 1, %s9
      %p138 = scmp.lt.s32.totalorder %s9, 3
      %p139 = pnand %p137, %p138
      %p140 = pneg %p139
      // Predicated region
      $region29: #{tsdf_coder_forward.16} parent=5 // pred_check
        _
      $region30: #{tsdf_coder_forward.16} parent=5 // pred_check_branch
        %142 = sbr.rel (%p139) target = $region32
      $region31: #{tsdf_coder_forward.16} parent=5 // pred_region
        %s143 = ssub.s32 %s9, 1
        %p144 = pneg %p30
        %p145 = pneg %p27
        %s146 = smul.u32 4, %s14
        %p147 = scmp.lt.s32.totalorder %s146, 7
        %s148 = scalar_select %p147, %s146, 7
        %s149 = smul.addr %s148, 4
        %s150 = scalar_lea.vmem %s1, %s149
        %p151 = pneg %p56
        %p152 = pneg %p53
        %p153 = pneg %p77
        %p154 = pneg %p74
        %p155 = pneg %p103
        %p156 = pneg %p100
        %s157 = sand.u32 %s90, 1
        %s158 = sand.u32 %s90, 1
        %s159 = smul.addr %s158, 128
        %s160 = scalar_lea.vmem [#allocation2], %s159
        %s161 = smul.u32 4, %s14
        %p162 = scmp.lt.s32.totalorder %s161, 7
        %s163 = scalar_select %p162, %s161, 7
        %s164 = smul.addr %s163, 4
        %s165 = scalar_lea.vmem %s1, %s164
        %s166 = smul.u32 4, %s14
        %s167 = smul.u32 4, %s14
        %v169 = vld [vmem:[%s0] sm:$0xf]
        %v170 = vld [vmem:[%s0 + $0x4] sm:$0xf]
        %v171 = vld [vmem:[%s0 + $0x8] sm:$0xf]
        %v172 = vld [vmem:[%s0 + $0xc] sm:$0xf]
        %v173 = vld [vmem:[%s0 + $0x10] sm:$0xf]
        %v174 = vld [vmem:[%s0 + $0x14] sm:$0xf]
        %v175 = vld [vmem:[%s0 + $0x18] sm:$0xf]
        %v176 = vld [vmem:[%s0 + $0x1c] sm:$0xf]
        %v177 = vld [vmem:[%s165] sm:$0xff]
        %v178 = vld [vmem:[%s165 + $0x8] sm:$0xff]
        %v179 = vld [vmem:[%s2] sm:$0xff]
        %v180 = vld [vmem:[%s2 + $0x8] sm:$0xff]
        %v181 = vld [vmem:[%s2 + $0x10] sm:$0xff]
        %v182 = vld [vmem:[%s2 + $0x18] sm:$0xff]
        %v183 = vld [vmem:[%s2 + $0x20] sm:$0xff]
        %v184 = vld [vmem:[%s2 + $0x28] sm:$0xff]
        %v185 = vld [vmem:[%s2 + $0x30] sm:$0xff]
        %v186 = vld [vmem:[%s2 + $0x38] sm:$0xff]
        %188 = vset.pattern.permute.xlu0 0
        %189 = vperm.xlu0 %188, %v179
        %v190 = vpop.permute.xlu0 %189
        %193 = vset.pattern.permute.xlu0 0
        %194 = vperm.xlu0 %193, %v180
        %v195 = vpop.permute.xlu0 %194
        %198 = vset.pattern.permute.xlu0 0
        %199 = vperm.xlu0 %198, %v181
        %v200 = vpop.permute.xlu0 %199
        %203 = vset.pattern.permute.xlu0 0
        %204 = vperm.xlu0 %203, %v182
        %v205 = vpop.permute.xlu0 %204
        %208 = vset.pattern.permute.xlu0 0
        %209 = vperm.xlu0 %208, %v183
        %v210 = vpop.permute.xlu0 %209
        %213 = vset.pattern.permute.xlu0 0
        %214 = vperm.xlu0 %213, %v184
        %v215 = vpop.permute.xlu0 %214
        %218 = vset.pattern.permute.xlu0 0
        %219 = vperm.xlu0 %218, %v185
        %v220 = vpop.permute.xlu0 %219
        %223 = vset.pattern.permute.xlu0 0
        %224 = vperm.xlu0 %223, %v186
        %v225 = vpop.permute.xlu0 %224
        %v235 = vunpack.c.l.b16 %v169
        %v236 = vunpack.c.l.b16 %v170
        %v237 = vunpack.c.l.b16 %v171
        %v238 = vunpack.c.l.b16 %v172
        %v239 = vunpack.c.l.b16 %v173
        %v240 = vunpack.c.l.b16 %v174
        %v241 = vunpack.c.l.b16 %v175
        %v242 = vunpack.c.l.b16 %v176
        %v243 = vpack.c.b16 %v236, %v235
        %v244 = vpack.c.b16 %v238, %v237
        %v245 = vpack.c.b16 %v240, %v239
        %v246 = vpack.c.b16 %v242, %v241
        %v249 = vunpack.c.l.b16 %v177
        %v250 = vunpack.c.h.b16 %v177
        %v251 = vunpack.c.l.b16 %v178
        %v252 = vunpack.c.h.b16 %v178
        %v253 = vpack.c.b16 %v249, %v249
        %v254 = vpack.c.b16 %v250, %v250
        %v255 = vpack.c.b16 %v251, %v251
        %v256 = vpack.c.b16 %v252, %v252
        %vm257 = vcmask 64512
        %v259 = vsel %vm257, %v243, 0
        %v262 = vsel %vm257, %v244, 0
        %v265 = vsel %vm257, %v245, 0
        %v268 = vsel %vm257, %v246, 0
        %vm270 = vcmask 1043456
        %v272 = vsel %vm270, %v253, 0
        %v275 = vsel %vm270, %v254, 0
        %v278 = vsel %vm270, %v255, 0
        %v281 = vsel %vm270, %v256, 0
        %283 = vmatprep.subr.bf16.mxu0 0
        %284 = vmatpush1.bf16.msra.mxu0 0
        %285 = vmatprep.subr.bf16.mxu0 0
        %286 = vmatpush1.bf16.msra.mxu0 0
        %287 = vmatprep.subr.bf16.mxu0 0
        %288 = vmatpush1.bf16.msra.mxu0 0
        %289 = vmatprep.subr.bf16.mxu0 0
        %290 = vmatpush1.bf16.msra.mxu0 0
        %291 = vmatprep.subr.bf16.mxu0 0
        %292 = vmatpush1.bf16.msra.mxu0 0
        %293 = vmatprep.subr.bf16.mxu0 0
        %294 = vmatpush1.bf16.msra.mxu0 0
        %295 = vmatprep.subr.bf16.mxu0 0
        %296 = vmatpush1.bf16.msra.mxu0 0
        %297 = vmatprep.subr.bf16.mxu0 %v275
        %298 = vmatpush1.bf16.msra.mxu0 %v272
        %299 = vmatprep.subr.bf16.mxu0 0
        %300 = vmatpush2.bf16.msra.mxu0 0
        %301 = vmatprep.subr.bf16.mxu0 0
        %302 = vmatpush2.bf16.msra.mxu0 0
        %303 = vmatprep.subr.bf16.mxu0 0
        %304 = vmatpush2.bf16.msra.mxu0 0
        %305 = vmatprep.subr.bf16.mxu0 0
        %306 = vmatpush2.bf16.msra.mxu0 0
        %307 = vmatprep.subr.bf16.mxu0 0
        %308 = vmatpush2.bf16.msra.mxu0 0
        %309 = vmatprep.subr.bf16.mxu0 0
        %310 = vmatpush2.bf16.msra.mxu0 0
        %311 = vmatprep.subr.bf16.mxu0 0
        %312 = vmatpush2.bf16.msra.mxu0 0
        %313 = vmatprep.subr.bf16.mxu0 0
        %314 = vmatpush2.bf16.msra.mxu0 0
        %315 = vmatprep.mubr.bf16.mxu0 0
        %316 = vmatmul.mubr.bf16.gmra.mxu0 %v259
        %v317 = vpop.f32.mrf.mxu0
        %v318 = vadd.f32 %v190, %v317
        %v319 = vpop.f32.mrf.mxu0
        %v320 = vadd.f32 %v190, %v319
        %v321 = vpop.f32.mrf.mxu0
        %v322 = vadd.f32 %v195, %v321
        %v323 = vpop.f32.mrf.mxu0
        %v324 = vadd.f32 %v195, %v323
        %325 = vmatprep.mubr.bf16.mxu0 0
        %326 = vmatmul.mubr.bf16.gmra.mxu0 %v262
        %v327 = vpop.f32.mrf.mxu0
        %v328 = vadd.f32 %v200, %v327
        %v329 = vpop.f32.mrf.mxu0
        %v330 = vadd.f32 %v200, %v329
        %v331 = vpop.f32.mrf.mxu0
        %v332 = vadd.f32 %v205, %v331
        %v333 = vpop.f32.mrf.mxu0
        %v334 = vadd.f32 %v205, %v333
        %335 = vmatprep.mubr.bf16.mxu0 0
        %336 = vmatmul.mubr.bf16.gmra.mxu0 %v265
        %v337 = vpop.f32.mrf.mxu0
        %v338 = vadd.f32 %v210, %v337
        %v339 = vpop.f32.mrf.mxu0
        %v340 = vadd.f32 %v210, %v339
        %v341 = vpop.f32.mrf.mxu0
        %v342 = vadd.f32 %v215, %v341
        %v343 = vpop.f32.mrf.mxu0
        %v344 = vadd.f32 %v215, %v343
        %345 = vmatprep.mubr.bf16.mxu0 0
        %346 = vmatmul.mubr.bf16.gmra.mxu0 %v268
        %v347 = vpop.f32.mrf.mxu0
        %v348 = vadd.f32 %v220, %v347
        %v349 = vpop.f32.mrf.mxu0
        %v350 = vadd.f32 %v220, %v349
        %v351 = vpop.f32.mrf.mxu0
        %v352 = vadd.f32 %v225, %v351
        %v353 = vpop.f32.mrf.mxu0
        %v354 = vadd.f32 %v225, %v353
        %355 = vdwg.mxu0
        %356 = vmatprep.subr.bf16.mxu0 0
        %357 = vmatpush1.bf16.msra.mxu0 0
        %358 = vmatprep.subr.bf16.mxu0 0
        %359 = vmatpush1.bf16.msra.mxu0 0
        %360 = vmatprep.subr.bf16.mxu0 0
        %361 = vmatpush1.bf16.msra.mxu0 0
        %362 = vmatprep.subr.bf16.mxu0 0
        %363 = vmatpush1.bf16.msra.mxu0 0
        %364 = vmatprep.subr.bf16.mxu0 0
        %365 = vmatpush1.bf16.msra.mxu0 0
        %366 = vmatprep.subr.bf16.mxu0 0
        %367 = vmatpush1.bf16.msra.mxu0 0
        %368 = vmatprep.subr.bf16.mxu0 0
        %369 = vmatpush1.bf16.msra.mxu0 0
        %370 = vmatprep.subr.bf16.mxu0 %v281
        %371 = vmatpush1.bf16.msra.mxu0 %v278
        %372 = vmatprep.subr.bf16.mxu0 0
        %373 = vmatpush2.bf16.msra.mxu0 0
        %374 = vmatprep.subr.bf16.mxu0 0
        %375 = vmatpush2.bf16.msra.mxu0 0
        %376 = vmatprep.subr.bf16.mxu0 0
        %377 = vmatpush2.bf16.msra.mxu0 0
        %378 = vmatprep.subr.bf16.mxu0 0
        %379 = vmatpush2.bf16.msra.mxu0 0
        %380 = vmatprep.subr.bf16.mxu0 0
        %381 = vmatpush2.bf16.msra.mxu0 0
        %382 = vmatprep.subr.bf16.mxu0 0
        %383 = vmatpush2.bf16.msra.mxu0 0
        %384 = vmatprep.subr.bf16.mxu0 0
        %385 = vmatpush2.bf16.msra.mxu0 0
        %386 = vmatprep.subr.bf16.mxu0 0
        %387 = vmatpush2.bf16.msra.mxu0 0
        %388 = vmatprep.mubr.bf16.mxu0 0
        %389 = vmatmul.mubr.bf16.gmra.mxu0 %v259
        %v390 = vpop.f32.mrf.mxu0
        %v391 = vadd.f32 %v190, %v390
        %v392 = vpop.f32.mrf.mxu0
        %v393 = vadd.f32 %v190, %v392
        %v394 = vpop.f32.mrf.mxu0
        %v395 = vadd.f32 %v195, %v394
        %v396 = vpop.f32.mrf.mxu0
        %v397 = vadd.f32 %v195, %v396
        %398 = vmatprep.mubr.bf16.mxu0 0
        %399 = vmatmul.mubr.bf16.gmra.mxu0 %v262
        %v400 = vpop.f32.mrf.mxu0
        %v401 = vadd.f32 %v200, %v400
        %v402 = vpop.f32.mrf.mxu0
        %v403 = vadd.f32 %v200, %v402
        %v404 = vpop.f32.mrf.mxu0
        %v405 = vadd.f32 %v205, %v404
        %v406 = vpop.f32.mrf.mxu0
        %v407 = vadd.f32 %v205, %v406
        %408 = vmatprep.mubr.bf16.mxu0 0
        %409 = vmatmul.mubr.bf16.gmra.mxu0 %v265
        %v410 = vpop.f32.mrf.mxu0
        %v411 = vadd.f32 %v210, %v410
        %v412 = vpop.f32.mrf.mxu0
        %v413 = vadd.f32 %v210, %v412
        %v414 = vpop.f32.mrf.mxu0
        %v415 = vadd.f32 %v215, %v414
        %v416 = vpop.f32.mrf.mxu0
        %v417 = vadd.f32 %v215, %v416
        %418 = vmatprep.mubr.bf16.mxu0 0
        %419 = vmatmul.mubr.bf16.gmra.mxu0 %v268
        %v420 = vpop.f32.mrf.mxu0
        %v421 = vadd.f32 %v220, %v420
        %v422 = vpop.f32.mrf.mxu0
        %v423 = vadd.f32 %v220, %v422
        %v424 = vpop.f32.mrf.mxu0
        %v425 = vadd.f32 %v225, %v424
        %v426 = vpop.f32.mrf.mxu0
        %v427 = vadd.f32 %v225, %v426
        %428 = vdwg.mxu0
        %vm429 = vcmp.gt.f32.partialorder %v318, 0.0
        %vm430 = vcmp.gt.f32.partialorder %v320, 0.0
        %vm431 = vcmp.gt.f32.partialorder %v391, 0.0
        %vm432 = vcmp.gt.f32.partialorder %v393, 0.0
        %vm433 = vcmp.gt.f32.partialorder %v322, 0.0
        %vm434 = vcmp.gt.f32.partialorder %v324, 0.0
        %vm435 = vcmp.gt.f32.partialorder %v395, 0.0
        %vm436 = vcmp.gt.f32.partialorder %v397, 0.0
        %vm437 = vcmp.gt.f32.partialorder %v328, 0.0
        %vm438 = vcmp.gt.f32.partialorder %v330, 0.0
        %vm439 = vcmp.gt.f32.partialorder %v401, 0.0
        %vm440 = vcmp.gt.f32.partialorder %v403, 0.0
        %vm441 = vcmp.gt.f32.partialorder %v332, 0.0
        %vm442 = vcmp.gt.f32.partialorder %v334, 0.0
        %vm443 = vcmp.gt.f32.partialorder %v405, 0.0
        %vm444 = vcmp.gt.f32.partialorder %v407, 0.0
        %vm445 = vcmp.gt.f32.partialorder %v338, 0.0
        %vm446 = vcmp.gt.f32.partialorder %v340, 0.0
        %vm447 = vcmp.gt.f32.partialorder %v411, 0.0
        %vm448 = vcmp.gt.f32.partialorder %v413, 0.0
        %vm449 = vcmp.gt.f32.partialorder %v342, 0.0
        %vm450 = vcmp.gt.f32.partialorder %v344, 0.0
        %vm451 = vcmp.gt.f32.partialorder %v415, 0.0
        %vm452 = vcmp.gt.f32.partialorder %v417, 0.0
        %vm453 = vcmp.gt.f32.partialorder %v348, 0.0
        %vm454 = vcmp.gt.f32.partialorder %v350, 0.0
        %vm455 = vcmp.gt.f32.partialorder %v421, 0.0
        %vm456 = vcmp.gt.f32.partialorder %v423, 0.0
        %vm457 = vcmp.gt.f32.partialorder %v352, 0.0
        %vm458 = vcmp.gt.f32.partialorder %v354, 0.0
        %vm459 = vcmp.gt.f32.partialorder %v425, 0.0
        %vm460 = vcmp.gt.f32.partialorder %v427, 0.0
        %v461 = vmul.f32 %v318, 0.1
        %v462 = vmul.f32 %v320, 0.1
        %v463 = vmul.f32 %v391, 0.1
        %v464 = vmul.f32 %v393, 0.1
        %v465 = vmul.f32 %v322, 0.1
        %v466 = vmul.f32 %v324, 0.1
        %v467 = vmul.f32 %v395, 0.1
        %v468 = vmul.f32 %v397, 0.1
        %v469 = vmul.f32 %v328, 0.1
        %v470 = vmul.f32 %v330, 0.1
        %v471 = vmul.f32 %v401, 0.1
        %v472 = vmul.f32 %v403, 0.1
        %v473 = vmul.f32 %v332, 0.1
        %v474 = vmul.f32 %v334, 0.1
        %v475 = vmul.f32 %v405, 0.1
        %v476 = vmul.f32 %v407, 0.1
        %v477 = vmul.f32 %v338, 0.1
        %v478 = vmul.f32 %v340, 0.1
        %v479 = vmul.f32 %v411, 0.1
        %v480 = vmul.f32 %v413, 0.1
        %v481 = vmul.f32 %v342, 0.1
        %v482 = vmul.f32 %v344, 0.1
        %v483 = vmul.f32 %v415, 0.1
        %v484 = vmul.f32 %v417, 0.1
        %v485 = vmul.f32 %v348, 0.1
        %v486 = vmul.f32 %v350, 0.1
        %v487 = vmul.f32 %v421, 0.1
        %v488 = vmul.f32 %v423, 0.1
        %v489 = vmul.f32 %v352, 0.1
        %v490 = vmul.f32 %v354, 0.1
        %v491 = vmul.f32 %v425, 0.1
        %v492 = vmul.f32 %v427, 0.1
        %v493 = vsel %vm429, %v318, %v461
        %v494 = vsel %vm430, %v320, %v462
        %v495 = vsel %vm431, %v391, %v463
        %v496 = vsel %vm432, %v393, %v464
        %v497 = vsel %vm433, %v322, %v465
        %v498 = vsel %vm434, %v324, %v466
        %v499 = vsel %vm435, %v395, %v467
        %v500 = vsel %vm436, %v397, %v468
        %v501 = vsel %vm437, %v328, %v469
        %v502 = vsel %vm438, %v330, %v470
        %v503 = vsel %vm439, %v401, %v471
        %v504 = vsel %vm440, %v403, %v472
        %v505 = vsel %vm441, %v332, %v473
        %v506 = vsel %vm442, %v334, %v474
        %v507 = vsel %vm443, %v405, %v475
        %v508 = vsel %vm444, %v407, %v476
        %v509 = vsel %vm445, %v338, %v477
        %v510 = vsel %vm446, %v340, %v478
        %v511 = vsel %vm447, %v411, %v479
        %v512 = vsel %vm448, %v413, %v480
        %v513 = vsel %vm449, %v342, %v481
        %v514 = vsel %vm450, %v344, %v482
        %v515 = vsel %vm451, %v415, %v483
        %v516 = vsel %vm452, %v417, %v484
        %v517 = vsel %vm453, %v348, %v485
        %v518 = vsel %vm454, %v350, %v486
        %v519 = vsel %vm455, %v421, %v487
        %v520 = vsel %vm456, %v423, %v488
        %v521 = vsel %vm457, %v352, %v489
        %v522 = vsel %vm458, %v354, %v490
        %v523 = vsel %vm459, %v425, %v491
        %v524 = vsel %vm460, %v427, %v492
        %v525 = vpack.c.bf16 %v497, %v493
        %v526 = vpack.c.bf16 %v498, %v494
        %v527 = vpack.c.bf16 %v499, %v495
        %v528 = vpack.c.bf16 %v500, %v496
        %v529 = vpack.c.bf16 %v505, %v501
        %v530 = vpack.c.bf16 %v506, %v502
        %v531 = vpack.c.bf16 %v507, %v503
        %v532 = vpack.c.bf16 %v508, %v504
        %v533 = vpack.c.bf16 %v513, %v509
        %v534 = vpack.c.bf16 %v514, %v510
        %v535 = vpack.c.bf16 %v515, %v511
        %v536 = vpack.c.bf16 %v516, %v512
        %v537 = vpack.c.bf16 %v521, %v517
        %v538 = vpack.c.bf16 %v522, %v518
        %v539 = vpack.c.bf16 %v523, %v519
        %v540 = vpack.c.bf16 %v524, %v520
        %v557 = vunpack.c.l.b16 %v525
        %v558 = vunpack.c.l.b16 %v526
        %v559 = vunpack.c.l.b16 %v527
        %v560 = vunpack.c.l.b16 %v528
        %v561 = vunpack.c.h.b16 %v525
        %v562 = vunpack.c.h.b16 %v526
        %v563 = vunpack.c.h.b16 %v527
        %v564 = vunpack.c.h.b16 %v528
        %v565 = vunpack.c.l.b16 %v529
        %v566 = vunpack.c.l.b16 %v530
        %v567 = vunpack.c.l.b16 %v531
        %v568 = vunpack.c.l.b16 %v532
        %v569 = vunpack.c.h.b16 %v529
        %v570 = vunpack.c.h.b16 %v530
        %v571 = vunpack.c.h.b16 %v531
        %v572 = vunpack.c.h.b16 %v532
        %v573 = vunpack.c.l.b16 %v533
        %v574 = vunpack.c.l.b16 %v534
        %v575 = vunpack.c.l.b16 %v535
        %v576 = vunpack.c.l.b16 %v536
        %v577 = vunpack.c.h.b16 %v533
        %v578 = vunpack.c.h.b16 %v534
        %v579 = vunpack.c.h.b16 %v535
        %v580 = vunpack.c.h.b16 %v536
        %v581 = vunpack.c.l.b16 %v537
        %v582 = vunpack.c.l.b16 %v538
        %v583 = vunpack.c.l.b16 %v539
        %v584 = vunpack.c.l.b16 %v540
        %v585 = vunpack.c.h.b16 %v537
        %v586 = vunpack.c.h.b16 %v538
        %v587 = vunpack.c.h.b16 %v539
        %v588 = vunpack.c.h.b16 %v540
        %v589 = vpack.c.b16 %v558, %v557
        %v590 = vpack.c.b16 %v560, %v559
        %v591 = vpack.c.b16 %v562, %v561
        %v592 = vpack.c.b16 %v564, %v563
        %v593 = vpack.c.b16 %v566, %v565
        %v594 = vpack.c.b16 %v568, %v567
        %v595 = vpack.c.b16 %v570, %v569
        %v596 = vpack.c.b16 %v572, %v571
        %v597 = vpack.c.b16 %v574, %v573
        %v598 = vpack.c.b16 %v576, %v575
        %v599 = vpack.c.b16 %v578, %v577
        %v600 = vpack.c.b16 %v580, %v579
        %v601 = vpack.c.b16 %v582, %v581
        %v602 = vpack.c.b16 %v584, %v583
        %v603 = vpack.c.b16 %v586, %v585
        %v604 = vpack.c.b16 %v588, %v587
        %621 = vst [vmem:[%s160] sm:$0xff] %v589
        %622 = vst [vmem:[%s160 + $0x8] sm:$0xff] %v590
        %623 = vst [vmem:[%s160 + $0x10] sm:$0xff] %v591
        %624 = vst [vmem:[%s160 + $0x18] sm:$0xff] %v592
        %625 = vst [vmem:[%s160 + $0x20] sm:$0xff] %v593
        %626 = vst [vmem:[%s160 + $0x28] sm:$0xff] %v594
        %627 = vst [vmem:[%s160 + $0x30] sm:$0xff] %v595
        %628 = vst [vmem:[%s160 + $0x38] sm:$0xff] %v596
        %629 = vst [vmem:[%s160 + $0x40] sm:$0xff] %v597
        %630 = vst [vmem:[%s160 + $0x48] sm:$0xff] %v598
        %631 = vst [vmem:[%s160 + $0x50] sm:$0xff] %v599
        %632 = vst [vmem:[%s160 + $0x58] sm:$0xff] %v600
        %633 = vst [vmem:[%s160 + $0x60] sm:$0xff] %v601
        %634 = vst [vmem:[%s160 + $0x68] sm:$0xff] %v602
        %635 = vst [vmem:[%s160 + $0x70] sm:$0xff] %v603
        %636 = vst [vmem:[%s160 + $0x78] sm:$0xff] %v604
        %s637 = sand.u32 %s90, 1
        %s638 = sand.u32 %s90, 1
        %s639 = smul.addr %s638, 128
        %s640 = scalar_lea.vmem [#allocation2], %s639
        // Predicated region
        $region33: #{tsdf_coder_forward.16} parent=31 // pred_check
          %p641 = pneg %p100
        $region34: #{tsdf_coder_forward.16} parent=31 // pred_check_branch
          %643 = sbr.rel (%p641) target = $region36
        $region35: #{tsdf_coder_forward.16} parent=31 // pred_region
          %s644 = smul.u32 4, %s14
          %s645 = smul.addr %s644, 4
          %s646 = scalar_lea.vmem %s3, %s645
          // Predicated region
          $region37: #{tsdf_coder_forward.16} parent=35 // pred_check
            _
          $region38: #{tsdf_coder_forward.16} parent=35 // pred_check_branch
            %648 = sbr.rel (0) target = $region40
          $region39: #{tsdf_coder_forward.16} parent=35 // pred_region
            // Predicated region
            $region41: #{tsdf_coder_forward.16} parent=39 // pred_check
              _
            $region42: #{tsdf_coder_forward.16} parent=39 // pred_check_branch
              %650 = sbr.rel (0) target = $region44
            $region43: #{tsdf_coder_forward.16} parent=39 // pred_region
              loop: start=0, step=1, limit=1
              $region45: #{tsdf_coder_forward.16} parent=43 // loop_pre_header
                _
              $region46: #{tsdf_coder_forward.16} parent=43 // loop_header
                %s652 = sphi 0, %s656
                %p653 = scmp.ge.s32.totalorder %s652, 1
                %s657 = sphi %s640, %s640
                %s658 = sphi %s646, %s646
              $region47: #{tsdf_coder_forward.16} parent=43 // loop_header_branch
                %655 = sbr.rel (%p653) target = $region51
              $region48: #{tsdf_coder_forward.16} parent=43 // loop_body
                %v659 = vld [vmem:[%s657] sm:$0xff]
                %660 = vst [vmem:[%s658] sm:$0xff] %v659
                %v661 = vld [vmem:[%s657 + $0x8] sm:$0xff]
                %662 = vst [vmem:[%s658 + $0x8] sm:$0xff] %v661
                %v663 = vld [vmem:[%s657 + $0x10] sm:$0xff]
                %664 = vst [vmem:[%s658 + $0x20] sm:$0xff] %v663
                %v665 = vld [vmem:[%s657 + $0x18] sm:$0xff]
                %666 = vst [vmem:[%s658 + $0x28] sm:$0xff] %v665
                %v667 = vld [vmem:[%s657 + $0x20] sm:$0xff]
                %668 = vst [vmem:[%s658 + $0x40] sm:$0xff] %v667
                %v669 = vld [vmem:[%s657 + $0x28] sm:$0xff]
                %670 = vst [vmem:[%s658 + $0x48] sm:$0xff] %v669
                %v671 = vld [vmem:[%s657 + $0x30] sm:$0xff]
                %672 = vst [vmem:[%s658 + $0x60] sm:$0xff] %v671
                %v673 = vld [vmem:[%s657 + $0x38] sm:$0xff]
                %674 = vst [vmem:[%s658 + $0x68] sm:$0xff] %v673
                %v675 = vld [vmem:[%s657 + $0x40] sm:$0xff]
                %676 = vst [vmem:[%s658 + $0x80] sm:$0xff] %v675
                %v677 = vld [vmem:[%s657 + $0x48] sm:$0xff]
                %678 = vst [vmem:[%s658 + $0x88] sm:$0xff] %v677
                %v679 = vld [vmem:[%s657 + $0x50] sm:$0xff]
                %680 = vst [vmem:[%s658 + $0xa0] sm:$0xff] %v679
                %v681 = vld [vmem:[%s657 + $0x58] sm:$0xff]
                %682 = vst [vmem:[%s658 + $0xa8] sm:$0xff] %v681
                %v683 = vld [vmem:[%s657 + $0x60] sm:$0xff]
                %684 = vst [vmem:[%s658 + $0xc0] sm:$0xff] %v683
                %v685 = vld [vmem:[%s657 + $0x68] sm:$0xff]
                %686 = vst [vmem:[%s658 + $0xc8] sm:$0xff] %v685
                %v687 = vld [vmem:[%s657 + $0x70] sm:$0xff]
                %688 = vst [vmem:[%s658 + $0xe0] sm:$0xff] %v687
                %v689 = vld [vmem:[%s657 + $0x78] sm:$0xff]
                %690 = vst [vmem:[%s658 + $0xe8] sm:$0xff] %v689
              $region49: #{tsdf_coder_forward.16} parent=43 // loop_footer
                %s656 = sadd.s32 1, %s652
              $region50: #{tsdf_coder_forward.16} parent=43 // loop_footer_branch
                %651 = sbr.rel target = $region46
              $region51: #{tsdf_coder_forward.16} parent=43 // loop_exit
                _
            $region44: #{tsdf_coder_forward.16} parent=39 // pred_fallthru
              _
            // Predicated region
            $region52: #{tsdf_coder_forward.16} parent=39 // pred_check
              _
            $region53: #{tsdf_coder_forward.16} parent=39 // pred_check_branch
              %692 = sbr.rel target = $region55
            $region54: #{tsdf_coder_forward.16} parent=39 // pred_region
              _
            $region55: #{tsdf_coder_forward.16} parent=39 // pred_fallthru
              _
          $region40: #{tsdf_coder_forward.16} parent=35 // pred_fallthru
            _
          %693 = vnop
        $region36: #{tsdf_coder_forward.16} parent=31 // pred_fallthru
          _
      $region32: #{tsdf_coder_forward.16} parent=5 // pred_fallthru
        _
      %p694 = scmp.le.s32.totalorder 2, %s9
      // Predicated region
      $region56: #{tsdf_coder_forward.16} parent=5 // pred_check
        %p695 = pneg %p694
      $region57: #{tsdf_coder_forward.16} parent=5 // pred_check_branch
        %697 = sbr.rel (%p695) target = $region59
      $region58: #{tsdf_coder_forward.16} parent=5 // pred_region
        %s698 = ssub.s32 %s9, 2
        // Predicated region
        $region60: #{tsdf_coder_forward.16} parent=58 // pred_check
          %p699 = pneg %p106
        $region61: #{tsdf_coder_forward.16} parent=58 // pred_check_branch
          %701 = sbr.rel (%p699) target = $region63
        $region62: #{tsdf_coder_forward.16} parent=58 // pred_region
          %s702 = sand.u32 %s91, 1
          %s703 = sand.u32 %s91, 1
          %s704 = smul.addr %s703, 128
          %s705 = scalar_lea.vmem [#allocation2], %s704
        $region63: #{tsdf_coder_forward.16} parent=58 // pred_fallthru
          _
      $region59: #{tsdf_coder_forward.16} parent=5 // pred_fallthru
        _
    $region6: #{tsdf_coder_forward.16} parent=1 // loop_footer
      %s13 = sadd.s32 1, %s9
    $region7: #{tsdf_coder_forward.16} parent=1 // loop_footer_branch
      %8 = sbr.rel target = $region3
    $region8: #{tsdf_coder_forward.16} parent=1 // loop_exit
      _

// kernel: tsdf_coder_forward.17
$region0: #{tsdf_coder_forward.17}
  #allocation0 [shape = 'u32[]', space=smem, size = 0x4, offset = 0x4, fixed_abs, tag = 'smem constant byte address 0x4 - core index']
  #allocation1 [shape = 'u32[144,128]{1,0:T(1,128)}', space=vmem, size = 0x12000, scoped, tag = 'internal scratch']
  %s0 = inlined_call_operand.vmem [shape: bf16[2,216], index: 0, kind: input, shape index: {}]
  %s1 = inlined_call_operand.vmem [shape: bf16[216,8192], index: 1, kind: input, shape index: {}]
  %s2 = inlined_call_operand.vmem [shape: f32[2,1], index: 2, kind: input, shape index: {}]
  %s3 = inlined_call_operand.vmem [shape: f32[2,8192], index: 3, kind: output, shape index: {}]
  %s4 = sld [smem:[#allocation0]]
  $region68: #{tsdf_coder_forward.17} parent=0
    _
  %s6 = ssub.s32 1, %s4
  %s7 = scalar_select 0, %s6, %s4
  $region1: #{tsdf_coder_forward.17} parent=0
    #allocation2 [shape = 'u8[1769472]{0}', space=vmem, size = 0x1b0000, scoped, tag = 'input window, operand 1']
    loop: start=0, step=1, limit=6
    $region2: #{tsdf_coder_forward.17} parent=1 // loop_pre_header
      _
    $region3: #{tsdf_coder_forward.17} parent=1 // loop_header
      %s9 = sphi 0, %s13
      %p10 = scmp.ge.s32.totalorder %s9, 6
      %s17 = sphi 0, %s17
      %s19 = sphi 0, %s17
      %s20 = sphi 0, %s19
      %s34 = sphi 0, %s20
      %s40 = sphi 0, %s42
      %s43 = sphi 0, %s40
      %s44 = sphi 0, %s43
      %s60 = sphi 0, %s44
      %s64 = sphi 0, %s64
      %s66 = sphi 0, %s64
      %s67 = sphi 0, %s66
      %s81 = sphi 0, %s67
      %s87 = sphi 0, %s89
      %s90 = sphi 0, %s87
      %s91 = sphi 0, %s90
      %s107 = sphi 0, %s91
    $region4: #{tsdf_coder_forward.17} parent=1 // loop_header_branch
      %12 = sbr.rel (%p10) target = $region8
    $region5: #{tsdf_coder_forward.17} parent=1 // loop_body
      %s14 = ssub.s32 %s9, 1
      %s15 = ssub.s32 %s9, 2
      %s16 = sadd.s32 %s9, 1
      %s18 = sadd.s32 %s17, 1
      %p21 = scmp.eq.s32.totalorder %s9, 3
      %p22 = scmp.ne.s32.totalorder %s17, %s19
      %p23 = scmp.eq.s32.totalorder %s9, 0
      %p24 = por %p22, %p23
      %p25 = scmp.ne.s32.totalorder %s17, %s19
      %p26 = scmp.eq.s32.totalorder %s14, 3
      %p27 = por %p25, %p26
      %p28 = scmp.ne.s32.totalorder %s19, %s20
      %p29 = scmp.eq.s32.totalorder %s14, 0
      %p30 = por %p28, %p29
      %p31 = scmp.ne.s32.totalorder %s19, %s20
      %p32 = scmp.eq.s32.totalorder %s15, 3
      %p33 = por %p31, %p32
      %p35 = scmp.ne.s32.totalorder %s20, %s34
      %p36 = scmp.eq.s32.totalorder %s15, 0
      %p37 = por %p35, %p36
      %s38 = ssub.s32 %s9, %s16
      %p39 = scmp.eq.s32.totalorder %s38, 0
      %s41 = sadd.s32 %s40, 1
      %s42 = scalar_select %p39, %s40, %s41
      %p45 = pneg %p39
      %p46 = scmp.eq.s32.totalorder %s9, 3
      %p47 = por %p45, %p46
      %p48 = scmp.ne.s32.totalorder %s40, %s43
      %p49 = scmp.eq.s32.totalorder %s9, 0
      %p50 = por %p48, %p49
      %p51 = scmp.ne.s32.totalorder %s40, %s43
      %p52 = scmp.eq.s32.totalorder %s14, 3
      %p53 = por %p51, %p52
      %p54 = scmp.ne.s32.totalorder %s43, %s44
      %p55 = scmp.eq.s32.totalorder %s14, 0
      %p56 = por %p54, %p55
      %p57 = scmp.ne.s32.totalorder %s43, %s44
      %p58 = scmp.eq.s32.totalorder %s15, 3
      %p59 = por %p57, %p58
      %p61 = scmp.ne.s32.totalorder %s44, %s60
      %p62 = scmp.eq.s32.totalorder %s15, 0
      %p63 = por %p61, %p62
      %s65 = sadd.s32 %s64, 1
      %p68 = scmp.eq.s32.totalorder %s9, 3
      %p69 = scmp.ne.s32.totalorder %s64, %s66
      %p70 = scmp.eq.s32.totalorder %s9, 0
      %p71 = por %p69, %p70
      %p72 = scmp.ne.s32.totalorder %s64, %s66
      %p73 = scmp.eq.s32.totalorder %s14, 3
      %p74 = por %p72, %p73
      %p75 = scmp.ne.s32.totalorder %s66, %s67
      %p76 = scmp.eq.s32.totalorder %s14, 0
      %p77 = por %p75, %p76
      %p78 = scmp.ne.s32.totalorder %s66, %s67
      %p79 = scmp.eq.s32.totalorder %s15, 3
      %p80 = por %p78, %p79
      %p82 = scmp.ne.s32.totalorder %s67, %s81
      %p83 = scmp.eq.s32.totalorder %s15, 0
      %p84 = por %p82, %p83
      %s85 = ssub.s32 %s9, %s16
      %p86 = scmp.eq.s32.totalorder %s85, 0
      %s88 = sadd.s32 %s87, 1
      %s89 = scalar_select %p86, %s87, %s88
      %p92 = pneg %p86
      %p93 = scmp.eq.s32.totalorder %s9, 3
      %p94 = por %p92, %p93
      %p95 = scmp.ne.s32.totalorder %s87, %s90
      %p96 = scmp.eq.s32.totalorder %s9, 0
      %p97 = por %p95, %p96
      %p98 = scmp.ne.s32.totalorder %s87, %s90
      %p99 = scmp.eq.s32.totalorder %s14, 3
      %p100 = por %p98, %p99
      %p101 = scmp.ne.s32.totalorder %s90, %s91
      %p102 = scmp.eq.s32.totalorder %s14, 0
      %p103 = por %p101, %p102
      %p104 = scmp.ne.s32.totalorder %s90, %s91
      %p105 = scmp.eq.s32.totalorder %s15, 3
      %p106 = por %p104, %p105
      %p108 = scmp.ne.s32.totalorder %s91, %s107
      %p109 = scmp.eq.s32.totalorder %s15, 0
      %p110 = por %p108, %p109
      %p111 = scmp.le.s32.totalorder 1, %s9
      %p112 = scmp.lt.s32.totalorder %s9, 5
      %p113 = pnand %p111, %p112
      %p114 = pneg %p113
      // Predicated region
      $region9: #{tsdf_coder_forward.17} parent=5 // pred_check
        _
      $region10: #{tsdf_coder_forward.17} parent=5 // pred_check_branch
        %116 = sbr.rel (%p113) target = $region12
      $region11: #{tsdf_coder_forward.17} parent=5 // pred_region
        %s117 = ssub.s32 %s9, 1
        // Predicated region
        $region13: #{tsdf_coder_forward.17} parent=11 // pred_check
          %p118 = pneg %p30
        $region14: #{tsdf_coder_forward.17} parent=11 // pred_check_branch
          %120 = sbr.rel (%p118) target = $region16
        $region15: #{tsdf_coder_forward.17} parent=11 // pred_region
          _
        $region16: #{tsdf_coder_forward.17} parent=11 // pred_fallthru
          _
        // Predicated region
        $region17: #{tsdf_coder_forward.17} parent=11 // pred_check
          %p121 = pneg %p77
        $region18: #{tsdf_coder_forward.17} parent=11 // pred_check_branch
          %123 = sbr.rel (%p121) target = $region20
        $region19: #{tsdf_coder_forward.17} parent=11 // pred_region
          _
        $region20: #{tsdf_coder_forward.17} parent=11 // pred_fallthru
          _
      $region12: #{tsdf_coder_forward.17} parent=5 // pred_fallthru
        _
      %p124 = scmp.lt.s32.totalorder %s9, 4
      // Predicated region
      $region21: #{tsdf_coder_forward.17} parent=5 // pred_check
        %p125 = pneg %p124
      $region22: #{tsdf_coder_forward.17} parent=5 // pred_check_branch
        %127 = sbr.rel (%p125) target = $region24
      $region23: #{tsdf_coder_forward.17} parent=5 // pred_region
        // Predicated region
        $region25: #{tsdf_coder_forward.17} parent=23 // pred_check
          %p128 = pneg %p50
        $region26: #{tsdf_coder_forward.17} parent=23 // pred_check_branch
          %130 = sbr.rel (%p128) target = $region28
        $region27: #{tsdf_coder_forward.17} parent=23 // pred_region
          %s131 = sand.u32 %s40, 1
          %s132 = sand.u32 %s40, 1
          %s133 = smul.addr %s132, 1728
          %s134 = scalar_lea.vmem [#allocation2], %s133
          %s135 = smul.u32 16, %s9
          %s136 = smul.addr %s135, 4
          %s137 = scalar_lea.vmem %s1, %s136
          // Predicated region
          $region29: #{tsdf_coder_forward.17} parent=27 // pred_check
            _
          $region30: #{tsdf_coder_forward.17} parent=27 // pred_check_branch
            %139 = sbr.rel (0) target = $region32
          $region31: #{tsdf_coder_forward.17} parent=27 // pred_region
            // Predicated region
            $region33: #{tsdf_coder_forward.17} parent=31 // pred_check
              _
            $region34: #{tsdf_coder_forward.17} parent=31 // pred_check_branch
              %141 = sbr.rel (0) target = $region36
            $region35: #{tsdf_coder_forward.17} parent=31 // pred_region
              loop: start=0, step=1, limit=1
              $region37: #{tsdf_coder_forward.17} parent=35 // loop_pre_header
                _
              $region38: #{tsdf_coder_forward.17} parent=35 // loop_header
                %s143 = sphi 0, %s147
                %p144 = scmp.ge.s32.totalorder %s143, 1
                %s148 = sphi %s137, %s137
                %s149 = sphi %s134, %s134
              $region39: #{tsdf_coder_forward.17} parent=35 // loop_header_branch
                %146 = sbr.rel (%p144) target = $region43
              $region40: #{tsdf_coder_forward.17} parent=35 // loop_body
                %v150 = vld [vmem:[%s148] sm:$0xff]
                %151 = vst [vmem:[%s149] sm:$0xff] %v150
                %v152 = vld [vmem:[%s148 + $0x8] sm:$0xff]
                %153 = vst [vmem:[%s149 + $0x8] sm:$0xff] %v152
                %v154 = vld [vmem:[%s148 + $0x10] sm:$0xff]
                %155 = vst [vmem:[%s149 + $0x10] sm:$0xff] %v154
                %v156 = vld [vmem:[%s148 + $0x18] sm:$0xff]
                %157 = vst [vmem:[%s149 + $0x18] sm:$0xff] %v156
                %v158 = vld [vmem:[%s148 + $0x20] sm:$0xff]
                %159 = vst [vmem:[%s149 + $0x20] sm:$0xff] %v158
                %v160 = vld [vmem:[%s148 + $0x28] sm:$0xff]
                %161 = vst [vmem:[%s149 + $0x28] sm:$0xff] %v160
                %v162 = vld [vmem:[%s148 + $0x30] sm:$0xff]
                %163 = vst [vmem:[%s149 + $0x30] sm:$0xff] %v162
                %v164 = vld [vmem:[%s148 + $0x38] sm:$0xff]
                %165 = vst [vmem:[%s149 + $0x38] sm:$0xff] %v164
                %v166 = vld [vmem:[%s148 + $0x100] sm:$0xff]
                %167 = vst [vmem:[%s149 + $0x40] sm:$0xff] %v166
                %v168 = vld [vmem:[%s148 + $0x108] sm:$0xff]
                %169 = vst [vmem:[%s149 + $0x48] sm:$0xff] %v168
                %v170 = vld [vmem:[%s148 + $0x110] sm:$0xff]
                %171 = vst [vmem:[%s149 + $0x50] sm:$0xff] %v170
                %v172 = vld [vmem:[%s148 + $0x118] sm:$0xff]
                %173 = vst [vmem:[%s149 + $0x58] sm:$0xff] %v172
                %v174 = vld [vmem:[%s148 + $0x120] sm:$0xff]
                %175 = vst [vmem:[%s149 + $0x60] sm:$0xff] %v174
                %v176 = vld [vmem:[%s148 + $0x128] sm:$0xff]
                %177 = vst [vmem:[%s149 + $0x68] sm:$0xff] %v176
                %v178 = vld [vmem:[%s148 + $0x130] sm:$0xff]
                %179 = vst [vmem:[%s149 + $0x70] sm:$0xff] %v178
                %v180 = vld [vmem:[%s148 + $0x138] sm:$0xff]
                %181 = vst [vmem:[%s149 + $0x78] sm:$0xff] %v180
                %v182 = vld [vmem:[%s148 + $0x200] sm:$0xff]
                %183 = vst [vmem:[%s149 + $0x80] sm:$0xff] %v182
                %v184 = vld [vmem:[%s148 + $0x208] sm:$0xff]
                %185 = vst [vmem:[%s149 + $0x88] sm:$0xff] %v184
                %v186 = vld [vmem:[%s148 + $0x210] sm:$0xff]
                %187 = vst [vmem:[%s149 + $0x90] sm:$0xff] %v186
                %v188 = vld [vmem:[%s148 + $0x218] sm:$0xff]
                %189 = vst [vmem:[%s149 + $0x98] sm:$0xff] %v188
                %v190 = vld [vmem:[%s148 + $0x220] sm:$0xff]
                %191 = vst [vmem:[%s149 + $0xa0] sm:$0xff] %v190
                %v192 = vld [vmem:[%s148 + $0x228] sm:$0xff]
                %193 = vst [vmem:[%s149 + $0xa8] sm:$0xff] %v192
                %v194 = vld [vmem:[%s148 + $0x230] sm:$0xff]
                %195 = vst [vmem:[%s149 + $0xb0] sm:$0xff] %v194
                %v196 = vld [vmem:[%s148 + $0x238] sm:$0xff]
                %197 = vst [vmem:[%s149 + $0xb8] sm:$0xff] %v196
                %v198 = vld [vmem:[%s148 + $0x300] sm:$0xff]
                %199 = vst [vmem:[%s149 + $0xc0] sm:$0xff] %v198
                %v200 = vld [vmem:[%s148 + $0x308] sm:$0xff]
                %201 = vst [vmem:[%s149 + $0xc8] sm:$0xff] %v200
                %v202 = vld [vmem:[%s148 + $0x310] sm:$0xff]
                %203 = vst [vmem:[%s149 + $0xd0] sm:$0xff] %v202
                %v204 = vld [vmem:[%s148 + $0x318] sm:$0xff]
                %205 = vst [vmem:[%s149 + $0xd8] sm:$0xff] %v204
                %v206 = vld [vmem:[%s148 + $0x320] sm:$0xff]
                %207 = vst [vmem:[%s149 + $0xe0] sm:$0xff] %v206
                %v208 = vld [vmem:[%s148 + $0x328] sm:$0xff]
                %209 = vst [vmem:[%s149 + $0xe8] sm:$0xff] %v208
                %v210 = vld [vmem:[%s148 + $0x330] sm:$0xff]
                %211 = vst [vmem:[%s149 + $0xf0] sm:$0xff] %v210
                %v212 = vld [vmem:[%s148 + $0x338] sm:$0xff]
                %213 = vst [vmem:[%s149 + $0xf8] sm:$0xff] %v212
                %v214 = vld [vmem:[%s148 + $0x400] sm:$0xff]
                %215 = vst [vmem:[%s149 + $0x100] sm:$0xff] %v214
                %v216 = vld [vmem:[%s148 + $0x408] sm:$0xff]
                %217 = vst [vmem:[%s149 + $0x108] sm:$0xff] %v216
                %v218 = vld [vmem:[%s148 + $0x410] sm:$0xff]
                %219 = vst [vmem:[%s149 + $0x110] sm:$0xff] %v218
                %v220 = vld [vmem:[%s148 + $0x418] sm:$0xff]
                %221 = vst [vmem:[%s149 + $0x118] sm:$0xff] %v220
                %v222 = vld [vmem:[%s148 + $0x420] sm:$0xff]
                %223 = vst [vmem:[%s149 + $0x120] sm:$0xff] %v222
                %v224 = vld [vmem:[%s148 + $0x428] sm:$0xff]
                %225 = vst [vmem:[%s149 + $0x128] sm:$0xff] %v224
                %v226 = vld [vmem:[%s148 + $0x430] sm:$0xff]
                %227 = vst [vmem:[%s149 + $0x130] sm:$0xff] %v226
                %v228 = vld [vmem:[%s148 + $0x438] sm:$0xff]
                %229 = vst [vmem:[%s149 + $0x138] sm:$0xff] %v228
                %v230 = vld [vmem:[%s148 + $0x500] sm:$0xff]
                %231 = vst [vmem:[%s149 + $0x140] sm:$0xff] %v230
                %v232 = vld [vmem:[%s148 + $0x508] sm:$0xff]
                %233 = vst [vmem:[%s149 + $0x148] sm:$0xff] %v232
                %v234 = vld [vmem:[%s148 + $0x510] sm:$0xff]
                %235 = vst [vmem:[%s149 + $0x150] sm:$0xff] %v234
                %v236 = vld [vmem:[%s148 + $0x518] sm:$0xff]
                %237 = vst [vmem:[%s149 + $0x158] sm:$0xff] %v236
                %v238 = vld [vmem:[%s148 + $0x520] sm:$0xff]
                %239 = vst [vmem:[%s149 + $0x160] sm:$0xff] %v238
                %v240 = vld [vmem:[%s148 + $0x528] sm:$0xff]
                %241 = vst [vmem:[%s149 + $0x168] sm:$0xff] %v240
                %v242 = vld [vmem:[%s148 + $0x530] sm:$0xff]
                %243 = vst [vmem:[%s149 + $0x170] sm:$0xff] %v242
                %v244 = vld [vmem:[%s148 + $0x538] sm:$0xff]
                %245 = vst [vmem:[%s149 + $0x178] sm:$0xff] %v244
                %v246 = vld [vmem:[%s148 + $0x600] sm:$0xff]
                %247 = vst [vmem:[%s149 + $0x180] sm:$0xff] %v246
                %v248 = vld [vmem:[%s148 + $0x608] sm:$0xff]
                %249 = vst [vmem:[%s149 + $0x188] sm:$0xff] %v248
                %v250 = vld [vmem:[%s148 + $0x610] sm:$0xff]
                %251 = vst [vmem:[%s149 + $0x190] sm:$0xff] %v250
                %v252 = vld [vmem:[%s148 + $0x618] sm:$0xff]
                %253 = vst [vmem:[%s149 + $0x198] sm:$0xff] %v252
                %v254 = vld [vmem:[%s148 + $0x620] sm:$0xff]
                %255 = vst [vmem:[%s149 + $0x1a0] sm:$0xff] %v254
                %v256 = vld [vmem:[%s148 + $0x628] sm:$0xff]
                %257 = vst [vmem:[%s149 + $0x1a8] sm:$0xff] %v256
                %v258 = vld [vmem:[%s148 + $0x630] sm:$0xff]
                %259 = vst [vmem:[%s149 + $0x1b0] sm:$0xff] %v258
                %v260 = vld [vmem:[%s148 + $0x638] sm:$0xff]
                %261 = vst [vmem:[%s149 + $0x1b8] sm:$0xff] %v260
                %v262 = vld [vmem:[%s148 + $0x700] sm:$0xff]
                %263 = vst [vmem:[%s149 + $0x1c0] sm:$0xff] %v262
                %v264 = vld [vmem:[%s148 + $0x708] sm:$0xff]
                %265 = vst [vmem:[%s149 + $0x1c8] sm:$0xff] %v264
                %v266 = vld [vmem:[%s148 + $0x710] sm:$0xff]
                %267 = vst [vmem:[%s149 + $0x1d0] sm:$0xff] %v266
                %v268 = vld [vmem:[%s148 + $0x718] sm:$0xff]
                %269 = vst [vmem:[%s149 + $0x1d8] sm:$0xff] %v268
                %v270 = vld [vmem:[%s148 + $0x720] sm:$0xff]
                %271 = vst [vmem:[%s149 + $0x1e0] sm:$0xff] %v270
                %v272 = vld [vmem:[%s148 + $0x728] sm:$0xff]
                %273 = vst [vmem:[%s149 + $0x1e8] sm:$0xff] %v272
                %v274 = vld [vmem:[%s148 + $0x730] sm:$0xff]
                %275 = vst [vmem:[%s149 + $0x1f0] sm:$0xff] %v274
                %v276 = vld [vmem:[%s148 + $0x738] sm:$0xff]
                %277 = vst [vmem:[%s149 + $0x1f8] sm:$0xff] %v276
                %v278 = vld [vmem:[%s148 + $0x800] sm:$0xff]
                %279 = vst [vmem:[%s149 + $0x200] sm:$0xff] %v278
                %v280 = vld [vmem:[%s148 + $0x808] sm:$0xff]
                %281 = vst [vmem:[%s149 + $0x208] sm:$0xff] %v280
                %v282 = vld [vmem:[%s148 + $0x810] sm:$0xff]
                %283 = vst [vmem:[%s149 + $0x210] sm:$0xff] %v282
                %v284 = vld [vmem:[%s148 + $0x818] sm:$0xff]
                %285 = vst [vmem:[%s149 + $0x218] sm:$0xff] %v284
                %v286 = vld [vmem:[%s148 + $0x820] sm:$0xff]
                %287 = vst [vmem:[%s149 + $0x220] sm:$0xff] %v286
                %v288 = vld [vmem:[%s148 + $0x828] sm:$0xff]
                %289 = vst [vmem:[%s149 + $0x228] sm:$0xff] %v288
                %v290 = vld [vmem:[%s148 + $0x830] sm:$0xff]
                %291 = vst [vmem:[%s149 + $0x230] sm:$0xff] %v290
                %v292 = vld [vmem:[%s148 + $0x838] sm:$0xff]
                %293 = vst [vmem:[%s149 + $0x238] sm:$0xff] %v292
                %v294 = vld [vmem:[%s148 + $0x900] sm:$0xff]
                %295 = vst [vmem:[%s149 + $0x240] sm:$0xff] %v294
                %v296 = vld [vmem:[%s148 + $0x908] sm:$0xff]
                %297 = vst [vmem:[%s149 + $0x248] sm:$0xff] %v296
                %v298 = vld [vmem:[%s148 + $0x910] sm:$0xff]
                %299 = vst [vmem:[%s149 + $0x250] sm:$0xff] %v298
                %v300 = vld [vmem:[%s148 + $0x918] sm:$0xff]
                %301 = vst [vmem:[%s149 + $0x258] sm:$0xff] %v300
                %v302 = vld [vmem:[%s148 + $0x920] sm:$0xff]
                %303 = vst [vmem:[%s149 + $0x260] sm:$0xff] %v302
                %v304 = vld [vmem:[%s148 + $0x928] sm:$0xff]
                %305 = vst [vmem:[%s149 + $0x268] sm:$0xff] %v304
                %v306 = vld [vmem:[%s148 + $0x930] sm:$0xff]
                %307 = vst [vmem:[%s149 + $0x270] sm:$0xff] %v306
                %v308 = vld [vmem:[%s148 + $0x938] sm:$0xff]
                %309 = vst [vmem:[%s149 + $0x278] sm:$0xff] %v308
                %v310 = vld [vmem:[%s148 + $0xa00] sm:$0xff]
                %311 = vst [vmem:[%s149 + $0x280] sm:$0xff] %v310
                %v312 = vld [vmem:[%s148 + $0xa08] sm:$0xff]
                %313 = vst [vmem:[%s149 + $0x288] sm:$0xff] %v312
                %v314 = vld [vmem:[%s148 + $0xa10] sm:$0xff]
                %315 = vst [vmem:[%s149 + $0x290] sm:$0xff] %v314
                %v316 = vld [vmem:[%s148 + $0xa18] sm:$0xff]
                %317 = vst [vmem:[%s149 + $0x298] sm:$0xff] %v316
                %v318 = vld [vmem:[%s148 + $0xa20] sm:$0xff]
                %319 = vst [vmem:[%s149 + $0x2a0] sm:$0xff] %v318
                %v320 = vld [vmem:[%s148 + $0xa28] sm:$0xff]
                %321 = vst [vmem:[%s149 + $0x2a8] sm:$0xff] %v320
                %v322 = vld [vmem:[%s148 + $0xa30] sm:$0xff]
                %323 = vst [vmem:[%s149 + $0x2b0] sm:$0xff] %v322
                %v324 = vld [vmem:[%s148 + $0xa38] sm:$0xff]
                %325 = vst [vmem:[%s149 + $0x2b8] sm:$0xff] %v324
                %v326 = vld [vmem:[%s148 + $0xb00] sm:$0xff]
                %327 = vst [vmem:[%s149 + $0x2c0] sm:$0xff] %v326
                %v328 = vld [vmem:[%s148 + $0xb08] sm:$0xff]
                %329 = vst [vmem:[%s149 + $0x2c8] sm:$0xff] %v328
                %v330 = vld [vmem:[%s148 + $0xb10] sm:$0xff]
                %331 = vst [vmem:[%s149 + $0x2d0] sm:$0xff] %v330
                %v332 = vld [vmem:[%s148 + $0xb18] sm:$0xff]
                %333 = vst [vmem:[%s149 + $0x2d8] sm:$0xff] %v332
                %v334 = vld [vmem:[%s148 + $0xb20] sm:$0xff]
                %335 = vst [vmem:[%s149 + $0x2e0] sm:$0xff] %v334
                %v336 = vld [vmem:[%s148 + $0xb28] sm:$0xff]
                %337 = vst [vmem:[%s149 + $0x2e8] sm:$0xff] %v336
                %v338 = vld [vmem:[%s148 + $0xb30] sm:$0xff]
                %339 = vst [vmem:[%s149 + $0x2f0] sm:$0xff] %v338
                %v340 = vld [vmem:[%s148 + $0xb38] sm:$0xff]
                %341 = vst [vmem:[%s149 + $0x2f8] sm:$0xff] %v340
                %v342 = vld [vmem:[%s148 + $0xc00] sm:$0xff]
                %343 = vst [vmem:[%s149 + $0x300] sm:$0xff] %v342
                %v344 = vld [vmem:[%s148 + $0xc08] sm:$0xff]
                %345 = vst [vmem:[%s149 + $0x308] sm:$0xff] %v344
                %v346 = vld [vmem:[%s148 + $0xc10] sm:$0xff]
                %347 = vst [vmem:[%s149 + $0x310] sm:$0xff] %v346
                %v348 = vld [vmem:[%s148 + $0xc18] sm:$0xff]
                %349 = vst [vmem:[%s149 + $0x318] sm:$0xff] %v348
                %v350 = vld [vmem:[%s148 + $0xc20] sm:$0xff]
                %351 = vst [vmem:[%s149 + $0x320] sm:$0xff] %v350
                %v352 = vld [vmem:[%s148 + $0xc28] sm:$0xff]
                %353 = vst [vmem:[%s149 + $0x328] sm:$0xff] %v352
                %v354 = vld [vmem:[%s148 + $0xc30] sm:$0xff]
                %355 = vst [vmem:[%s149 + $0x330] sm:$0xff] %v354
                %v356 = vld [vmem:[%s148 + $0xc38] sm:$0xff]
                %357 = vst [vmem:[%s149 + $0x338] sm:$0xff] %v356
                %v358 = vld [vmem:[%s148 + $0xd00] sm:$0xff]
                %359 = vst [vmem:[%s149 + $0x340] sm:$0xff] %v358
                %v360 = vld [vmem:[%s148 + $0xd08] sm:$0xff]
                %361 = vst [vmem:[%s149 + $0x348] sm:$0xff] %v360
                %v362 = vld [vmem:[%s148 + $0xd10] sm:$0xff]
                %363 = vst [vmem:[%s149 + $0x350] sm:$0xff] %v362
                %v364 = vld [vmem:[%s148 + $0xd18] sm:$0xff]
                %365 = vst [vmem:[%s149 + $0x358] sm:$0xff] %v364
                %v366 = vld [vmem:[%s148 + $0xd20] sm:$0xff]
                %367 = vst [vmem:[%s149 + $0x360] sm:$0xff] %v366
                %v368 = vld [vmem:[%s148 + $0xd28] sm:$0xff]
                %369 = vst [vmem:[%s149 + $0x368] sm:$0xff] %v368
                %v370 = vld [vmem:[%s148 + $0xd30] sm:$0xff]
                %371 = vst [vmem:[%s149 + $0x370] sm:$0xff] %v370
                %v372 = vld [vmem:[%s148 + $0xd38] sm:$0xff]
                %373 = vst [vmem:[%s149 + $0x378] sm:$0xff] %v372
                %v374 = vld [vmem:[%s148 + $0xe00] sm:$0xff]
                %375 = vst [vmem:[%s149 + $0x380] sm:$0xff] %v374
                %v376 = vld [vmem:[%s148 + $0xe08] sm:$0xff]
                %377 = vst [vmem:[%s149 + $0x388] sm:$0xff] %v376
                %v378 = vld [vmem:[%s148 + $0xe10] sm:$0xff]
                %379 = vst [vmem:[%s149 + $0x390] sm:$0xff] %v378
                %v380 = vld [vmem:[%s148 + $0xe18] sm:$0xff]
                %381 = vst [vmem:[%s149 + $0x398] sm:$0xff] %v380
                %v382 = vld [vmem:[%s148 + $0xe20] sm:$0xff]
                %383 = vst [vmem:[%s149 + $0x3a0] sm:$0xff] %v382
                %v384 = vld [vmem:[%s148 + $0xe28] sm:$0xff]
                %385 = vst [vmem:[%s149 + $0x3a8] sm:$0xff] %v384
                %v386 = vld [vmem:[%s148 + $0xe30] sm:$0xff]
                %387 = vst [vmem:[%s149 + $0x3b0] sm:$0xff] %v386
                %v388 = vld [vmem:[%s148 + $0xe38] sm:$0xff]
                %389 = vst [vmem:[%s149 + $0x3b8] sm:$0xff] %v388
                %v390 = vld [vmem:[%s148 + $0xf00] sm:$0xff]
                %391 = vst [vmem:[%s149 + $0x3c0] sm:$0xff] %v390
                %v392 = vld [vmem:[%s148 + $0xf08] sm:$0xff]
                %393 = vst [vmem:[%s149 + $0x3c8] sm:$0xff] %v392
                %v394 = vld [vmem:[%s148 + $0xf10] sm:$0xff]
                %395 = vst [vmem:[%s149 + $0x3d0] sm:$0xff] %v394
                %v396 = vld [vmem:[%s148 + $0xf18] sm:$0xff]
                %397 = vst [vmem:[%s149 + $0x3d8] sm:$0xff] %v396
                %v398 = vld [vmem:[%s148 + $0xf20] sm:$0xff]
                %399 = vst [vmem:[%s149 + $0x3e0] sm:$0xff] %v398
                %v400 = vld [vmem:[%s148 + $0xf28] sm:$0xff]
                %401 = vst [vmem:[%s149 + $0x3e8] sm:$0xff] %v400
                %v402 = vld [vmem:[%s148 + $0xf30] sm:$0xff]
                %403 = vst [vmem:[%s149 + $0x3f0] sm:$0xff] %v402
                %v404 = vld [vmem:[%s148 + $0xf38] sm:$0xff]
                %405 = vst [vmem:[%s149 + $0x3f8] sm:$0xff] %v404
                %v406 = vld [vmem:[%s148 + $0x1000] sm:$0xff]
                %407 = vst [vmem:[%s149 + $0x400] sm:$0xff] %v406
                %v408 = vld [vmem:[%s148 + $0x1008] sm:$0xff]
                %409 = vst [vmem:[%s149 + $0x408] sm:$0xff] %v408
                %v410 = vld [vmem:[%s148 + $0x1010] sm:$0xff]
                %411 = vst [vmem:[%s149 + $0x410] sm:$0xff] %v410
                %v412 = vld [vmem:[%s148 + $0x1018] sm:$0xff]
                %413 = vst [vmem:[%s149 + $0x418] sm:$0xff] %v412
                %v414 = vld [vmem:[%s148 + $0x1020] sm:$0xff]
                %415 = vst [vmem:[%s149 + $0x420] sm:$0xff] %v414
                %v416 = vld [vmem:[%s148 + $0x1028] sm:$0xff]
                %417 = vst [vmem:[%s149 + $0x428] sm:$0xff] %v416
                %v418 = vld [vmem:[%s148 + $0x1030] sm:$0xff]
                %419 = vst [vmem:[%s149 + $0x430] sm:$0xff] %v418
                %v420 = vld [vmem:[%s148 + $0x1038] sm:$0xff]
                %421 = vst [vmem:[%s149 + $0x438] sm:$0xff] %v420
                %v422 = vld [vmem:[%s148 + $0x1100] sm:$0xff]
                %423 = vst [vmem:[%s149 + $0x440] sm:$0xff] %v422
                %v424 = vld [vmem:[%s148 + $0x1108] sm:$0xff]
                %425 = vst [vmem:[%s149 + $0x448] sm:$0xff] %v424
                %v426 = vld [vmem:[%s148 + $0x1110] sm:$0xff]
                %427 = vst [vmem:[%s149 + $0x450] sm:$0xff] %v426
                %v428 = vld [vmem:[%s148 + $0x1118] sm:$0xff]
                %429 = vst [vmem:[%s149 + $0x458] sm:$0xff] %v428
                %v430 = vld [vmem:[%s148 + $0x1120] sm:$0xff]
                %431 = vst [vmem:[%s149 + $0x460] sm:$0xff] %v430
                %v432 = vld [vmem:[%s148 + $0x1128] sm:$0xff]
                %433 = vst [vmem:[%s149 + $0x468] sm:$0xff] %v432
                %v434 = vld [vmem:[%s148 + $0x1130] sm:$0xff]
                %435 = vst [vmem:[%s149 + $0x470] sm:$0xff] %v434
                %v436 = vld [vmem:[%s148 + $0x1138] sm:$0xff]
                %437 = vst [vmem:[%s149 + $0x478] sm:$0xff] %v436
                %v438 = vld [vmem:[%s148 + $0x1200] sm:$0xff]
                %439 = vst [vmem:[%s149 + $0x480] sm:$0xff] %v438
                %v440 = vld [vmem:[%s148 + $0x1208] sm:$0xff]
                %441 = vst [vmem:[%s149 + $0x488] sm:$0xff] %v440
                %v442 = vld [vmem:[%s148 + $0x1210] sm:$0xff]
                %443 = vst [vmem:[%s149 + $0x490] sm:$0xff] %v442
                %v444 = vld [vmem:[%s148 + $0x1218] sm:$0xff]
                %445 = vst [vmem:[%s149 + $0x498] sm:$0xff] %v444
                %v446 = vld [vmem:[%s148 + $0x1220] sm:$0xff]
                %447 = vst [vmem:[%s149 + $0x4a0] sm:$0xff] %v446
                %v448 = vld [vmem:[%s148 + $0x1228] sm:$0xff]
                %449 = vst [vmem:[%s149 + $0x4a8] sm:$0xff] %v448
                %v450 = vld [vmem:[%s148 + $0x1230] sm:$0xff]
                %451 = vst [vmem:[%s149 + $0x4b0] sm:$0xff] %v450
                %v452 = vld [vmem:[%s148 + $0x1238] sm:$0xff]
                %453 = vst [vmem:[%s149 + $0x4b8] sm:$0xff] %v452
                %v454 = vld [vmem:[%s148 + $0x1300] sm:$0xff]
                %455 = vst [vmem:[%s149 + $0x4c0] sm:$0xff] %v454
                %v456 = vld [vmem:[%s148 + $0x1308] sm:$0xff]
                %457 = vst [vmem:[%s149 + $0x4c8] sm:$0xff] %v456
                %v458 = vld [vmem:[%s148 + $0x1310] sm:$0xff]
                %459 = vst [vmem:[%s149 + $0x4d0] sm:$0xff] %v458
                %v460 = vld [vmem:[%s148 + $0x1318] sm:$0xff]
                %461 = vst [vmem:[%s149 + $0x4d8] sm:$0xff] %v460
                %v462 = vld [vmem:[%s148 + $0x1320] sm:$0xff]
                %463 = vst [vmem:[%s149 + $0x4e0] sm:$0xff] %v462
                %v464 = vld [vmem:[%s148 + $0x1328] sm:$0xff]
                %465 = vst [vmem:[%s149 + $0x4e8] sm:$0xff] %v464
                %v466 = vld [vmem:[%s148 + $0x1330] sm:$0xff]
                %467 = vst [vmem:[%s149 + $0x4f0] sm:$0xff] %v466
                %v468 = vld [vmem:[%s148 + $0x1338] sm:$0xff]
                %469 = vst [vmem:[%s149 + $0x4f8] sm:$0xff] %v468
                %v470 = vld [vmem:[%s148 + $0x1400] sm:$0xff]
                %471 = vst [vmem:[%s149 + $0x500] sm:$0xff] %v470
                %v472 = vld [vmem:[%s148 + $0x1408] sm:$0xff]
                %473 = vst [vmem:[%s149 + $0x508] sm:$0xff] %v472
                %v474 = vld [vmem:[%s148 + $0x1410] sm:$0xff]
                %475 = vst [vmem:[%s149 + $0x510] sm:$0xff] %v474
                %v476 = vld [vmem:[%s148 + $0x1418] sm:$0xff]
                %477 = vst [vmem:[%s149 + $0x518] sm:$0xff] %v476
                %v478 = vld [vmem:[%s148 + $0x1420] sm:$0xff]
                %479 = vst [vmem:[%s149 + $0x520] sm:$0xff] %v478
                %v480 = vld [vmem:[%s148 + $0x1428] sm:$0xff]
                %481 = vst [vmem:[%s149 + $0x528] sm:$0xff] %v480
                %v482 = vld [vmem:[%s148 + $0x1430] sm:$0xff]
                %483 = vst [vmem:[%s149 + $0x530] sm:$0xff] %v482
                %v484 = vld [vmem:[%s148 + $0x1438] sm:$0xff]
                %485 = vst [vmem:[%s149 + $0x538] sm:$0xff] %v484
                %v486 = vld [vmem:[%s148 + $0x1500] sm:$0xff]
                %487 = vst [vmem:[%s149 + $0x540] sm:$0xff] %v486
                %v488 = vld [vmem:[%s148 + $0x1508] sm:$0xff]
                %489 = vst [vmem:[%s149 + $0x548] sm:$0xff] %v488
                %v490 = vld [vmem:[%s148 + $0x1510] sm:$0xff]
                %491 = vst [vmem:[%s149 + $0x550] sm:$0xff] %v490
                %v492 = vld [vmem:[%s148 + $0x1518] sm:$0xff]
                %493 = vst [vmem:[%s149 + $0x558] sm:$0xff] %v492
                %v494 = vld [vmem:[%s148 + $0x1520] sm:$0xff]
                %495 = vst [vmem:[%s149 + $0x560] sm:$0xff] %v494
                %v496 = vld [vmem:[%s148 + $0x1528] sm:$0xff]
                %497 = vst [vmem:[%s149 + $0x568] sm:$0xff] %v496
                %v498 = vld [vmem:[%s148 + $0x1530] sm:$0xff]
                %499 = vst [vmem:[%s149 + $0x570] sm:$0xff] %v498
                %v500 = vld [vmem:[%s148 + $0x1538] sm:$0xff]
                %501 = vst [vmem:[%s149 + $0x578] sm:$0xff] %v500
                %v502 = vld [vmem:[%s148 + $0x1600] sm:$0xff]
                %503 = vst [vmem:[%s149 + $0x580] sm:$0xff] %v502
                %v504 = vld [vmem:[%s148 + $0x1608] sm:$0xff]
                %505 = vst [vmem:[%s149 + $0x588] sm:$0xff] %v504
                %v506 = vld [vmem:[%s148 + $0x1610] sm:$0xff]
                %507 = vst [vmem:[%s149 + $0x590] sm:$0xff] %v506
                %v508 = vld [vmem:[%s148 + $0x1618] sm:$0xff]
                %509 = vst [vmem:[%s149 + $0x598] sm:$0xff] %v508
                %v510 = vld [vmem:[%s148 + $0x1620] sm:$0xff]
                %511 = vst [vmem:[%s149 + $0x5a0] sm:$0xff] %v510
                %v512 = vld [vmem:[%s148 + $0x1628] sm:$0xff]
                %513 = vst [vmem:[%s149 + $0x5a8] sm:$0xff] %v512
                %v514 = vld [vmem:[%s148 + $0x1630] sm:$0xff]
                %515 = vst [vmem:[%s149 + $0x5b0] sm:$0xff] %v514
                %v516 = vld [vmem:[%s148 + $0x1638] sm:$0xff]
                %517 = vst [vmem:[%s149 + $0x5b8] sm:$0xff] %v516
                %v518 = vld [vmem:[%s148 + $0x1700] sm:$0xff]
                %519 = vst [vmem:[%s149 + $0x5c0] sm:$0xff] %v518
                %v520 = vld [vmem:[%s148 + $0x1708] sm:$0xff]
                %521 = vst [vmem:[%s149 + $0x5c8] sm:$0xff] %v520
                %v522 = vld [vmem:[%s148 + $0x1710] sm:$0xff]
                %523 = vst [vmem:[%s149 + $0x5d0] sm:$0xff] %v522
                %v524 = vld [vmem:[%s148 + $0x1718] sm:$0xff]
                %525 = vst [vmem:[%s149 + $0x5d8] sm:$0xff] %v524
                %v526 = vld [vmem:[%s148 + $0x1720] sm:$0xff]
                %527 = vst [vmem:[%s149 + $0x5e0] sm:$0xff] %v526
                %v528 = vld [vmem:[%s148 + $0x1728] sm:$0xff]
                %529 = vst [vmem:[%s149 + $0x5e8] sm:$0xff] %v528
                %v530 = vld [vmem:[%s148 + $0x1730] sm:$0xff]
                %531 = vst [vmem:[%s149 + $0x5f0] sm:$0xff] %v530
                %v532 = vld [vmem:[%s148 + $0x1738] sm:$0xff]
                %533 = vst [vmem:[%s149 + $0x5f8] sm:$0xff] %v532
                %v534 = vld [vmem:[%s148 + $0x1800] sm:$0xff]
                %535 = vst [vmem:[%s149 + $0x600] sm:$0xff] %v534
                %v536 = vld [vmem:[%s148 + $0x1808] sm:$0xff]
                %537 = vst [vmem:[%s149 + $0x608] sm:$0xff] %v536
                %v538 = vld [vmem:[%s148 + $0x1810] sm:$0xff]
                %539 = vst [vmem:[%s149 + $0x610] sm:$0xff] %v538
                %v540 = vld [vmem:[%s148 + $0x1818] sm:$0xff]
                %541 = vst [vmem:[%s149 + $0x618] sm:$0xff] %v540
                %v542 = vld [vmem:[%s148 + $0x1820] sm:$0xff]
                %543 = vst [vmem:[%s149 + $0x620] sm:$0xff] %v542
                %v544 = vld [vmem:[%s148 + $0x1828] sm:$0xff]
                %545 = vst [vmem:[%s149 + $0x628] sm:$0xff] %v544
                %v546 = vld [vmem:[%s148 + $0x1830] sm:$0xff]
                %547 = vst [vmem:[%s149 + $0x630] sm:$0xff] %v546
                %v548 = vld [vmem:[%s148 + $0x1838] sm:$0xff]
                %549 = vst [vmem:[%s149 + $0x638] sm:$0xff] %v548
                %v550 = vld [vmem:[%s148 + $0x1900] sm:$0xff]
                %551 = vst [vmem:[%s149 + $0x640] sm:$0xff] %v550
                %v552 = vld [vmem:[%s148 + $0x1908] sm:$0xff]
                %553 = vst [vmem:[%s149 + $0x648] sm:$0xff] %v552
                %v554 = vld [vmem:[%s148 + $0x1910] sm:$0xff]
                %555 = vst [vmem:[%s149 + $0x650] sm:$0xff] %v554
                %v556 = vld [vmem:[%s148 + $0x1918] sm:$0xff]
                %557 = vst [vmem:[%s149 + $0x658] sm:$0xff] %v556
                %v558 = vld [vmem:[%s148 + $0x1920] sm:$0xff]
                %559 = vst [vmem:[%s149 + $0x660] sm:$0xff] %v558
                %v560 = vld [vmem:[%s148 + $0x1928] sm:$0xff]
                %561 = vst [vmem:[%s149 + $0x668] sm:$0xff] %v560
                %v562 = vld [vmem:[%s148 + $0x1930] sm:$0xff]
                %563 = vst [vmem:[%s149 + $0x670] sm:$0xff] %v562
                %v564 = vld [vmem:[%s148 + $0x1938] sm:$0xff]
                %565 = vst [vmem:[%s149 + $0x678] sm:$0xff] %v564
                %v566 = vld [vmem:[%s148 + $0x1a00] sm:$0xff]
                %567 = vst [vmem:[%s149 + $0x680] sm:$0xff] %v566
                %v568 = vld [vmem:[%s148 + $0x1a08] sm:$0xff]
                %569 = vst [vmem:[%s149 + $0x688] sm:$0xff] %v568
                %v570 = vld [vmem:[%s148 + $0x1a10] sm:$0xff]
                %571 = vst [vmem:[%s149 + $0x690] sm:$0xff] %v570
                %v572 = vld [vmem:[%s148 + $0x1a18] sm:$0xff]
                %573 = vst [vmem:[%s149 + $0x698] sm:$0xff] %v572
                %v574 = vld [vmem:[%s148 + $0x1a20] sm:$0xff]
                %575 = vst [vmem:[%s149 + $0x6a0] sm:$0xff] %v574
                %v576 = vld [vmem:[%s148 + $0x1a28] sm:$0xff]
                %577 = vst [vmem:[%s149 + $0x6a8] sm:$0xff] %v576
                %v578 = vld [vmem:[%s148 + $0x1a30] sm:$0xff]
                %579 = vst [vmem:[%s149 + $0x6b0] sm:$0xff] %v578
                %v580 = vld [vmem:[%s148 + $0x1a38] sm:$0xff]
                %581 = vst [vmem:[%s149 + $0x6b8] sm:$0xff] %v580
              $region41: #{tsdf_coder_forward.17} parent=35 // loop_footer
                %s147 = sadd.s32 1, %s143
              $region42: #{tsdf_coder_forward.17} parent=35 // loop_footer_branch
                %142 = sbr.rel target = $region38
              $region43: #{tsdf_coder_forward.17} parent=35 // loop_exit
                _
            $region36: #{tsdf_coder_forward.17} parent=31 // pred_fallthru
              _
            // Predicated region
            $region44: #{tsdf_coder_forward.17} parent=31 // pred_check
              _
            $region45: #{tsdf_coder_forward.17} parent=31 // pred_check_branch
              %583 = sbr.rel target = $region47
            $region46: #{tsdf_coder_forward.17} parent=31 // pred_region
              _
            $region47: #{tsdf_coder_forward.17} parent=31 // pred_fallthru
              _
          $region32: #{tsdf_coder_forward.17} parent=27 // pred_fallthru
            _
          %584 = vnop
        $region28: #{tsdf_coder_forward.17} parent=23 // pred_fallthru
          _
      $region24: #{tsdf_coder_forward.17} parent=5 // pred_fallthru
        _
      %p585 = scmp.le.s32.totalorder 1, %s9
      %p586 = scmp.lt.s32.totalorder %s9, 5
      %p587 = pnand %p585, %p586
      %p588 = pneg %p587
      // Predicated region
      $region48: #{tsdf_coder_forward.17} parent=5 // pred_check
        _
      $region49: #{tsdf_coder_forward.17} parent=5 // pred_check_branch
        %590 = sbr.rel (%p587) target = $region51
      $region50: #{tsdf_coder_forward.17} parent=5 // pred_region
        %s591 = ssub.s32 %s9, 1
        %s592 = sand.u32 %s43, 1
        %s593 = sand.u32 %s43, 1
        %s594 = smul.addr %s593, 1728
        %s595 = scalar_lea.vmem [#allocation2], %s594
        // Predicated region
        $region52: #{tsdf_coder_forward.17} parent=50 // pred_check
          %p596 = pneg %p56
        $region53: #{tsdf_coder_forward.17} parent=50 // pred_check_branch
          %598 = sbr.rel (%p596) target = $region55
        $region54: #{tsdf_coder_forward.17} parent=50 // pred_region
          _
        $region55: #{tsdf_coder_forward.17} parent=50 // pred_fallthru
          _
        %p599 = pneg %p30
        %p600 = pneg %p27
        %s601 = sand.u32 %s43, 1
        %s602 = sand.u32 %s43, 1
        %s603 = smul.addr %s602, 1728
        %s604 = scalar_lea.vmem [#allocation2], %s603
        %p605 = pneg %p56
        %p606 = pneg %p53
        %p607 = pneg %p77
        %p608 = pneg %p74
        %p609 = pneg %p103
        %p610 = pneg %p100
        %s611 = smul.u32 16, %s14
        %p612 = scmp.lt.s32.totalorder %s611, 63
        %s613 = scalar_select %p612, %s611, 63
        %s614 = smul.addr %s613, 2
        %s615 = scalar_lea.vmem %s3, %s614
        %s616 = smul.u32 16, %s14
        %s617 = smul.u32 16, %s14
        %p618 = scmp.lt.s32.totalorder %s617, 63
        %s619 = scalar_select %p618, %s617, 63
        %s620 = smul.addr %s619, 2
        %s621 = scalar_lea.vmem %s3, %s620
        %s622 = smul.u32 16, %s14
        %v624 = vld [vmem:[%s0] sm:$0x3]
        %v625 = vld [vmem:[%s595] sm:$0xff]
        %v626 = vld [vmem:[%s595 + $0x8] sm:$0xff]
        %v627 = vld [vmem:[%s595 + $0x10] sm:$0xff]
        %v628 = vld [vmem:[%s595 + $0x18] sm:$0xff]
        %v629 = vld [vmem:[%s595 + $0x20] sm:$0xff]
        %v630 = vld [vmem:[%s595 + $0x28] sm:$0xff]
        %v631 = vld [vmem:[%s595 + $0x30] sm:$0xff]
        %v632 = vld [vmem:[%s595 + $0x38] sm:$0xff]
        %v633 = vld [vmem:[%s595 + $0x40] sm:$0xff]
        %v634 = vld [vmem:[%s595 + $0x48] sm:$0xff]
        %v635 = vld [vmem:[%s595 + $0x50] sm:$0xff]
        %v636 = vld [vmem:[%s595 + $0x58] sm:$0xff]
        %v637 = vld [vmem:[%s595 + $0x60] sm:$0xff]
        %v638 = vld [vmem:[%s595 + $0x68] sm:$0xff]
        %v639 = vld [vmem:[%s595 + $0x70] sm:$0xff]
        %v640 = vld [vmem:[%s595 + $0x78] sm:$0xff]
        %v641 = vld [vmem:[%s595 + $0x80] sm:$0xff]
        %v642 = vld [vmem:[%s595 + $0x88] sm:$0xff]
        %v643 = vld [vmem:[%s595 + $0x90] sm:$0xff]
        %v644 = vld [vmem:[%s595 + $0x98] sm:$0xff]
        %v645 = vld [vmem:[%s595 + $0xa0] sm:$0xff]
        %v646 = vld [vmem:[%s595 + $0xa8] sm:$0xff]
        %v647 = vld [vmem:[%s595 + $0xb0] sm:$0xff]
        %v648 = vld [vmem:[%s595 + $0xb8] sm:$0xff]
        %v649 = vld [vmem:[%s595 + $0xc0] sm:$0xff]
        %v650 = vld [vmem:[%s595 + $0xc8] sm:$0xff]
        %v651 = vld [vmem:[%s595 + $0xd0] sm:$0xff]
        %v652 = vld [vmem:[%s595 + $0xd8] sm:$0xff]
        %v653 = vld [vmem:[%s595 + $0xe0] sm:$0xff]
        %v654 = vld [vmem:[%s595 + $0xe8] sm:$0xff]
        %v655 = vld [vmem:[%s595 + $0xf0] sm:$0xff]
        %v656 = vld [vmem:[%s595 + $0xf8] sm:$0xff]
        %v657 = vld [vmem:[%s595 + $0x100] sm:$0xff]
        %v658 = vld [vmem:[%s595 + $0x108] sm:$0xff]
        %v659 = vld [vmem:[%s595 + $0x110] sm:$0xff]
        %v660 = vld [vmem:[%s595 + $0x118] sm:$0xff]
        %v661 = vld [vmem:[%s595 + $0x120] sm:$0xff]
        %v662 = vld [vmem:[%s595 + $0x128] sm:$0xff]
        %v663 = vld [vmem:[%s595 + $0x130] sm:$0xff]
        %v664 = vld [vmem:[%s595 + $0x138] sm:$0xff]
        %v665 = vld [vmem:[%s595 + $0x140] sm:$0xff]
        %v666 = vld [vmem:[%s595 + $0x148] sm:$0xff]
        %v667 = vld [vmem:[%s595 + $0x150] sm:$0xff]
        %v668 = vld [vmem:[%s595 + $0x158] sm:$0xff]
        %v669 = vld [vmem:[%s595 + $0x160] sm:$0xff]
        %v670 = vld [vmem:[%s595 + $0x168] sm:$0xff]
        %v671 = vld [vmem:[%s595 + $0x170] sm:$0xff]
        %v672 = vld [vmem:[%s595 + $0x178] sm:$0xff]
        %v673 = vld [vmem:[%s595 + $0x180] sm:$0xff]
        %v674 = vld [vmem:[%s595 + $0x188] sm:$0xff]
        %v675 = vld [vmem:[%s595 + $0x190] sm:$0xff]
        %v676 = vld [vmem:[%s595 + $0x198] sm:$0xff]
        %v677 = vld [vmem:[%s595 + $0x1a0] sm:$0xff]
        %v678 = vld [vmem:[%s595 + $0x1a8] sm:$0xff]
        %v679 = vld [vmem:[%s595 + $0x1b0] sm:$0xff]
        %v680 = vld [vmem:[%s595 + $0x1b8] sm:$0xff]
        %v681 = vld [vmem:[%s595 + $0x1c0] sm:$0xff]
        %v682 = vld [vmem:[%s595 + $0x1c8] sm:$0xff]
        %v683 = vld [vmem:[%s595 + $0x1d0] sm:$0xff]
        %v684 = vld [vmem:[%s595 + $0x1d8] sm:$0xff]
        %v685 = vld [vmem:[%s595 + $0x1e0] sm:$0xff]
        %v686 = vld [vmem:[%s595 + $0x1e8] sm:$0xff]
        %v687 = vld [vmem:[%s595 + $0x1f0] sm:$0xff]
        %v688 = vld [vmem:[%s595 + $0x1f8] sm:$0xff]
        %v689 = vld [vmem:[%s595 + $0x200] sm:$0xff]
        %v690 = vld [vmem:[%s595 + $0x208] sm:$0xff]
        %v691 = vld [vmem:[%s595 + $0x210] sm:$0xff]
        %v692 = vld [vmem:[%s595 + $0x218] sm:$0xff]
        %v693 = vld [vmem:[%s595 + $0x220] sm:$0xff]
        %v694 = vld [vmem:[%s595 + $0x228] sm:$0xff]
        %v695 = vld [vmem:[%s595 + $0x230] sm:$0xff]
        %v696 = vld [vmem:[%s595 + $0x238] sm:$0xff]
        %v697 = vld [vmem:[%s595 + $0x240] sm:$0xff]
        %v698 = vld [vmem:[%s595 + $0x248] sm:$0xff]
        %v699 = vld [vmem:[%s595 + $0x250] sm:$0xff]
        %v700 = vld [vmem:[%s595 + $0x258] sm:$0xff]
        %v701 = vld [vmem:[%s595 + $0x260] sm:$0xff]
        %v702 = vld [vmem:[%s595 + $0x268] sm:$0xff]
        %v703 = vld [vmem:[%s595 + $0x270] sm:$0xff]
        %v704 = vld [vmem:[%s595 + $0x278] sm:$0xff]
        %v705 = vld [vmem:[%s595 + $0x280] sm:$0xff]
        %v706 = vld [vmem:[%s595 + $0x288] sm:$0xff]
        %v707 = vld [vmem:[%s595 + $0x290] sm:$0xff]
        %v708 = vld [vmem:[%s595 + $0x298] sm:$0xff]
        %v709 = vld [vmem:[%s595 + $0x2a0] sm:$0xff]
        %v710 = vld [vmem:[%s595 + $0x2a8] sm:$0xff]
        %v711 = vld [vmem:[%s595 + $0x2b0] sm:$0xff]
        %v712 = vld [vmem:[%s595 + $0x2b8] sm:$0xff]
        %v713 = vld [vmem:[%s595 + $0x2c0] sm:$0xff]
        %v714 = vld [vmem:[%s595 + $0x2c8] sm:$0xff]
        %v715 = vld [vmem:[%s595 + $0x2d0] sm:$0xff]
        %v716 = vld [vmem:[%s595 + $0x2d8] sm:$0xff]
        %v717 = vld [vmem:[%s595 + $0x2e0] sm:$0xff]
        %v718 = vld [vmem:[%s595 + $0x2e8] sm:$0xff]
        %v719 = vld [vmem:[%s595 + $0x2f0] sm:$0xff]
        %v720 = vld [vmem:[%s595 + $0x2f8] sm:$0xff]
        %v721 = vld [vmem:[%s595 + $0x300] sm:$0xff]
        %v722 = vld [vmem:[%s595 + $0x308] sm:$0xff]
        %v723 = vld [vmem:[%s595 + $0x310] sm:$0xff]
        %v724 = vld [vmem:[%s595 + $0x318] sm:$0xff]
        %v725 = vld [vmem:[%s595 + $0x320] sm:$0xff]
        %v726 = vld [vmem:[%s595 + $0x328] sm:$0xff]
        %v727 = vld [vmem:[%s595 + $0x330] sm:$0xff]
        %v728 = vld [vmem:[%s595 + $0x338] sm:$0xff]
        %v729 = vld [vmem:[%s595 + $0x340] sm:$0xff]
        %v730 = vld [vmem:[%s595 + $0x348] sm:$0xff]
        %v731 = vld [vmem:[%s595 + $0x350] sm:$0xff]
        %v732 = vld [vmem:[%s595 + $0x358] sm:$0xff]
        %v733 = vld [vmem:[%s595 + $0x360] sm:$0xff]
        %v734 = vld [vmem:[%s595 + $0x368] sm:$0xff]
        %v735 = vld [vmem:[%s595 + $0x370] sm:$0xff]
        %v736 = vld [vmem:[%s595 + $0x378] sm:$0xff]
        %v737 = vld [vmem:[%s595 + $0x380] sm:$0xff]
        %v738 = vld [vmem:[%s595 + $0x388] sm:$0xff]
        %v739 = vld [vmem:[%s595 + $0x390] sm:$0xff]
        %v740 = vld [vmem:[%s595 + $0x398] sm:$0xff]
        %v741 = vld [vmem:[%s595 + $0x3a0] sm:$0xff]
        %v742 = vld [vmem:[%s595 + $0x3a8] sm:$0xff]
        %v743 = vld [vmem:[%s595 + $0x3b0] sm:$0xff]
        %v744 = vld [vmem:[%s595 + $0x3b8] sm:$0xff]
        %v745 = vld [vmem:[%s595 + $0x3c0] sm:$0xff]
        %v746 = vld [vmem:[%s595 + $0x3c8] sm:$0xff]
        %v747 = vld [vmem:[%s595 + $0x3d0] sm:$0xff]
        %v748 = vld [vmem:[%s595 + $0x3d8] sm:$0xff]
        %v749 = vld [vmem:[%s595 + $0x3e0] sm:$0xff]
        %v750 = vld [vmem:[%s595 + $0x3e8] sm:$0xff]
        %v751 = vld [vmem:[%s595 + $0x3f0] sm:$0xff]
        %v752 = vld [vmem:[%s595 + $0x3f8] sm:$0xff]
        %v753 = vld [vmem:[%s595 + $0x400] sm:$0xff]
        %v754 = vld [vmem:[%s595 + $0x408] sm:$0xff]
        %v755 = vld [vmem:[%s595 + $0x410] sm:$0xff]
        %v756 = vld [vmem:[%s595 + $0x418] sm:$0xff]
        %v757 = vld [vmem:[%s595 + $0x420] sm:$0xff]
        %v758 = vld [vmem:[%s595 + $0x428] sm:$0xff]
        %v759 = vld [vmem:[%s595 + $0x430] sm:$0xff]
        %v760 = vld [vmem:[%s595 + $0x438] sm:$0xff]
        %v761 = vld [vmem:[%s595 + $0x440] sm:$0xff]
        %v762 = vld [vmem:[%s595 + $0x448] sm:$0xff]
        %v763 = vld [vmem:[%s595 + $0x450] sm:$0xff]
        %v764 = vld [vmem:[%s595 + $0x458] sm:$0xff]
        %v765 = vld [vmem:[%s595 + $0x460] sm:$0xff]
        %v766 = vld [vmem:[%s595 + $0x468] sm:$0xff]
        %v767 = vld [vmem:[%s595 + $0x470] sm:$0xff]
        %v768 = vld [vmem:[%s595 + $0x478] sm:$0xff]
        %v769 = vld [vmem:[%s595 + $0x480] sm:$0xff]
        %v770 = vld [vmem:[%s595 + $0x488] sm:$0xff]
        %v771 = vld [vmem:[%s595 + $0x490] sm:$0xff]
        %v772 = vld [vmem:[%s595 + $0x498] sm:$0xff]
        %v773 = vld [vmem:[%s595 + $0x4a0] sm:$0xff]
        %v774 = vld [vmem:[%s595 + $0x4a8] sm:$0xff]
        %v775 = vld [vmem:[%s595 + $0x4b0] sm:$0xff]
        %v776 = vld [vmem:[%s595 + $0x4b8] sm:$0xff]
        %v777 = vld [vmem:[%s595 + $0x4c0] sm:$0xff]
        %v778 = vld [vmem:[%s595 + $0x4c8] sm:$0xff]
        %v779 = vld [vmem:[%s595 + $0x4d0] sm:$0xff]
        %v780 = vld [vmem:[%s595 + $0x4d8] sm:$0xff]
        %v781 = vld [vmem:[%s595 + $0x4e0] sm:$0xff]
        %v782 = vld [vmem:[%s595 + $0x4e8] sm:$0xff]
        %v783 = vld [vmem:[%s595 + $0x4f0] sm:$0xff]
        %v784 = vld [vmem:[%s595 + $0x4f8] sm:$0xff]
        %v785 = vld [vmem:[%s595 + $0x500] sm:$0xff]
        %v786 = vld [vmem:[%s595 + $0x508] sm:$0xff]
        %v787 = vld [vmem:[%s595 + $0x510] sm:$0xff]
        %v788 = vld [vmem:[%s595 + $0x518] sm:$0xff]
        %v789 = vld [vmem:[%s595 + $0x520] sm:$0xff]
        %v790 = vld [vmem:[%s595 + $0x528] sm:$0xff]
        %v791 = vld [vmem:[%s595 + $0x530] sm:$0xff]
        %v792 = vld [vmem:[%s595 + $0x538] sm:$0xff]
        %v793 = vld [vmem:[%s595 + $0x540] sm:$0xff]
        %v794 = vld [vmem:[%s595 + $0x548] sm:$0xff]
        %v795 = vld [vmem:[%s595 + $0x550] sm:$0xff]
        %v796 = vld [vmem:[%s595 + $0x558] sm:$0xff]
        %v797 = vld [vmem:[%s595 + $0x560] sm:$0xff]
        %v798 = vld [vmem:[%s595 + $0x568] sm:$0xff]
        %v799 = vld [vmem:[%s595 + $0x570] sm:$0xff]
        %v800 = vld [vmem:[%s595 + $0x578] sm:$0xff]
        %v801 = vld [vmem:[%s595 + $0x580] sm:$0xff]
        %v802 = vld [vmem:[%s595 + $0x588] sm:$0xff]
        %v803 = vld [vmem:[%s595 + $0x590] sm:$0xff]
        %v804 = vld [vmem:[%s595 + $0x598] sm:$0xff]
        %v805 = vld [vmem:[%s595 + $0x5a0] sm:$0xff]
        %v806 = vld [vmem:[%s595 + $0x5a8] sm:$0xff]
        %v807 = vld [vmem:[%s595 + $0x5b0] sm:$0xff]
        %v808 = vld [vmem:[%s595 + $0x5b8] sm:$0xff]
        %v809 = vld [vmem:[%s595 + $0x5c0] sm:$0xff]
        %v810 = vld [vmem:[%s595 + $0x5c8] sm:$0xff]
        %v811 = vld [vmem:[%s595 + $0x5d0] sm:$0xff]
        %v812 = vld [vmem:[%s595 + $0x5d8] sm:$0xff]
        %v813 = vld [vmem:[%s595 + $0x5e0] sm:$0xff]
        %v814 = vld [vmem:[%s595 + $0x5e8] sm:$0xff]
        %v815 = vld [vmem:[%s595 + $0x5f0] sm:$0xff]
        %v816 = vld [vmem:[%s595 + $0x5f8] sm:$0xff]
        %v817 = vld [vmem:[%s595 + $0x600] sm:$0xff]
        %v818 = vld [vmem:[%s595 + $0x608] sm:$0xff]
        %v819 = vld [vmem:[%s595 + $0x610] sm:$0xff]
        %v820 = vld [vmem:[%s595 + $0x618] sm:$0xff]
        %v821 = vld [vmem:[%s595 + $0x620] sm:$0xff]
        %v822 = vld [vmem:[%s595 + $0x628] sm:$0xff]
        %v823 = vld [vmem:[%s595 + $0x630] sm:$0xff]
        %v824 = vld [vmem:[%s595 + $0x638] sm:$0xff]
        %v825 = vld [vmem:[%s595 + $0x640] sm:$0xff]
        %v826 = vld [vmem:[%s595 + $0x648] sm:$0xff]
        %v827 = vld [vmem:[%s595 + $0x650] sm:$0xff]
        %v828 = vld [vmem:[%s595 + $0x658] sm:$0xff]
        %v829 = vld [vmem:[%s595 + $0x660] sm:$0xff]
        %v830 = vld [vmem:[%s595 + $0x668] sm:$0xff]
        %v831 = vld [vmem:[%s595 + $0x670] sm:$0xff]
        %v832 = vld [vmem:[%s595 + $0x678] sm:$0xff]
        %v833 = vld [vmem:[%s595 + $0x680] sm:$0xff]
        %v834 = vld [vmem:[%s595 + $0x688] sm:$0xff]
        %v835 = vld [vmem:[%s595 + $0x690] sm:$0xff]
        %v836 = vld [vmem:[%s595 + $0x698] sm:$0xff]
        %v837 = vld [vmem:[%s595 + $0x6a0] sm:$0xff]
        %v838 = vld [vmem:[%s595 + $0x6a8] sm:$0xff]
        %v839 = vld [vmem:[%s595 + $0x6b0] sm:$0xff]
        %v840 = vld [vmem:[%s595 + $0x6b8] sm:$0xff]
        %v841 = vld [vmem:[%s2] sm:$0x3]
        %843 = vset.pattern.permute.xlu0 0
        %844 = vperm.xlu0 %843, %v841
        %v845 = vpop.permute.xlu0 %844
        %v849 = vunpack.c.l.s4 1966171168
        %v850 = vunpack.c.0.s8 %v849
        %v851 = vlaneseq
        %v852 = vshrl.u32 %v851, 7
        %v853 = vsub.s32 %v850, %v852
        %v854 = vrot.slane %v624, %v853
        %v855 = vcombine.high %v854, %v854
        %v857 = vunpack.c.l.s4 1966171168
        %v858 = vunpack.c.0.s8 %v857
        %v859 = vlaneseq
        %v860 = vshrl.u32 %v859, 7
        %v861 = vsub.s32 %v858, %v860
        %v862 = vrot.slane %v854, %v861
        %v864 = vunpack.c.l.s4 1966171168
        %v865 = vunpack.c.0.s8 %v864
        %v866 = vlaneseq
        %v867 = vshrl.u32 %v866, 7
        %v868 = vsub.s32 %v865, %v867
        %v869 = vrot.slane %v855, %v868
        %v1087 = vunpack.c.l.b16 %v625
        %v1088 = vunpack.c.h.b16 %v625
        %v1089 = vunpack.c.l.b16 %v626
        %v1090 = vunpack.c.h.b16 %v626
        %v1091 = vunpack.c.l.b16 %v627
        %v1092 = vunpack.c.h.b16 %v627
        %v1093 = vunpack.c.l.b16 %v628
        %v1094 = vunpack.c.h.b16 %v628
        %v1095 = vunpack.c.l.b16 %v629
        %v1096 = vunpack.c.h.b16 %v629
        %v1097 = vunpack.c.l.b16 %v630
        %v1098 = vunpack.c.h.b16 %v630
        %v1099 = vunpack.c.l.b16 %v631
        %v1100 = vunpack.c.h.b16 %v631
        %v1101 = vunpack.c.l.b16 %v632
        %v1102 = vunpack.c.h.b16 %v632
        %v1103 = vunpack.c.l.b16 %v633
        %v1104 = vunpack.c.h.b16 %v633
        %v1105 = vunpack.c.l.b16 %v634
        %v1106 = vunpack.c.h.b16 %v634
        %v1107 = vunpack.c.l.b16 %v635
        %v1108 = vunpack.c.h.b16 %v635
        %v1109 = vunpack.c.l.b16 %v636
        %v1110 = vunpack.c.h.b16 %v636
        %v1111 = vunpack.c.l.b16 %v637
        %v1112 = vunpack.c.h.b16 %v637
        %v1113 = vunpack.c.l.b16 %v638
        %v1114 = vunpack.c.h.b16 %v638
        %v1115 = vunpack.c.l.b16 %v639
        %v1116 = vunpack.c.h.b16 %v639
        %v1117 = vunpack.c.l.b16 %v640
        %v1118 = vunpack.c.h.b16 %v640
        %v1119 = vunpack.c.l.b16 %v641
        %v1120 = vunpack.c.h.b16 %v641
        %v1121 = vunpack.c.l.b16 %v642
        %v1122 = vunpack.c.h.b16 %v642
        %v1123 = vunpack.c.l.b16 %v643
        %v1124 = vunpack.c.h.b16 %v643
        %v1125 = vunpack.c.l.b16 %v644
        %v1126 = vunpack.c.h.b16 %v644
        %v1127 = vunpack.c.l.b16 %v645
        %v1128 = vunpack.c.h.b16 %v645
        %v1129 = vunpack.c.l.b16 %v646
        %v1130 = vunpack.c.h.b16 %v646
        %v1131 = vunpack.c.l.b16 %v647
        %v1132 = vunpack.c.h.b16 %v647
        %v1133 = vunpack.c.l.b16 %v648
        %v1134 = vunpack.c.h.b16 %v648
        %v1135 = vunpack.c.l.b16 %v649
        %v1136 = vunpack.c.h.b16 %v649
        %v1137 = vunpack.c.l.b16 %v650
        %v1138 = vunpack.c.h.b16 %v650
        %v1139 = vunpack.c.l.b16 %v651
        %v1140 = vunpack.c.h.b16 %v651
        %v1141 = vunpack.c.l.b16 %v652
        %v1142 = vunpack.c.h.b16 %v652
        %v1143 = vunpack.c.l.b16 %v653
        %v1144 = vunpack.c.h.b16 %v653
        %v1145 = vunpack.c.l.b16 %v654
        %v1146 = vunpack.c.h.b16 %v654
        %v1147 = vunpack.c.l.b16 %v655
        %v1148 = vunpack.c.h.b16 %v655
        %v1149 = vunpack.c.l.b16 %v656
        %v1150 = vunpack.c.h.b16 %v656
        %v1151 = vunpack.c.l.b16 %v657
        %v1152 = vunpack.c.h.b16 %v657
        %v1153 = vunpack.c.l.b16 %v658
        %v1154 = vunpack.c.h.b16 %v658
        %v1155 = vunpack.c.l.b16 %v659
        %v1156 = vunpack.c.h.b16 %v659
        %v1157 = vunpack.c.l.b16 %v660
        %v1158 = vunpack.c.h.b16 %v660
        %v1159 = vunpack.c.l.b16 %v661
        %v1160 = vunpack.c.h.b16 %v661
        %v1161 = vunpack.c.l.b16 %v662
        %v1162 = vunpack.c.h.b16 %v662
        %v1163 = vunpack.c.l.b16 %v663
        %v1164 = vunpack.c.h.b16 %v663
        %v1165 = vunpack.c.l.b16 %v664
        %v1166 = vunpack.c.h.b16 %v664
        %v1167 = vunpack.c.l.b16 %v665
        %v1168 = vunpack.c.h.b16 %v665
        %v1169 = vunpack.c.l.b16 %v666
        %v1170 = vunpack.c.h.b16 %v666
        %v1171 = vunpack.c.l.b16 %v667
        %v1172 = vunpack.c.h.b16 %v667
        %v1173 = vunpack.c.l.b16 %v668
        %v1174 = vunpack.c.h.b16 %v668
        %v1175 = vunpack.c.l.b16 %v669
        %v1176 = vunpack.c.h.b16 %v669
        %v1177 = vunpack.c.l.b16 %v670
        %v1178 = vunpack.c.h.b16 %v670
        %v1179 = vunpack.c.l.b16 %v671
        %v1180 = vunpack.c.h.b16 %v671
        %v1181 = vunpack.c.l.b16 %v672
        %v1182 = vunpack.c.h.b16 %v672
        %v1183 = vunpack.c.l.b16 %v673
        %v1184 = vunpack.c.h.b16 %v673
        %v1185 = vunpack.c.l.b16 %v674
        %v1186 = vunpack.c.h.b16 %v674
        %v1187 = vunpack.c.l.b16 %v675
        %v1188 = vunpack.c.h.b16 %v675
        %v1189 = vunpack.c.l.b16 %v676
        %v1190 = vunpack.c.h.b16 %v676
        %v1191 = vunpack.c.l.b16 %v677
        %v1192 = vunpack.c.h.b16 %v677
        %v1193 = vunpack.c.l.b16 %v678
        %v1194 = vunpack.c.h.b16 %v678
        %v1195 = vunpack.c.l.b16 %v679
        %v1196 = vunpack.c.h.b16 %v679
        %v1197 = vunpack.c.l.b16 %v680
        %v1198 = vunpack.c.h.b16 %v680
        %v1199 = vunpack.c.l.b16 %v681
        %v1200 = vunpack.c.h.b16 %v681
        %v1201 = vunpack.c.l.b16 %v682
        %v1202 = vunpack.c.h.b16 %v682
        %v1203 = vunpack.c.l.b16 %v683
        %v1204 = vunpack.c.h.b16 %v683
        %v1205 = vunpack.c.l.b16 %v684
        %v1206 = vunpack.c.h.b16 %v684
        %v1207 = vunpack.c.l.b16 %v685
        %v1208 = vunpack.c.h.b16 %v685
        %v1209 = vunpack.c.l.b16 %v686
        %v1210 = vunpack.c.h.b16 %v686
        %v1211 = vunpack.c.l.b16 %v687
        %v1212 = vunpack.c.h.b16 %v687
        %v1213 = vunpack.c.l.b16 %v688
        %v1214 = vunpack.c.h.b16 %v688
        %v1215 = vunpack.c.l.b16 %v689
        %v1216 = vunpack.c.h.b16 %v689
        %v1217 = vunpack.c.l.b16 %v690
        %v1218 = vunpack.c.h.b16 %v690
        %v1219 = vunpack.c.l.b16 %v691
        %v1220 = vunpack.c.h.b16 %v691
        %v1221 = vunpack.c.l.b16 %v692
        %v1222 = vunpack.c.h.b16 %v692
        %v1223 = vunpack.c.l.b16 %v693
        %v1224 = vunpack.c.h.b16 %v693
        %v1225 = vunpack.c.l.b16 %v694
        %v1226 = vunpack.c.h.b16 %v694
        %v1227 = vunpack.c.l.b16 %v695
        %v1228 = vunpack.c.h.b16 %v695
        %v1229 = vunpack.c.l.b16 %v696
        %v1230 = vunpack.c.h.b16 %v696
        %v1231 = vunpack.c.l.b16 %v697
        %v1232 = vunpack.c.h.b16 %v697
        %v1233 = vunpack.c.l.b16 %v698
        %v1234 = vunpack.c.h.b16 %v698
        %v1235 = vunpack.c.l.b16 %v699
        %v1236 = vunpack.c.h.b16 %v699
        %v1237 = vunpack.c.l.b16 %v700
        %v1238 = vunpack.c.h.b16 %v700
        %v1239 = vunpack.c.l.b16 %v701
        %v1240 = vunpack.c.h.b16 %v701
        %v1241 = vunpack.c.l.b16 %v702
        %v1242 = vunpack.c.h.b16 %v702
        %v1243 = vunpack.c.l.b16 %v703
        %v1244 = vunpack.c.h.b16 %v703
        %v1245 = vunpack.c.l.b16 %v704
        %v1246 = vunpack.c.h.b16 %v704
        %v1247 = vunpack.c.l.b16 %v705
        %v1248 = vunpack.c.h.b16 %v705
        %v1249 = vunpack.c.l.b16 %v706
        %v1250 = vunpack.c.h.b16 %v706
        %v1251 = vunpack.c.l.b16 %v707
        %v1252 = vunpack.c.h.b16 %v707
        %v1253 = vunpack.c.l.b16 %v708
        %v1254 = vunpack.c.h.b16 %v708
        %v1255 = vunpack.c.l.b16 %v709
        %v1256 = vunpack.c.h.b16 %v709
        %v1257 = vunpack.c.l.b16 %v710
        %v1258 = vunpack.c.h.b16 %v710
        %v1259 = vunpack.c.l.b16 %v711
        %v1260 = vunpack.c.h.b16 %v711
        %v1261 = vunpack.c.l.b16 %v712
        %v1262 = vunpack.c.h.b16 %v712
        %v1263 = vunpack.c.l.b16 %v713
        %v1264 = vunpack.c.h.b16 %v713
        %v1265 = vunpack.c.l.b16 %v714
        %v1266 = vunpack.c.h.b16 %v714
        %v1267 = vunpack.c.l.b16 %v715
        %v1268 = vunpack.c.h.b16 %v715
        %v1269 = vunpack.c.l.b16 %v716
        %v1270 = vunpack.c.h.b16 %v716
        %v1271 = vunpack.c.l.b16 %v717
        %v1272 = vunpack.c.h.b16 %v717
        %v1273 = vunpack.c.l.b16 %v718
        %v1274 = vunpack.c.h.b16 %v718
        %v1275 = vunpack.c.l.b16 %v719
        %v1276 = vunpack.c.h.b16 %v719
        %v1277 = vunpack.c.l.b16 %v720
        %v1278 = vunpack.c.h.b16 %v720
        %v1279 = vunpack.c.l.b16 %v721
        %v1280 = vunpack.c.h.b16 %v721
        %v1281 = vunpack.c.l.b16 %v722
        %v1282 = vunpack.c.h.b16 %v722
        %v1283 = vunpack.c.l.b16 %v723
        %v1284 = vunpack.c.h.b16 %v723
        %v1285 = vunpack.c.l.b16 %v724
        %v1286 = vunpack.c.h.b16 %v724
        %v1287 = vunpack.c.l.b16 %v725
        %v1288 = vunpack.c.h.b16 %v725
        %v1289 = vunpack.c.l.b16 %v726
        %v1290 = vunpack.c.h.b16 %v726
        %v1291 = vunpack.c.l.b16 %v727
        %v1292 = vunpack.c.h.b16 %v727
        %v1293 = vunpack.c.l.b16 %v728
        %v1294 = vunpack.c.h.b16 %v728
        %v1295 = vunpack.c.l.b16 %v729
        %v1296 = vunpack.c.h.b16 %v729
        %v1297 = vunpack.c.l.b16 %v730
        %v1298 = vunpack.c.h.b16 %v730
        %v1299 = vunpack.c.l.b16 %v731
        %v1300 = vunpack.c.h.b16 %v731
        %v1301 = vunpack.c.l.b16 %v732
        %v1302 = vunpack.c.h.b16 %v732
        %v1303 = vunpack.c.l.b16 %v733
        %v1304 = vunpack.c.h.b16 %v733
        %v1305 = vunpack.c.l.b16 %v734
        %v1306 = vunpack.c.h.b16 %v734
        %v1307 = vunpack.c.l.b16 %v735
        %v1308 = vunpack.c.h.b16 %v735
        %v1309 = vunpack.c.l.b16 %v736
        %v1310 = vunpack.c.h.b16 %v736
        %v1311 = vunpack.c.l.b16 %v737
        %v1312 = vunpack.c.h.b16 %v737
        %v1313 = vunpack.c.l.b16 %v738
        %v1314 = vunpack.c.h.b16 %v738
        %v1315 = vunpack.c.l.b16 %v739
        %v1316 = vunpack.c.h.b16 %v739
        %v1317 = vunpack.c.l.b16 %v740
        %v1318 = vunpack.c.h.b16 %v740
        %v1319 = vunpack.c.l.b16 %v741
        %v1320 = vunpack.c.h.b16 %v741
        %v1321 = vunpack.c.l.b16 %v742
        %v1322 = vunpack.c.h.b16 %v742
        %v1323 = vunpack.c.l.b16 %v743
        %v1324 = vunpack.c.h.b16 %v743
        %v1325 = vunpack.c.l.b16 %v744
        %v1326 = vunpack.c.h.b16 %v744
        %v1327 = vunpack.c.l.b16 %v745
        %v1328 = vunpack.c.h.b16 %v745
        %v1329 = vunpack.c.l.b16 %v746
        %v1330 = vunpack.c.h.b16 %v746
        %v1331 = vunpack.c.l.b16 %v747
        %v1332 = vunpack.c.h.b16 %v747
        %v1333 = vunpack.c.l.b16 %v748
        %v1334 = vunpack.c.h.b16 %v748
        %v1335 = vunpack.c.l.b16 %v749
        %v1336 = vunpack.c.h.b16 %v749
        %v1337 = vunpack.c.l.b16 %v750
        %v1338 = vunpack.c.h.b16 %v750
        %v1339 = vunpack.c.l.b16 %v751
        %v1340 = vunpack.c.h.b16 %v751
        %v1341 = vunpack.c.l.b16 %v752
        %v1342 = vunpack.c.h.b16 %v752
        %v1343 = vunpack.c.l.b16 %v753
        %v1344 = vunpack.c.h.b16 %v753
        %v1345 = vunpack.c.l.b16 %v754
        %v1346 = vunpack.c.h.b16 %v754
        %v1347 = vunpack.c.l.b16 %v755
        %v1348 = vunpack.c.h.b16 %v755
        %v1349 = vunpack.c.l.b16 %v756
        %v1350 = vunpack.c.h.b16 %v756
        %v1351 = vunpack.c.l.b16 %v757
        %v1352 = vunpack.c.h.b16 %v757
        %v1353 = vunpack.c.l.b16 %v758
        %v1354 = vunpack.c.h.b16 %v758
        %v1355 = vunpack.c.l.b16 %v759
        %v1356 = vunpack.c.h.b16 %v759
        %v1357 = vunpack.c.l.b16 %v760
        %v1358 = vunpack.c.h.b16 %v760
        %v1359 = vunpack.c.l.b16 %v761
        %v1360 = vunpack.c.h.b16 %v761
        %v1361 = vunpack.c.l.b16 %v762
        %v1362 = vunpack.c.h.b16 %v762
        %v1363 = vunpack.c.l.b16 %v763
        %v1364 = vunpack.c.h.b16 %v763
        %v1365 = vunpack.c.l.b16 %v764
        %v1366 = vunpack.c.h.b16 %v764
        %v1367 = vunpack.c.l.b16 %v765
        %v1368 = vunpack.c.h.b16 %v765
        %v1369 = vunpack.c.l.b16 %v766
        %v1370 = vunpack.c.h.b16 %v766
        %v1371 = vunpack.c.l.b16 %v767
        %v1372 = vunpack.c.h.b16 %v767
        %v1373 = vunpack.c.l.b16 %v768
        %v1374 = vunpack.c.h.b16 %v768
        %v1375 = vunpack.c.l.b16 %v769
        %v1376 = vunpack.c.h.b16 %v769
        %v1377 = vunpack.c.l.b16 %v770
        %v1378 = vunpack.c.h.b16 %v770
        %v1379 = vunpack.c.l.b16 %v771
        %v1380 = vunpack.c.h.b16 %v771
        %v1381 = vunpack.c.l.b16 %v772
        %v1382 = vunpack.c.h.b16 %v772
        %v1383 = vunpack.c.l.b16 %v773
        %v1384 = vunpack.c.h.b16 %v773
        %v1385 = vunpack.c.l.b16 %v774
        %v1386 = vunpack.c.h.b16 %v774
        %v1387 = vunpack.c.l.b16 %v775
        %v1388 = vunpack.c.h.b16 %v775
        %v1389 = vunpack.c.l.b16 %v776
        %v1390 = vunpack.c.h.b16 %v776
        %v1391 = vunpack.c.l.b16 %v777
        %v1392 = vunpack.c.h.b16 %v777
        %v1393 = vunpack.c.l.b16 %v778
        %v1394 = vunpack.c.h.b16 %v778
        %v1395 = vunpack.c.l.b16 %v779
        %v1396 = vunpack.c.h.b16 %v779
        %v1397 = vunpack.c.l.b16 %v780
        %v1398 = vunpack.c.h.b16 %v780
        %v1399 = vunpack.c.l.b16 %v781
        %v1400 = vunpack.c.h.b16 %v781
        %v1401 = vunpack.c.l.b16 %v782
        %v1402 = vunpack.c.h.b16 %v782
        %v1403 = vunpack.c.l.b16 %v783
        %v1404 = vunpack.c.h.b16 %v783
        %v1405 = vunpack.c.l.b16 %v784
        %v1406 = vunpack.c.h.b16 %v784
        %v1407 = vunpack.c.l.b16 %v785
        %v1408 = vunpack.c.h.b16 %v785
        %v1409 = vunpack.c.l.b16 %v786
        %v1410 = vunpack.c.h.b16 %v786
        %v1411 = vunpack.c.l.b16 %v787
        %v1412 = vunpack.c.h.b16 %v787
        %v1413 = vunpack.c.l.b16 %v788
        %v1414 = vunpack.c.h.b16 %v788
        %v1415 = vunpack.c.l.b16 %v789
        %v1416 = vunpack.c.h.b16 %v789
        %v1417 = vunpack.c.l.b16 %v790
        %v1418 = vunpack.c.h.b16 %v790
        %v1419 = vunpack.c.l.b16 %v791
        %v1420 = vunpack.c.h.b16 %v791
        %v1421 = vunpack.c.l.b16 %v792
        %v1422 = vunpack.c.h.b16 %v792
        %v1423 = vunpack.c.l.b16 %v793
        %v1424 = vunpack.c.h.b16 %v793
        %v1425 = vunpack.c.l.b16 %v794
        %v1426 = vunpack.c.h.b16 %v794
        %v1427 = vunpack.c.l.b16 %v795
        %v1428 = vunpack.c.h.b16 %v795
        %v1429 = vunpack.c.l.b16 %v796
        %v1430 = vunpack.c.h.b16 %v796
        %v1431 = vunpack.c.l.b16 %v797
        %v1432 = vunpack.c.h.b16 %v797
        %v1433 = vunpack.c.l.b16 %v798
        %v1434 = vunpack.c.h.b16 %v798
        %v1435 = vunpack.c.l.b16 %v799
        %v1436 = vunpack.c.h.b16 %v799
        %v1437 = vunpack.c.l.b16 %v800
        %v1438 = vunpack.c.h.b16 %v800
        %v1439 = vunpack.c.l.b16 %v801
        %v1440 = vunpack.c.h.b16 %v801
        %v1441 = vunpack.c.l.b16 %v802
        %v1442 = vunpack.c.h.b16 %v802
        %v1443 = vunpack.c.l.b16 %v803
        %v1444 = vunpack.c.h.b16 %v803
        %v1445 = vunpack.c.l.b16 %v804
        %v1446 = vunpack.c.h.b16 %v804
        %v1447 = vunpack.c.l.b16 %v805
        %v1448 = vunpack.c.h.b16 %v805
        %v1449 = vunpack.c.l.b16 %v806
        %v1450 = vunpack.c.h.b16 %v806
        %v1451 = vunpack.c.l.b16 %v807
        %v1452 = vunpack.c.h.b16 %v807
        %v1453 = vunpack.c.l.b16 %v808
        %v1454 = vunpack.c.h.b16 %v808
        %v1455 = vunpack.c.l.b16 %v809
        %v1456 = vunpack.c.h.b16 %v809
        %v1457 = vunpack.c.l.b16 %v810
        %v1458 = vunpack.c.h.b16 %v810
        %v1459 = vunpack.c.l.b16 %v811
        %v1460 = vunpack.c.h.b16 %v811
        %v1461 = vunpack.c.l.b16 %v812
        %v1462 = vunpack.c.h.b16 %v812
        %v1463 = vunpack.c.l.b16 %v813
        %v1464 = vunpack.c.h.b16 %v813
        %v1465 = vunpack.c.l.b16 %v814
        %v1466 = vunpack.c.h.b16 %v814
        %v1467 = vunpack.c.l.b16 %v815
        %v1468 = vunpack.c.h.b16 %v815
        %v1469 = vunpack.c.l.b16 %v816
        %v1470 = vunpack.c.h.b16 %v816
        %v1471 = vunpack.c.l.b16 %v817
        %v1472 = vunpack.c.h.b16 %v817
        %v1473 = vunpack.c.l.b16 %v818
        %v1474 = vunpack.c.h.b16 %v818
        %v1475 = vunpack.c.l.b16 %v819
        %v1476 = vunpack.c.h.b16 %v819
        %v1477 = vunpack.c.l.b16 %v820
        %v1478 = vunpack.c.h.b16 %v820
        %v1479 = vunpack.c.l.b16 %v821
        %v1480 = vunpack.c.h.b16 %v821
        %v1481 = vunpack.c.l.b16 %v822
        %v1482 = vunpack.c.h.b16 %v822
        %v1483 = vunpack.c.l.b16 %v823
        %v1484 = vunpack.c.h.b16 %v823
        %v1485 = vunpack.c.l.b16 %v824
        %v1486 = vunpack.c.h.b16 %v824
        %v1487 = vunpack.c.l.b16 %v825
        %v1488 = vunpack.c.h.b16 %v825
        %v1489 = vunpack.c.l.b16 %v826
        %v1490 = vunpack.c.h.b16 %v826
        %v1491 = vunpack.c.l.b16 %v827
        %v1492 = vunpack.c.h.b16 %v827
        %v1493 = vunpack.c.l.b16 %v828
        %v1494 = vunpack.c.h.b16 %v828
        %v1495 = vunpack.c.l.b16 %v829
        %v1496 = vunpack.c.h.b16 %v829
        %v1497 = vunpack.c.l.b16 %v830
        %v1498 = vunpack.c.h.b16 %v830
        %v1499 = vunpack.c.l.b16 %v831
        %v1500 = vunpack.c.h.b16 %v831
        %v1501 = vunpack.c.l.b16 %v832
        %v1502 = vunpack.c.h.b16 %v832
        %v1503 = vunpack.c.l.b16 %v833
        %v1504 = vunpack.c.h.b16 %v833
        %v1505 = vunpack.c.l.b16 %v834
        %v1506 = vunpack.c.h.b16 %v834
        %v1507 = vunpack.c.l.b16 %v835
        %v1508 = vunpack.c.h.b16 %v835
        %v1509 = vunpack.c.l.b16 %v836
        %v1510 = vunpack.c.h.b16 %v836
        %v1511 = vunpack.c.l.b16 %v837
        %v1512 = vunpack.c.h.b16 %v837
        %v1513 = vunpack.c.l.b16 %v838
        %v1514 = vunpack.c.h.b16 %v838
        %v1515 = vunpack.c.l.b16 %v839
        %v1516 = vunpack.c.h.b16 %v839
        %v1517 = vunpack.c.l.b16 %v840
        %v1518 = vunpack.c.h.b16 %v840
        %v1519 = vpack.c.b16 %v1103, %v1087
        %v1520 = vpack.c.b16 %v1104, %v1088
        %v1521 = vpack.c.b16 %v1105, %v1089
        %v1522 = vpack.c.b16 %v1106, %v1090
        %v1523 = vpack.c.b16 %v1107, %v1091
        %v1524 = vpack.c.b16 %v1108, %v1092
        %v1525 = vpack.c.b16 %v1109, %v1093
        %v1526 = vpack.c.b16 %v1110, %v1094
        %v1527 = vpack.c.b16 %v1111, %v1095
        %v1528 = vpack.c.b16 %v1112, %v1096
        %v1529 = vpack.c.b16 %v1113, %v1097
        %v1530 = vpack.c.b16 %v1114, %v1098
        %v1531 = vpack.c.b16 %v1115, %v1099
        %v1532 = vpack.c.b16 %v1116, %v1100
        %v1533 = vpack.c.b16 %v1117, %v1101
        %v1534 = vpack.c.b16 %v1118, %v1102
        %v1535 = vpack.c.b16 %v1135, %v1119
        %v1536 = vpack.c.b16 %v1136, %v1120
        %v1537 = vpack.c.b16 %v1137, %v1121
        %v1538 = vpack.c.b16 %v1138, %v1122
        %v1539 = vpack.c.b16 %v1139, %v1123
        %v1540 = vpack.c.b16 %v1140, %v1124
        %v1541 = vpack.c.b16 %v1141, %v1125
        %v1542 = vpack.c.b16 %v1142, %v1126
        %v1543 = vpack.c.b16 %v1143, %v1127
        %v1544 = vpack.c.b16 %v1144, %v1128
        %v1545 = vpack.c.b16 %v1145, %v1129
        %v1546 = vpack.c.b16 %v1146, %v1130
        %v1547 = vpack.c.b16 %v1147, %v1131
        %v1548 = vpack.c.b16 %v1148, %v1132
        %v1549 = vpack.c.b16 %v1149, %v1133
        %v1550 = vpack.c.b16 %v1150, %v1134
        %v1551 = vpack.c.b16 %v1167, %v1151
        %v1552 = vpack.c.b16 %v1168, %v1152
        %v1553 = vpack.c.b16 %v1169, %v1153
        %v1554 = vpack.c.b16 %v1170, %v1154
        %v1555 = vpack.c.b16 %v1171, %v1155
        %v1556 = vpack.c.b16 %v1172, %v1156
        %v1557 = vpack.c.b16 %v1173, %v1157
        %v1558 = vpack.c.b16 %v1174, %v1158
        %v1559 = vpack.c.b16 %v1175, %v1159
        %v1560 = vpack.c.b16 %v1176, %v1160
        %v1561 = vpack.c.b16 %v1177, %v1161
        %v1562 = vpack.c.b16 %v1178, %v1162
        %v1563 = vpack.c.b16 %v1179, %v1163
        %v1564 = vpack.c.b16 %v1180, %v1164
        %v1565 = vpack.c.b16 %v1181, %v1165
        %v1566 = vpack.c.b16 %v1182, %v1166
        %v1567 = vpack.c.b16 %v1199, %v1183
        %v1568 = vpack.c.b16 %v1200, %v1184
        %v1569 = vpack.c.b16 %v1201, %v1185
        %v1570 = vpack.c.b16 %v1202, %v1186
        %v1571 = vpack.c.b16 %v1203, %v1187
        %v1572 = vpack.c.b16 %v1204, %v1188
        %v1573 = vpack.c.b16 %v1205, %v1189
        %v1574 = vpack.c.b16 %v1206, %v1190
        %v1575 = vpack.c.b16 %v1207, %v1191
        %v1576 = vpack.c.b16 %v1208, %v1192
        %v1577 = vpack.c.b16 %v1209, %v1193
        %v1578 = vpack.c.b16 %v1210, %v1194
        %v1579 = vpack.c.b16 %v1211, %v1195
        %v1580 = vpack.c.b16 %v1212, %v1196
        %v1581 = vpack.c.b16 %v1213, %v1197
        %v1582 = vpack.c.b16 %v1214, %v1198
        %v1583 = vpack.c.b16 %v1231, %v1215
        %v1584 = vpack.c.b16 %v1232, %v1216
        %v1585 = vpack.c.b16 %v1233, %v1217
        %v1586 = vpack.c.b16 %v1234, %v1218
        %v1587 = vpack.c.b16 %v1235, %v1219
        %v1588 = vpack.c.b16 %v1236, %v1220
        %v1589 = vpack.c.b16 %v1237, %v1221
        %v1590 = vpack.c.b16 %v1238, %v1222
        %v1591 = vpack.c.b16 %v1239, %v1223
        %v1592 = vpack.c.b16 %v1240, %v1224
        %v1593 = vpack.c.b16 %v1241, %v1225
        %v1594 = vpack.c.b16 %v1242, %v1226
        %v1595 = vpack.c.b16 %v1243, %v1227
        %v1596 = vpack.c.b16 %v1244, %v1228
        %v1597 = vpack.c.b16 %v1245, %v1229
        %v1598 = vpack.c.b16 %v1246, %v1230
        %v1599 = vpack.c.b16 %v1263, %v1247
        %v1600 = vpack.c.b16 %v1264, %v1248
        %v1601 = vpack.c.b16 %v1265, %v1249
        %v1602 = vpack.c.b16 %v1266, %v1250
        %v1603 = vpack.c.b16 %v1267, %v1251
        %v1604 = vpack.c.b16 %v1268, %v1252
        %v1605 = vpack.c.b16 %v1269, %v1253
        %v1606 = vpack.c.b16 %v1270, %v1254
        %v1607 = vpack.c.b16 %v1271, %v1255
        %v1608 = vpack.c.b16 %v1272, %v1256
        %v1609 = vpack.c.b16 %v1273, %v1257
        %v1610 = vpack.c.b16 %v1274, %v1258
        %v1611 = vpack.c.b16 %v1275, %v1259
        %v1612 = vpack.c.b16 %v1276, %v1260
        %v1613 = vpack.c.b16 %v1277, %v1261
        %v1614 = vpack.c.b16 %v1278, %v1262
        %v1615 = vpack.c.b16 %v1295, %v1279
        %v1616 = vpack.c.b16 %v1296, %v1280
        %v1617 = vpack.c.b16 %v1297, %v1281
        %v1618 = vpack.c.b16 %v1298, %v1282
        %v1619 = vpack.c.b16 %v1299, %v1283
        %v1620 = vpack.c.b16 %v1300, %v1284
        %v1621 = vpack.c.b16 %v1301, %v1285
        %v1622 = vpack.c.b16 %v1302, %v1286
        %v1623 = vpack.c.b16 %v1303, %v1287
        %v1624 = vpack.c.b16 %v1304, %v1288
        %v1625 = vpack.c.b16 %v1305, %v1289
        %v1626 = vpack.c.b16 %v1306, %v1290
        %v1627 = vpack.c.b16 %v1307, %v1291
        %v1628 = vpack.c.b16 %v1308, %v1292
        %v1629 = vpack.c.b16 %v1309, %v1293
        %v1630 = vpack.c.b16 %v1310, %v1294
        %v1631 = vpack.c.b16 %v1327, %v1311
        %v1632 = vpack.c.b16 %v1328, %v1312
        %v1633 = vpack.c.b16 %v1329, %v1313
        %v1634 = vpack.c.b16 %v1330, %v1314
        %v1635 = vpack.c.b16 %v1331, %v1315
        %v1636 = vpack.c.b16 %v1332, %v1316
        %v1637 = vpack.c.b16 %v1333, %v1317
        %v1638 = vpack.c.b16 %v1334, %v1318
        %v1639 = vpack.c.b16 %v1335, %v1319
        %v1640 = vpack.c.b16 %v1336, %v1320
        %v1641 = vpack.c.b16 %v1337, %v1321
        %v1642 = vpack.c.b16 %v1338, %v1322
        %v1643 = vpack.c.b16 %v1339, %v1323
        %v1644 = vpack.c.b16 %v1340, %v1324
        %v1645 = vpack.c.b16 %v1341, %v1325
        %v1646 = vpack.c.b16 %v1342, %v1326
        %v1647 = vpack.c.b16 %v1359, %v1343
        %v1648 = vpack.c.b16 %v1360, %v1344
        %v1649 = vpack.c.b16 %v1361, %v1345
        %v1650 = vpack.c.b16 %v1362, %v1346
        %v1651 = vpack.c.b16 %v1363, %v1347
        %v1652 = vpack.c.b16 %v1364, %v1348
        %v1653 = vpack.c.b16 %v1365, %v1349
        %v1654 = vpack.c.b16 %v1366, %v1350
        %v1655 = vpack.c.b16 %v1367, %v1351
        %v1656 = vpack.c.b16 %v1368, %v1352
        %v1657 = vpack.c.b16 %v1369, %v1353
        %v1658 = vpack.c.b16 %v1370, %v1354
        %v1659 = vpack.c.b16 %v1371, %v1355
        %v1660 = vpack.c.b16 %v1372, %v1356
        %v1661 = vpack.c.b16 %v1373, %v1357
        %v1662 = vpack.c.b16 %v1374, %v1358
        %v1663 = vpack.c.b16 %v1391, %v1375
        %v1664 = vpack.c.b16 %v1392, %v1376
        %v1665 = vpack.c.b16 %v1393, %v1377
        %v1666 = vpack.c.b16 %v1394, %v1378
        %v1667 = vpack.c.b16 %v1395, %v1379
        %v1668 = vpack.c.b16 %v1396, %v1380
        %v1669 = vpack.c.b16 %v1397, %v1381
        %v1670 = vpack.c.b16 %v1398, %v1382
        %v1671 = vpack.c.b16 %v1399, %v1383
        %v1672 = vpack.c.b16 %v1400, %v1384
        %v1673 = vpack.c.b16 %v1401, %v1385
        %v1674 = vpack.c.b16 %v1402, %v1386
        %v1675 = vpack.c.b16 %v1403, %v1387
        %v1676 = vpack.c.b16 %v1404, %v1388
        %v1677 = vpack.c.b16 %v1405, %v1389
        %v1678 = vpack.c.b16 %v1406, %v1390
        %v1679 = vpack.c.b16 %v1423, %v1407
        %v1680 = vpack.c.b16 %v1424, %v1408
        %v1681 = vpack.c.b16 %v1425, %v1409
        %v1682 = vpack.c.b16 %v1426, %v1410
        %v1683 = vpack.c.b16 %v1427, %v1411
        %v1684 = vpack.c.b16 %v1428, %v1412
        %v1685 = vpack.c.b16 %v1429, %v1413
        %v1686 = vpack.c.b16 %v1430, %v1414
        %v1687 = vpack.c.b16 %v1431, %v1415
        %v1688 = vpack.c.b16 %v1432, %v1416
        %v1689 = vpack.c.b16 %v1433, %v1417
        %v1690 = vpack.c.b16 %v1434, %v1418
        %v1691 = vpack.c.b16 %v1435, %v1419
        %v1692 = vpack.c.b16 %v1436, %v1420
        %v1693 = vpack.c.b16 %v1437, %v1421
        %v1694 = vpack.c.b16 %v1438, %v1422
        %v1695 = vpack.c.b16 %v1455, %v1439
        %v1696 = vpack.c.b16 %v1456, %v1440
        %v1697 = vpack.c.b16 %v1457, %v1441
        %v1698 = vpack.c.b16 %v1458, %v1442
        %v1699 = vpack.c.b16 %v1459, %v1443
        %v1700 = vpack.c.b16 %v1460, %v1444
        %v1701 = vpack.c.b16 %v1461, %v1445
        %v1702 = vpack.c.b16 %v1462, %v1446
        %v1703 = vpack.c.b16 %v1463, %v1447
        %v1704 = vpack.c.b16 %v1464, %v1448
        %v1705 = vpack.c.b16 %v1465, %v1449
        %v1706 = vpack.c.b16 %v1466, %v1450
        %v1707 = vpack.c.b16 %v1467, %v1451
        %v1708 = vpack.c.b16 %v1468, %v1452
        %v1709 = vpack.c.b16 %v1469, %v1453
        %v1710 = vpack.c.b16 %v1470, %v1454
        %v1711 = vpack.c.b16 %v1487, %v1471
        %v1712 = vpack.c.b16 %v1488, %v1472
        %v1713 = vpack.c.b16 %v1489, %v1473
        %v1714 = vpack.c.b16 %v1490, %v1474
        %v1715 = vpack.c.b16 %v1491, %v1475
        %v1716 = vpack.c.b16 %v1492, %v1476
        %v1717 = vpack.c.b16 %v1493, %v1477
        %v1718 = vpack.c.b16 %v1494, %v1478
        %v1719 = vpack.c.b16 %v1495, %v1479
        %v1720 = vpack.c.b16 %v1496, %v1480
        %v1721 = vpack.c.b16 %v1497, %v1481
        %v1722 = vpack.c.b16 %v1498, %v1482
        %v1723 = vpack.c.b16 %v1499, %v1483
        %v1724 = vpack.c.b16 %v1500, %v1484
        %v1725 = vpack.c.b16 %v1501, %v1485
        %v1726 = vpack.c.b16 %v1502, %v1486
        %v1727 = vpack.c.b16 %v1503, %v1503
        %v1728 = vpack.c.b16 %v1504, %v1504
        %v1729 = vpack.c.b16 %v1505, %v1505
        %v1730 = vpack.c.b16 %v1506, %v1506
        %v1731 = vpack.c.b16 %v1507, %v1507
        %v1732 = vpack.c.b16 %v1508, %v1508
        %v1733 = vpack.c.b16 %v1509, %v1509
        %v1734 = vpack.c.b16 %v1510, %v1510
        %v1735 = vpack.c.b16 %v1511, %v1511
        %v1736 = vpack.c.b16 %v1512, %v1512
        %v1737 = vpack.c.b16 %v1513, %v1513
        %v1738 = vpack.c.b16 %v1514, %v1514
        %v1739 = vpack.c.b16 %v1515, %v1515
        %v1740 = vpack.c.b16 %v1516, %v1516
        %v1741 = vpack.c.b16 %v1517, %v1517
        %v1742 = vpack.c.b16 %v1518, %v1518
        %vm1951 = vcmask 719872
        %v1953 = vsel %vm1951, %v869, 0
        %vm1955 = vcmask 1043456
        %v1957 = vsel %vm1955, %v1727, 0
        %v1960 = vsel %vm1955, %v1728, 0
        %v1963 = vsel %vm1955, %v1729, 0
        %v1966 = vsel %vm1955, %v1730, 0
        %v1969 = vsel %vm1955, %v1731, 0
        %v1972 = vsel %vm1955, %v1732, 0
        %v1975 = vsel %vm1955, %v1733, 0
        %v1978 = vsel %vm1955, %v1734, 0
        %v1981 = vsel %vm1955, %v1735, 0
        %v1984 = vsel %vm1955, %v1736, 0
        %v1987 = vsel %vm1955, %v1737, 0
        %v1990 = vsel %vm1955, %v1738, 0
        %v1993 = vsel %vm1955, %v1739, 0
        %v1996 = vsel %vm1955, %v1740, 0
        %v1999 = vsel %vm1955, %v1741, 0
        %v2002 = vsel %vm1955, %v1742, 0
        %2004 = vmatprep.subr.bf16.mxu0 %v1632
        %2005 = vmatpush1.bf16.msra.mxu0 %v1631
        %2006 = vmatprep.subr.bf16.mxu0 %v1616
        %2007 = vmatpush1.bf16.msra.mxu0 %v1615
        %2008 = vmatprep.subr.bf16.mxu0 %v1600
        %2009 = vmatpush1.bf16.msra.mxu0 %v1599
        %2010 = vmatprep.subr.bf16.mxu0 %v1584
        %2011 = vmatpush1.bf16.msra.mxu0 %v1583
        %2012 = vmatprep.subr.bf16.mxu0 %v1568
        %2013 = vmatpush1.bf16.msra.mxu0 %v1567
        %2014 = vmatprep.subr.bf16.mxu0 %v1552
        %2015 = vmatpush1.bf16.msra.mxu0 %v1551
        %2016 = vmatprep.subr.bf16.mxu0 %v1536
        %2017 = vmatpush1.bf16.msra.mxu0 %v1535
        %2018 = vmatprep.subr.bf16.mxu0 %v1520
        %2019 = vmatpush1.bf16.msra.mxu0 %v1519
        %2020 = vmatprep.subr.bf16.mxu0 0
        %2021 = vmatpush2.bf16.msra.mxu0 0
        %2022 = vmatprep.subr.bf16.mxu0 0
        %2023 = vmatpush2.bf16.msra.mxu0 0
        %2024 = vmatprep.subr.bf16.mxu0 %v1960
        %2025 = vmatpush2.bf16.msra.mxu0 %v1957
        %2026 = vmatprep.subr.bf16.mxu0 %v1712
        %2027 = vmatpush2.bf16.msra.mxu0 %v1711
        %2028 = vmatprep.subr.bf16.mxu0 %v1696
        %2029 = vmatpush2.bf16.msra.mxu0 %v1695
        %2030 = vmatprep.subr.bf16.mxu0 %v1680
        %2031 = vmatpush2.bf16.msra.mxu0 %v1679
        %2032 = vmatprep.subr.bf16.mxu0 %v1664
        %2033 = vmatpush2.bf16.msra.mxu0 %v1663
        %2034 = vmatprep.subr.bf16.mxu0 %v1648
        %2035 = vmatpush2.bf16.msra.mxu0 %v1647
        %2036 = vmatprep.mubr.bf16.mxu0 %v1953
        %2037 = vmatmul.mubr.bf16.gmra.mxu0 %v862
        %v2038 = vpop.f32.mrf.mxu0
        %v2039 = vadd.f32 %v845, %v2038
        %v2040 = vpop.f32.mrf.mxu0
        %v2041 = vadd.f32 %v845, %v2040
        %v2042 = vpop.f32.mrf.mxu0
        %v2043 = vpop.f32.mrf.mxu0
        %2044 = vdwg.mxu0
        %2045 = vmatprep.subr.bf16.mxu0 %v1634
        %2046 = vmatpush1.bf16.msra.mxu0 %v1633
        %2047 = vmatprep.subr.bf16.mxu0 %v1618
        %2048 = vmatpush1.bf16.msra.mxu0 %v1617
        %2049 = vmatprep.subr.bf16.mxu0 %v1602
        %2050 = vmatpush1.bf16.msra.mxu0 %v1601
        %2051 = vmatprep.subr.bf16.mxu0 %v1586
        %2052 = vmatpush1.bf16.msra.mxu0 %v1585
        %2053 = vmatprep.subr.bf16.mxu0 %v1570
        %2054 = vmatpush1.bf16.msra.mxu0 %v1569
        %2055 = vmatprep.subr.bf16.mxu0 %v1554
        %2056 = vmatpush1.bf16.msra.mxu0 %v1553
        %2057 = vmatprep.subr.bf16.mxu0 %v1538
        %2058 = vmatpush1.bf16.msra.mxu0 %v1537
        %2059 = vmatprep.subr.bf16.mxu0 %v1522
        %2060 = vmatpush1.bf16.msra.mxu0 %v1521
        %2061 = vmatprep.subr.bf16.mxu0 0
        %2062 = vmatpush2.bf16.msra.mxu0 0
        %2063 = vmatprep.subr.bf16.mxu0 0
        %2064 = vmatpush2.bf16.msra.mxu0 0
        %2065 = vmatprep.subr.bf16.mxu0 %v1966
        %2066 = vmatpush2.bf16.msra.mxu0 %v1963
        %2067 = vmatprep.subr.bf16.mxu0 %v1714
        %2068 = vmatpush2.bf16.msra.mxu0 %v1713
        %2069 = vmatprep.subr.bf16.mxu0 %v1698
        %2070 = vmatpush2.bf16.msra.mxu0 %v1697
        %2071 = vmatprep.subr.bf16.mxu0 %v1682
        %2072 = vmatpush2.bf16.msra.mxu0 %v1681
        %2073 = vmatprep.subr.bf16.mxu0 %v1666
        %2074 = vmatpush2.bf16.msra.mxu0 %v1665
        %2075 = vmatprep.subr.bf16.mxu0 %v1650
        %2076 = vmatpush2.bf16.msra.mxu0 %v1649
        %2077 = vmatprep.mubr.bf16.mxu0 %v1953
        %2078 = vmatmul.mubr.bf16.gmra.mxu0 %v862
        %v2079 = vpop.f32.mrf.mxu0
        %v2080 = vadd.f32 %v845, %v2079
        %v2081 = vpop.f32.mrf.mxu0
        %v2082 = vadd.f32 %v845, %v2081
        %v2083 = vpop.f32.mrf.mxu0
        %v2084 = vpop.f32.mrf.mxu0
        %2085 = vdwg.mxu0
        %2086 = vmatprep.subr.bf16.mxu0 %v1636
        %2087 = vmatpush1.bf16.msra.mxu0 %v1635
        %2088 = vmatprep.subr.bf16.mxu0 %v1620
        %2089 = vmatpush1.bf16.msra.mxu0 %v1619
        %2090 = vmatprep.subr.bf16.mxu0 %v1604
        %2091 = vmatpush1.bf16.msra.mxu0 %v1603
        %2092 = vmatprep.subr.bf16.mxu0 %v1588
        %2093 = vmatpush1.bf16.msra.mxu0 %v1587
        %2094 = vmatprep.subr.bf16.mxu0 %v1572
        %2095 = vmatpush1.bf16.msra.mxu0 %v1571
        %2096 = vmatprep.subr.bf16.mxu0 %v1556
        %2097 = vmatpush1.bf16.msra.mxu0 %v1555
        %2098 = vmatprep.subr.bf16.mxu0 %v1540
        %2099 = vmatpush1.bf16.msra.mxu0 %v1539
        %2100 = vmatprep.subr.bf16.mxu0 %v1524
        %2101 = vmatpush1.bf16.msra.mxu0 %v1523
        %2102 = vmatprep.subr.bf16.mxu0 0
        %2103 = vmatpush2.bf16.msra.mxu0 0
        %2104 = vmatprep.subr.bf16.mxu0 0
        %2105 = vmatpush2.bf16.msra.mxu0 0
        %2106 = vmatprep.subr.bf16.mxu0 %v1972
        %2107 = vmatpush2.bf16.msra.mxu0 %v1969
        %2108 = vmatprep.subr.bf16.mxu0 %v1716
        %2109 = vmatpush2.bf16.msra.mxu0 %v1715
        %2110 = vmatprep.subr.bf16.mxu0 %v1700
        %2111 = vmatpush2.bf16.msra.mxu0 %v1699
        %2112 = vmatprep.subr.bf16.mxu0 %v1684
        %2113 = vmatpush2.bf16.msra.mxu0 %v1683
        %2114 = vmatprep.subr.bf16.mxu0 %v1668
        %2115 = vmatpush2.bf16.msra.mxu0 %v1667
        %2116 = vmatprep.subr.bf16.mxu0 %v1652
        %2117 = vmatpush2.bf16.msra.mxu0 %v1651
        %2118 = vmatprep.mubr.bf16.mxu0 %v1953
        %2119 = vmatmul.mubr.bf16.gmra.mxu0 %v862
        %v2120 = vpop.f32.mrf.mxu0
        %v2121 = vadd.f32 %v845, %v2120
        %v2122 = vpop.f32.mrf.mxu0
        %v2123 = vadd.f32 %v845, %v2122
        %v2124 = vpop.f32.mrf.mxu0
        %v2125 = vpop.f32.mrf.mxu0
        %2126 = vdwg.mxu0
        %2127 = vmatprep.subr.bf16.mxu0 %v1638
        %2128 = vmatpush1.bf16.msra.mxu0 %v1637
        %2129 = vmatprep.subr.bf16.mxu0 %v1622
        %2130 = vmatpush1.bf16.msra.mxu0 %v1621
        %2131 = vmatprep.subr.bf16.mxu0 %v1606
        %2132 = vmatpush1.bf16.msra.mxu0 %v1605
        %2133 = vmatprep.subr.bf16.mxu0 %v1590
        %2134 = vmatpush1.bf16.msra.mxu0 %v1589
        %2135 = vmatprep.subr.bf16.mxu0 %v1574
        %2136 = vmatpush1.bf16.msra.mxu0 %v1573
        %2137 = vmatprep.subr.bf16.mxu0 %v1558
        %2138 = vmatpush1.bf16.msra.mxu0 %v1557
        %2139 = vmatprep.subr.bf16.mxu0 %v1542
        %2140 = vmatpush1.bf16.msra.mxu0 %v1541
        %2141 = vmatprep.subr.bf16.mxu0 %v1526
        %2142 = vmatpush1.bf16.msra.mxu0 %v1525
        %2143 = vmatprep.subr.bf16.mxu0 0
        %2144 = vmatpush2.bf16.msra.mxu0 0
        %2145 = vmatprep.subr.bf16.mxu0 0
        %2146 = vmatpush2.bf16.msra.mxu0 0
        %2147 = vmatprep.subr.bf16.mxu0 %v1978
        %2148 = vmatpush2.bf16.msra.mxu0 %v1975
        %2149 = vmatprep.subr.bf16.mxu0 %v1718
        %2150 = vmatpush2.bf16.msra.mxu0 %v1717
        %2151 = vmatprep.subr.bf16.mxu0 %v1702
        %2152 = vmatpush2.bf16.msra.mxu0 %v1701
        %2153 = vmatprep.subr.bf16.mxu0 %v1686
        %2154 = vmatpush2.bf16.msra.mxu0 %v1685
        %2155 = vmatprep.subr.bf16.mxu0 %v1670
        %2156 = vmatpush2.bf16.msra.mxu0 %v1669
        %2157 = vmatprep.subr.bf16.mxu0 %v1654
        %2158 = vmatpush2.bf16.msra.mxu0 %v1653
        %2159 = vmatprep.mubr.bf16.mxu0 %v1953
        %2160 = vmatmul.mubr.bf16.gmra.mxu0 %v862
        %v2161 = vpop.f32.mrf.mxu0
        %v2162 = vadd.f32 %v845, %v2161
        %v2163 = vpop.f32.mrf.mxu0
        %v2164 = vadd.f32 %v845, %v2163
        %v2165 = vpop.f32.mrf.mxu0
        %v2166 = vpop.f32.mrf.mxu0
        %2167 = vdwg.mxu0
        %2168 = vmatprep.subr.bf16.mxu0 %v1640
        %2169 = vmatpush1.bf16.msra.mxu0 %v1639
        %2170 = vmatprep.subr.bf16.mxu0 %v1624
        %2171 = vmatpush1.bf16.msra.mxu0 %v1623
        %2172 = vmatprep.subr.bf16.mxu0 %v1608
        %2173 = vmatpush1.bf16.msra.mxu0 %v1607
        %2174 = vmatprep.subr.bf16.mxu0 %v1592
        %2175 = vmatpush1.bf16.msra.mxu0 %v1591
        %2176 = vmatprep.subr.bf16.mxu0 %v1576
        %2177 = vmatpush1.bf16.msra.mxu0 %v1575
        %2178 = vmatprep.subr.bf16.mxu0 %v1560
        %2179 = vmatpush1.bf16.msra.mxu0 %v1559
        %2180 = vmatprep.subr.bf16.mxu0 %v1544
        %2181 = vmatpush1.bf16.msra.mxu0 %v1543
        %2182 = vmatprep.subr.bf16.mxu0 %v1528
        %2183 = vmatpush1.bf16.msra.mxu0 %v1527
        %2184 = vmatprep.subr.bf16.mxu0 0
        %2185 = vmatpush2.bf16.msra.mxu0 0
        %2186 = vmatprep.subr.bf16.mxu0 0
        %2187 = vmatpush2.bf16.msra.mxu0 0
        %2188 = vmatprep.subr.bf16.mxu0 %v1984
        %2189 = vmatpush2.bf16.msra.mxu0 %v1981
        %2190 = vmatprep.subr.bf16.mxu0 %v1720
        %2191 = vmatpush2.bf16.msra.mxu0 %v1719
        %2192 = vmatprep.subr.bf16.mxu0 %v1704
        %2193 = vmatpush2.bf16.msra.mxu0 %v1703
        %2194 = vmatprep.subr.bf16.mxu0 %v1688
        %2195 = vmatpush2.bf16.msra.mxu0 %v1687
        %2196 = vmatprep.subr.bf16.mxu0 %v1672
        %2197 = vmatpush2.bf16.msra.mxu0 %v1671
        %2198 = vmatprep.subr.bf16.mxu0 %v1656
        %2199 = vmatpush2.bf16.msra.mxu0 %v1655
        %2200 = vmatprep.mubr.bf16.mxu0 %v1953
        %2201 = vmatmul.mubr.bf16.gmra.mxu0 %v862
        %v2202 = vpop.f32.mrf.mxu0
        %v2203 = vadd.f32 %v845, %v2202
        %v2204 = vpop.f32.mrf.mxu0
        %v2205 = vadd.f32 %v845, %v2204
        %v2206 = vpop.f32.mrf.mxu0
        %v2207 = vpop.f32.mrf.mxu0
        %2208 = vdwg.mxu0
        %2209 = vmatprep.subr.bf16.mxu0 %v1642
        %2210 = vmatpush1.bf16.msra.mxu0 %v1641
        %2211 = vmatprep.subr.bf16.mxu0 %v1626
        %2212 = vmatpush1.bf16.msra.mxu0 %v1625
        %2213 = vmatprep.subr.bf16.mxu0 %v1610
        %2214 = vmatpush1.bf16.msra.mxu0 %v1609
        %2215 = vmatprep.subr.bf16.mxu0 %v1594
        %2216 = vmatpush1.bf16.msra.mxu0 %v1593
        %2217 = vmatprep.subr.bf16.mxu0 %v1578
        %2218 = vmatpush1.bf16.msra.mxu0 %v1577
        %2219 = vmatprep.subr.bf16.mxu0 %v1562
        %2220 = vmatpush1.bf16.msra.mxu0 %v1561
        %2221 = vmatprep.subr.bf16.mxu0 %v1546
        %2222 = vmatpush1.bf16.msra.mxu0 %v1545
        %2223 = vmatprep.subr.bf16.mxu0 %v1530
        %2224 = vmatpush1.bf16.msra.mxu0 %v1529
        %2225 = vmatprep.subr.bf16.mxu0 0
        %2226 = vmatpush2.bf16.msra.mxu0 0
        %2227 = vmatprep.subr.bf16.mxu0 0
        %2228 = vmatpush2.bf16.msra.mxu0 0
        %2229 = vmatprep.subr.bf16.mxu0 %v1990
        %2230 = vmatpush2.bf16.msra.mxu0 %v1987
        %2231 = vmatprep.subr.bf16.mxu0 %v1722
        %2232 = vmatpush2.bf16.msra.mxu0 %v1721
        %2233 = vmatprep.subr.bf16.mxu0 %v1706
        %2234 = vmatpush2.bf16.msra.mxu0 %v1705
        %2235 = vmatprep.subr.bf16.mxu0 %v1690
        %2236 = vmatpush2.bf16.msra.mxu0 %v1689
        %2237 = vmatprep.subr.bf16.mxu0 %v1674
        %2238 = vmatpush2.bf16.msra.mxu0 %v1673
        %2239 = vmatprep.subr.bf16.mxu0 %v1658
        %2240 = vmatpush2.bf16.msra.mxu0 %v1657
        %2241 = vmatprep.mubr.bf16.mxu0 %v1953
        %2242 = vmatmul.mubr.bf16.gmra.mxu0 %v862
        %v2243 = vpop.f32.mrf.mxu0
        %v2244 = vadd.f32 %v845, %v2243
        %v2245 = vpop.f32.mrf.mxu0
        %v2246 = vadd.f32 %v845, %v2245
        %v2247 = vpop.f32.mrf.mxu0
        %v2248 = vpop.f32.mrf.mxu0
        %2249 = vdwg.mxu0
        %2250 = vmatprep.subr.bf16.mxu0 %v1644
        %2251 = vmatpush1.bf16.msra.mxu0 %v1643
        %2252 = vmatprep.subr.bf16.mxu0 %v1628
        %2253 = vmatpush1.bf16.msra.mxu0 %v1627
        %2254 = vmatprep.subr.bf16.mxu0 %v1612
        %2255 = vmatpush1.bf16.msra.mxu0 %v1611
        %2256 = vmatprep.subr.bf16.mxu0 %v1596
        %2257 = vmatpush1.bf16.msra.mxu0 %v1595
        %2258 = vmatprep.subr.bf16.mxu0 %v1580
        %2259 = vmatpush1.bf16.msra.mxu0 %v1579
        %2260 = vmatprep.subr.bf16.mxu0 %v1564
        %2261 = vmatpush1.bf16.msra.mxu0 %v1563
        %2262 = vmatprep.subr.bf16.mxu0 %v1548
        %2263 = vmatpush1.bf16.msra.mxu0 %v1547
        %2264 = vmatprep.subr.bf16.mxu0 %v1532
        %2265 = vmatpush1.bf16.msra.mxu0 %v1531
        %2266 = vmatprep.subr.bf16.mxu0 0
        %2267 = vmatpush2.bf16.msra.mxu0 0
        %2268 = vmatprep.subr.bf16.mxu0 0
        %2269 = vmatpush2.bf16.msra.mxu0 0
        %2270 = vmatprep.subr.bf16.mxu0 %v1996
        %2271 = vmatpush2.bf16.msra.mxu0 %v1993
        %2272 = vmatprep.subr.bf16.mxu0 %v1724
        %2273 = vmatpush2.bf16.msra.mxu0 %v1723
        %2274 = vmatprep.subr.bf16.mxu0 %v1708
        %2275 = vmatpush2.bf16.msra.mxu0 %v1707
        %2276 = vmatprep.subr.bf16.mxu0 %v1692
        %2277 = vmatpush2.bf16.msra.mxu0 %v1691
        %2278 = vmatprep.subr.bf16.mxu0 %v1676
        %2279 = vmatpush2.bf16.msra.mxu0 %v1675
        %2280 = vmatprep.subr.bf16.mxu0 %v1660
        %2281 = vmatpush2.bf16.msra.mxu0 %v1659
        %2282 = vmatprep.mubr.bf16.mxu0 %v1953
        %2283 = vmatmul.mubr.bf16.gmra.mxu0 %v862
        %v2284 = vpop.f32.mrf.mxu0
        %v2285 = vadd.f32 %v845, %v2284
        %v2286 = vpop.f32.mrf.mxu0
        %v2287 = vadd.f32 %v845, %v2286
        %v2288 = vpop.f32.mrf.mxu0
        %v2289 = vpop.f32.mrf.mxu0
        %2290 = vdwg.mxu0
        %2291 = vmatprep.subr.bf16.mxu0 %v1646
        %2292 = vmatpush1.bf16.msra.mxu0 %v1645
        %2293 = vmatprep.subr.bf16.mxu0 %v1630
        %2294 = vmatpush1.bf16.msra.mxu0 %v1629
        %2295 = vmatprep.subr.bf16.mxu0 %v1614
        %2296 = vmatpush1.bf16.msra.mxu0 %v1613
        %2297 = vmatprep.subr.bf16.mxu0 %v1598
        %2298 = vmatpush1.bf16.msra.mxu0 %v1597
        %2299 = vmatprep.subr.bf16.mxu0 %v1582
        %2300 = vmatpush1.bf16.msra.mxu0 %v1581
        %2301 = vmatprep.subr.bf16.mxu0 %v1566
        %2302 = vmatpush1.bf16.msra.mxu0 %v1565
        %2303 = vmatprep.subr.bf16.mxu0 %v1550
        %2304 = vmatpush1.bf16.msra.mxu0 %v1549
        %2305 = vmatprep.subr.bf16.mxu0 %v1534
        %2306 = vmatpush1.bf16.msra.mxu0 %v1533
        %2307 = vmatprep.subr.bf16.mxu0 0
        %2308 = vmatpush2.bf16.msra.mxu0 0
        %2309 = vmatprep.subr.bf16.mxu0 0
        %2310 = vmatpush2.bf16.msra.mxu0 0
        %2311 = vmatprep.subr.bf16.mxu0 %v2002
        %2312 = vmatpush2.bf16.msra.mxu0 %v1999
        %2313 = vmatprep.subr.bf16.mxu0 %v1726
        %2314 = vmatpush2.bf16.msra.mxu0 %v1725
        %2315 = vmatprep.subr.bf16.mxu0 %v1710
        %2316 = vmatpush2.bf16.msra.mxu0 %v1709
        %2317 = vmatprep.subr.bf16.mxu0 %v1694
        %2318 = vmatpush2.bf16.msra.mxu0 %v1693
        %2319 = vmatprep.subr.bf16.mxu0 %v1678
        %2320 = vmatpush2.bf16.msra.mxu0 %v1677
        %2321 = vmatprep.subr.bf16.mxu0 %v1662
        %2322 = vmatpush2.bf16.msra.mxu0 %v1661
        %2323 = vmatprep.mubr.bf16.mxu0 %v1953
        %2324 = vmatmul.mubr.bf16.gmra.mxu0 %v862
        %v2325 = vpop.f32.mrf.mxu0
        %v2326 = vadd.f32 %v845, %v2325
        %v2327 = vpop.f32.mrf.mxu0
        %v2328 = vadd.f32 %v845, %v2327
        %v2329 = vpop.f32.mrf.mxu0
        %v2330 = vpop.f32.mrf.mxu0
        %2331 = vdwg.mxu0
        %v2332 = vlaneseq
        %v2333 = vshrl.u32 %v2332, 7
        %vm2334 = vcmp.eq.s32.totalorder %v2333, 0
        %v2335 = vxor.u32 %v2039, 2147483648
        %v2336 = vxor.u32 %v2041, 2147483648
        %v2337 = vxor.u32 %v2080, 2147483648
        %v2338 = vxor.u32 %v2082, 2147483648
        %v2339 = vxor.u32 %v2121, 2147483648
        %v2340 = vxor.u32 %v2123, 2147483648
        %v2341 = vxor.u32 %v2162, 2147483648
        %v2342 = vxor.u32 %v2164, 2147483648
        %v2343 = vxor.u32 %v2203, 2147483648
        %v2344 = vxor.u32 %v2205, 2147483648
        %v2345 = vxor.u32 %v2244, 2147483648
        %v2346 = vxor.u32 %v2246, 2147483648
        %v2347 = vxor.u32 %v2285, 2147483648
        %v2348 = vxor.u32 %v2287, 2147483648
        %v2349 = vxor.u32 %v2326, 2147483648
        %v2350 = vxor.u32 %v2328, 2147483648
        %v2351 = vmul.f32 %v2335, 1.442695
        %v2352 = vpow.pop %v2351
        %v2353 = vmul.f32 %v2336, 1.442695
        %v2354 = vpow.pop %v2353
        %v2355 = vmul.f32 %v2337, 1.442695
        %v2356 = vpow.pop %v2355
        %v2357 = vmul.f32 %v2338, 1.442695
        %v2358 = vpow.pop %v2357
        %v2359 = vmul.f32 %v2339, 1.442695
        %v2360 = vpow.pop %v2359
        %v2361 = vmul.f32 %v2340, 1.442695
        %v2362 = vpow.pop %v2361
        %v2363 = vmul.f32 %v2341, 1.442695
        %v2364 = vpow.pop %v2363
        %v2365 = vmul.f32 %v2342, 1.442695
        %v2366 = vpow.pop %v2365
        %v2367 = vmul.f32 %v2343, 1.442695
        %v2368 = vpow.pop %v2367
        %v2369 = vmul.f32 %v2344, 1.442695
        %v2370 = vpow.pop %v2369
        %v2371 = vmul.f32 %v2345, 1.442695
        %v2372 = vpow.pop %v2371
        %v2373 = vmul.f32 %v2346, 1.442695
        %v2374 = vpow.pop %v2373
        %v2375 = vmul.f32 %v2347, 1.442695
        %v2376 = vpow.pop %v2375
        %v2377 = vmul.f32 %v2348, 1.442695
        %v2378 = vpow.pop %v2377
        %v2379 = vmul.f32 %v2349, 1.442695
        %v2380 = vpow.pop %v2379
        %v2381 = vmul.f32 %v2350, 1.442695
        %v2382 = vpow.pop %v2381
        %v2383 = vadd.f32 %v2352, 1.0
        %v2384 = vadd.f32 %v2354, 1.0
        %v2385 = vadd.f32 %v2356, 1.0
        %v2386 = vadd.f32 %v2358, 1.0
        %v2387 = vadd.f32 %v2360, 1.0
        %v2388 = vadd.f32 %v2362, 1.0
        %v2389 = vadd.f32 %v2364, 1.0
        %v2390 = vadd.f32 %v2366, 1.0
        %v2391 = vadd.f32 %v2368, 1.0
        %v2392 = vadd.f32 %v2370, 1.0
        %v2393 = vadd.f32 %v2372, 1.0
        %v2394 = vadd.f32 %v2374, 1.0
        %v2395 = vadd.f32 %v2376, 1.0
        %v2396 = vadd.f32 %v2378, 1.0
        %v2397 = vadd.f32 %v2380, 1.0
        %v2398 = vadd.f32 %v2382, 1.0
        %v2399 = vrcp.pop %v2383
        %v2400 = vmul.f32 1.0, %v2399
        %v2401 = vrcp.pop %v2384
        %v2402 = vmul.f32 1.0, %v2401
        %v2403 = vrcp.pop %v2385
        %v2404 = vmul.f32 1.0, %v2403
        %v2405 = vrcp.pop %v2386
        %v2406 = vmul.f32 1.0, %v2405
        %v2407 = vrcp.pop %v2387
        %v2408 = vmul.f32 1.0, %v2407
        %v2409 = vrcp.pop %v2388
        %v2410 = vmul.f32 1.0, %v2409
        %v2411 = vrcp.pop %v2389
        %v2412 = vmul.f32 1.0, %v2411
        %v2413 = vrcp.pop %v2390
        %v2414 = vmul.f32 1.0, %v2413
        %v2415 = vrcp.pop %v2391
        %v2416 = vmul.f32 1.0, %v2415
        %v2417 = vrcp.pop %v2392
        %v2418 = vmul.f32 1.0, %v2417
        %v2419 = vrcp.pop %v2393
        %v2420 = vmul.f32 1.0, %v2419
        %v2421 = vrcp.pop %v2394
        %v2422 = vmul.f32 1.0, %v2421
        %v2423 = vrcp.pop %v2395
        %v2424 = vmul.f32 1.0, %v2423
        %v2425 = vrcp.pop %v2396
        %v2426 = vmul.f32 1.0, %v2425
        %v2427 = vrcp.pop %v2397
        %v2428 = vmul.f32 1.0, %v2427
        %v2429 = vrcp.pop %v2398
        %v2430 = vmul.f32 1.0, %v2429
        %v2431 = vsel %vm2334, %v2400, %v2039
        %v2432 = vsel %vm2334, %v2402, %v2041
        %v2433 = vsel %vm2334, %v2404, %v2080
        %v2434 = vsel %vm2334, %v2406, %v2082
        %v2435 = vsel %vm2334, %v2408, %v2121
        %v2436 = vsel %vm2334, %v2410, %v2123
        %v2437 = vsel %vm2334, %v2412, %v2162
        %v2438 = vsel %vm2334, %v2414, %v2164
        %v2439 = vsel %vm2334, %v2416, %v2203
        %v2440 = vsel %vm2334, %v2418, %v2205
        %v2441 = vsel %vm2334, %v2420, %v2244
        %v2442 = vsel %vm2334, %v2422, %v2246
        %v2443 = vsel %vm2334, %v2424, %v2285
        %v2444 = vsel %vm2334, %v2426, %v2287
        %v2445 = vsel %vm2334, %v2428, %v2326
        %v2446 = vsel %vm2334, %v2430, %v2328
        %v2463 = vcombine.low %v2431, %v2432
        %v2464 = vcombine.low %v2433, %v2434
        %v2466 = vunpack.c.l.s4 1983009808
        %v2467 = vunpack.c.0.s8 %v2466
        %v2468 = vlaneseq
        %v2469 = vshrl.u32 %v2468, 7
        %v2470 = vsub.s32 %v2467, %v2469
        %v2471 = vrot.slane %v2463, %v2470
        %v2473 = vunpack.c.l.s4 1983009808
        %v2474 = vunpack.c.0.s8 %v2473
        %v2475 = vlaneseq
        %v2476 = vshrl.u32 %v2475, 7
        %v2477 = vsub.s32 %v2474, %v2476
        %v2478 = vrot.slane %v2464, %v2477
        %v2479 = vcombine.low %v2471, %v2478
        %v2480 = vcombine.low %v2435, %v2436
        %v2481 = vcombine.low %v2437, %v2438
        %v2483 = vunpack.c.l.s4 1983009808
        %v2484 = vunpack.c.0.s8 %v2483
        %v2485 = vlaneseq
        %v2486 = vshrl.u32 %v2485, 7
        %v2487 = vsub.s32 %v2484, %v2486
        %v2488 = vrot.slane %v2480, %v2487
        %v2490 = vunpack.c.l.s4 1983009808
        %v2491 = vunpack.c.0.s8 %v2490
        %v2492 = vlaneseq
        %v2493 = vshrl.u32 %v2492, 7
        %v2494 = vsub.s32 %v2491, %v2493
        %v2495 = vrot.slane %v2481, %v2494
        %v2496 = vcombine.low %v2488, %v2495
        %v2497 = vcombine.low %v2439, %v2440
        %v2498 = vcombine.low %v2441, %v2442
        %v2500 = vunpack.c.l.s4 1983009808
        %v2501 = vunpack.c.0.s8 %v2500
        %v2502 = vlaneseq
        %v2503 = vshrl.u32 %v2502, 7
        %v2504 = vsub.s32 %v2501, %v2503
        %v2505 = vrot.slane %v2497, %v2504
        %v2507 = vunpack.c.l.s4 1983009808
        %v2508 = vunpack.c.0.s8 %v2507
        %v2509 = vlaneseq
        %v2510 = vshrl.u32 %v2509, 7
        %v2511 = vsub.s32 %v2508, %v2510
        %v2512 = vrot.slane %v2498, %v2511
        %v2513 = vcombine.low %v2505, %v2512
        %v2514 = vcombine.low %v2443, %v2444
        %v2515 = vcombine.low %v2445, %v2446
        %v2517 = vunpack.c.l.s4 1983009808
        %v2518 = vunpack.c.0.s8 %v2517
        %v2519 = vlaneseq
        %v2520 = vshrl.u32 %v2519, 7
        %v2521 = vsub.s32 %v2518, %v2520
        %v2522 = vrot.slane %v2514, %v2521
        %v2524 = vunpack.c.l.s4 1983009808
        %v2525 = vunpack.c.0.s8 %v2524
        %v2526 = vlaneseq
        %v2527 = vshrl.u32 %v2526, 7
        %v2528 = vsub.s32 %v2525, %v2527
        %v2529 = vrot.slane %v2515, %v2528
        %v2530 = vcombine.low %v2522, %v2529
        %2535 = vst [vmem:[%s621] sm:$0xff] %v2479
        %2536 = vst [vmem:[%s621 + $0x8] sm:$0xff] %v2496
        %2537 = vst [vmem:[%s621 + $0x10] sm:$0xff] %v2513
        %2538 = vst [vmem:[%s621 + $0x18] sm:$0xff] %v2530
        %s2539 = smul.u32 16, %s14
        %p2540 = scmp.lt.s32.totalorder %s2539, 63
        %s2541 = scalar_select %p2540, %s2539, 63
        %s2542 = smul.addr %s2541, 2
        %s2543 = scalar_lea.vmem %s3, %s2542
        // Predicated region
        $region56: #{tsdf_coder_forward.17} parent=50 // pred_check
          %p2544 = pneg %p100
        $region57: #{tsdf_coder_forward.17} parent=50 // pred_check_branch
          %2546 = sbr.rel (%p2544) target = $region59
        $region58: #{tsdf_coder_forward.17} parent=50 // pred_region
          %s2547 = smul.u32 16, %s14
        $region59: #{tsdf_coder_forward.17} parent=50 // pred_fallthru
          _
      $region51: #{tsdf_coder_forward.17} parent=5 // pred_fallthru
        _
      %p2548 = scmp.le.s32.totalorder 2, %s9
      // Predicated region
      $region60: #{tsdf_coder_forward.17} parent=5 // pred_check
        %p2549 = pneg %p2548
      $region61: #{tsdf_coder_forward.17} parent=5 // pred_check_branch
        %2551 = sbr.rel (%p2549) target = $region63
      $region62: #{tsdf_coder_forward.17} parent=5 // pred_region
        %s2552 = ssub.s32 %s9, 2
        // Predicated region
        $region64: #{tsdf_coder_forward.17} parent=62 // pred_check
          %p2553 = pneg %p106
        $region65: #{tsdf_coder_forward.17} parent=62 // pred_check_branch
          %2555 = sbr.rel (%p2553) target = $region67
        $region66: #{tsdf_coder_forward.17} parent=62 // pred_region
          %s2556 = smul.u32 16, %s15
          %p2557 = scmp.lt.s32.totalorder %s2556, 63
          %s2558 = scalar_select %p2557, %s2556, 63
          %s2559 = smul.addr %s2558, 2
          %s2560 = scalar_lea.vmem %s3, %s2559
        $region67: #{tsdf_coder_forward.17} parent=62 // pred_fallthru
          _
      $region63: #{tsdf_coder_forward.17} parent=5 // pred_fallthru
        _
    $region6: #{tsdf_coder_forward.17} parent=1 // loop_footer
      %s13 = sadd.s32 1, %s9
    $region7: #{tsdf_coder_forward.17} parent=1 // loop_footer_branch
      %8 = sbr.rel target = $region3
    $region8: #{tsdf_coder_forward.17} parent=1 // loop_exit
      _

</llo_original>
